<compile_context>
chip_gen: v6e
topology: v6e:2x2x1
jax: 0.10.0
libtpu: 0.0.40
codegen_flags: <defaults>
</compile_context>

<pallas_src>
import math
import numpy as np

import jax
import jax.numpy as jnp
from jax import lax
from jax.experimental import pallas as pl
from jax.experimental.pallas import tpu as pltpu

SIZE = 65          # gaussian kernel size
SIGMA = 1.0 / 40.0 # gaussian sigma
ITERS = 7          # propagation iterations
PAD = 32           # ReflectionPad2d padding


# ----------------------------------------------------------------------------
# Parameter construction (deterministic, host-side glue)
# ----------------------------------------------------------------------------
def _gauss_1d(size, sigma):
    """1-D factor of the GMCNN gauss_kernel (kernel2d = outer(k1, k1))."""
    interval = (2.0 * sigma + 1.0) / size
    x = np.linspace(-sigma - interval / 2.0, sigma + interval / 2.0, size + 1)
    cdf = np.array([0.5 * (1.0 + math.erf(v / math.sqrt(2.0))) for v in x],
                   dtype=np.float64)
    ker1d = np.diff(cdf)
    sq = np.sqrt(ker1d)
    return sq / sq.sum()


def _reflect_index(i, n):
    """PyTorch ReflectionPad2d index mapping (requires pad < n)."""
    if i < 0:
        i = -i
    if i >= n:
        i = 2 * n - 2 - i
    return i


def _blur_matrix(n, pad, k1):
    """(n, n) matrix implementing reflection-pad(pad) + 1-D valid cross-corr."""
    size = k1.shape[0]
    R = np.zeros((n + 2 * pad, n), dtype=np.float64)
    for i in range(n + 2 * pad):
        R[i, _reflect_index(i - pad, n)] = 1.0
    A = np.zeros((n, n + 2 * pad), dtype=np.float64)
    for o in range(n):
        A[o, o:o + size] = k1
    return (A @ R).astype(np.float32)


def _tpu_kind():
    try:
        return jax.devices()[0].device_kind.lower()
    except Exception:
        return ""


# ----------------------------------------------------------------------------
# Pallas kernel: 7-iteration confidence propagation on one lane-dense block
# ----------------------------------------------------------------------------
def _make_kernel(iters, use_bf16):
    def cdm_kernel(mh_ref, mw_ref, mask_ref, out_ref):
        mh = mh_ref[...]                       # (H, H)   f32 or bf16
        if use_bf16:
            # Right matrix upcast once: keeps the inter-matmul value in f32
            # (review: no per-iteration tmp->bf16 recast; accuracy).
            mw = mw_ref[...].astype(jnp.float32)
        else:
            mw = mw_ref[...]                   # (bw, bw) f32

        def body(_, carry):
            init, _mc = carry
            # Re-read mask / recompute (1 - mask) every iteration: vld/VPU
            # slots have slack and this bounds live ranges across the
            # unrolled 7-iteration body.
            mask = mask_ref[...]               # (H, bw) f32, lane-dense
            lhs = init.astype(mh.dtype)        # no-op in the f32 path
            tmp = jnp.dot(mh, lhs, preferred_element_type=jnp.float32)
            blurred = jnp.dot(tmp, mw, preferred_element_type=jnp.float32)
            mc = blurred * mask
            return mc + (1.0 - mask), mc

        init0 = 1.0 - mask_ref[...]
        _, mc = lax.fori_loop(0, iters, body,
                              (init0, jnp.zeros_like(init0)), unroll=True)
        out_ref[...] = mc
    return cdm_kernel


def confidence_driven_mask(mask, *, size=SIZE, sigma=SIGMA, iters=ITERS,
                           pad=PAD, use_bf16=None):
    """mask: (N, C, H, W) float32 -> mask_confidence (N, C, H, W) float32."""
    n, c, h, w = mask.shape
    assert h > pad and w > pad, "ReflectionPad2d(pad) requires spatial dims > pad"
    assert iters >= 1
    nc = n * c

    kind = _tpu_kind()
    is_v7 = "v7" in kind
    is_v6p = is_v7 or ("v6" in kind)           # v6e or newer

    if use_bf16 is None:
        # bf16 MXU operands (f32 accumulation) pay off on v6e/v7x once the
        # matmuls are big enough; small shapes / v5e stay pure f32.
        use_bf16 = bool(is_v6p and min(h, w) >= 128)

    k1 = _gauss_1d(size, sigma)
    mh_np = _blur_matrix(h, pad, k1)                        # (H, H)
    mw_np = mh_np if h == w else _blur_matrix(w, pad, k1)   # share when square
    mwt_np = np.ascontiguousarray(mw_np.T)                  # (W, W) = M_w^T

    # ---- slab packing along lanes (only needed when W < 128) ----------------
    if w >= 128:
        bblk = 1                               # already lane-dense, no packing
    else:
        lane_target = 256 if is_v6p else 128   # v6e/v7x MXU is 256 wide
        bblk = max(1, -(-lane_target // w))
        if is_v7:
            # 2 TensorCores on v7x: keep >= 4 grid steps (>= 2 per core) when
            # possible, but never drop below 128 lanes (masked-store cliff).
            while bblk > 1 and -(-nc // bblk) < 4 and (bblk - 1) * w >= 128:
                bblk -= 1
    ncp = -(-nc // bblk) * bblk
    grid_steps = ncp // bblk
    bw = bblk * w

    weight_dtype = jnp.bfloat16 if use_bf16 else jnp.float32
    mh = jnp.asarray(mh_np, dtype=weight_dtype)
    # Per-slab right blur.  For bblk > 1, kron(I_Bblk, M_w^T) applies it to
    # every lane-packed slab in one MXU matmul (identity when bblk == 1).
    mwt_bd_np = mwt_np if bblk == 1 else np.kron(
        np.eye(bblk, dtype=np.float32), mwt_np)             # (bw, bw)
    mwt = jnp.asarray(mwt_bd_np, dtype=weight_dtype)

    x = mask.reshape(nc, h, w).astype(jnp.float32)
    if bblk == 1:
        x3 = x                                 # no pad / transpose round trip
    else:
        if ncp != nc:
            # Replicate the last real slab (cheaper than computing on all-zero
            # pad masks that take a degenerate blur path).
            x = jnp.pad(x, ((0, ncp - nc), (0, 0), (0, 0)), mode="edge")
        x3 = jnp.transpose(x.reshape(grid_steps, bblk, h, w),
                           (0, 2, 1, 3)).reshape(grid_steps, h, bw)

    # ---- VMEM budget (weights + double-buffered blocks + live values) -------
    wbytes = 2 if use_bf16 else 4
    est = (2 * wbytes * (h * h + bw * bw)      # weights (worst case: 2 bufs)
           + 2 * 2 * 4 * h * bw                # mask/out blocks, double-buffered
           + 6 * 4 * h * bw)                   # live f32 intermediates in body
    extra = {}
    cap = (36 << 20) if is_v7 else (48 << 20)  # v7x: 64 MiB/TC physical VMEM
    if est > 12 * 1024 * 1024:
        extra["vmem_limit_bytes"] = int(min(cap, 2 * est))

    kernel = _make_kernel(iters, use_bf16)

    def build(single_buffer_weights):
        # Constant index_map -> fetched once; Buffered(1) additionally drops
        # the second (never used) weight buffer.
        wkw = ({"pipeline_mode": pl.Buffered(1)}
               if single_buffer_weights else {})
        return pl.pallas_call(
            kernel,
            out_shape=jax.ShapeDtypeStruct((grid_steps, h, bw), jnp.float32),
            grid_spec=pltpu.PrefetchScalarGridSpec(
                num_scalar_prefetch=0,
                grid=(grid_steps,),
                in_specs=[
                    pl.BlockSpec((h, h), lambda g: (0, 0), **wkw),     # M_h
                    pl.BlockSpec((bw, bw), lambda g: (0, 0), **wkw),   # M_w^T (block-diag)
                    pl.BlockSpec((None, h, bw), lambda g: (g, 0, 0)),  # slab group
                ],
                out_specs=pl.BlockSpec((None, h, bw), lambda g: (g, 0, 0)),
            ),
            compiler_params=pltpu.CompilerParams(
                dimension_semantics=("parallel",), **extra),
        )

    try:
        out3 = build(True)(mh, mwt, x3)
    except Exception:
        # Older jax without BlockSpec pipeline_mode / Buffered(1) support:
        # fall back to default double-buffered weights (still fetched once).
        out3 = build(False)(mh, mwt, x3)

    if bblk == 1:
        out = out3                              # (nc, h, w)
    else:
        out = jnp.transpose(out3.reshape(grid_steps, h, bblk, w),
                            (0, 2, 1, 3)).reshape(ncp, h, w)[:nc]
    return out.reshape(n, c, h, w)


# ----------------------------------------------------------------------------
# Pure-JAX reference (explicit reflection pad + 65x65 conv), for verification
# ----------------------------------------------------------------------------
def reference(mask):
    k1 = _gauss_1d(SIZE, SIGMA)
    kernel2d = np.outer(k1, k1).astype(np.float32)            # == gauss_kernel
    kernel = jnp.asarray(kernel2d)[None, None]                # (1,1,65,65) OIHW

    def blur(x):
        xp = jnp.pad(x, ((0, 0), (0, 0), (PAD, PAD), (PAD, PAD)), mode="reflect")
        return jax.lax.conv_general_dilated(
            xp, kernel, window_strides=(1, 1), padding="VALID",
            dimension_numbers=("NCHW", "OIHW", "NCHW"))

    init = 1.0 - mask
    mc = None
    for _ in range(ITERS):
        mc = blur(init) * mask
        init = mc + (1.0 - mask)
    return mc


if __name__ == "__main__":
    key = jax.random.PRNGKey(0)

    # Demo 1: small masks (W < 128) -> lane-packed slab path (kron right blur).
    N, C, H, W = 4, 1, 64, 64
    mask = (jax.random.uniform(key, (N, C, H, W)) > 0.7).astype(jnp.float32)
    out = jax.block_until_ready(confidence_driven_mask(mask))
    ref = reference(mask)
    err = float(jnp.max(jnp.abs(out - ref)))
    assert jnp.allclose(out, ref, rtol=1e-3, atol=1e-3), f"max abs err {err}"

    # Demo 2: W >= 128 -> un-packed path (bblk=1, no wrapper pad/transpose).
    N2, C2, H2, W2 = 2, 1, 160, 160
    mask2 = (jax.random.uniform(jax.random.PRNGKey(0), (N2, C2, H2, W2)) > 0.6
             ).astype(jnp.float32)
    out2 = jax.block_until_ready(confidence_driven_mask(mask2, use_bf16=False))
    ref2 = reference(mask2)
    err2 = float(jnp.max(jnp.abs(out2 - ref2)))
    assert jnp.allclose(out2, ref2, rtol=1e-3, atol=1e-3), f"max abs err {err2}"

    print("KERNEL_OK")
</pallas_src>

<mosaic_0001>
module attributes {stable_mosaic.version = 11 : i64} {
  func.func @cdm_kernel(%arg0: i32, %arg1: memref<64x64xf32, #tpu.memory_space<vmem>>, %arg2: memref<128x128xf32, #tpu.memory_space<vmem>>, %arg3: memref<1x64x128xf32, #tpu.memory_space<vmem>>, %arg4: memref<1x64x128xf32, #tpu.memory_space<vmem>>) attributes {dimension_semantics = [#tpu.dimension_semantics<parallel>], iteration_bounds = array<i64: 2>, scalar_prefetch = 0 : i64, scratch_operands = 0 : i64, tpu.core_type = #tpu.core_type<tc>, window_params = [{pipeline_mode = #tpu.pipeline_mode<synchronous>, transform_indices = @transform_0, window_bounds = array<i64: 64, 64>}, {pipeline_mode = #tpu.pipeline_mode<synchronous>, transform_indices = @transform_1, window_bounds = array<i64: 128, 128>}, {transform_indices = @transform_2, window_bounds = array<i64: 1, 64, 128>}, {transform_indices = @transform_3, window_bounds = array<i64: 1, 64, 128>}]} {
    %c0 = arith.constant 0 : index
    %c0_0 = arith.constant 0 : index
    %0 = vector.load %arg1[%c0, %c0_0] : memref<64x64xf32, #tpu.memory_space<vmem>>, vector<64x64xf32>
    %c0_1 = arith.constant 0 : index
    %c0_2 = arith.constant 0 : index
    %1 = vector.load %arg2[%c0_1, %c0_2] : memref<128x128xf32, #tpu.memory_space<vmem>>, vector<128x128xf32>
    %c0_3 = arith.constant 0 : index
    %c0_4 = arith.constant 0 : index
    %c0_5 = arith.constant 0 : index
    %2 = vector.load %arg3[%c0_3, %c0_4, %c0_5] : memref<1x64x128xf32, #tpu.memory_space<vmem>>, vector<1x64x128xf32>
    %3 = vector.shape_cast %2 : vector<1x64x128xf32> to vector<64x128xf32>
    %cst = arith.constant 1.000000e+00 : f32
    %4 = vector.broadcast %cst : f32 to vector<64x128xf32>
    %5 = arith.subf %4, %3 : vector<64x128xf32>
    %cst_6 = arith.constant 0.000000e+00 : f32
    %6 = vector.broadcast %cst_6 : f32 to vector<64x128xf32>
    %c0_i32 = arith.constant 0 : i32
    %c0_7 = arith.constant 0 : index
    %c0_8 = arith.constant 0 : index
    %c0_9 = arith.constant 0 : index
    %7 = vector.load %arg3[%c0_7, %c0_8, %c0_9] : memref<1x64x128xf32, #tpu.memory_space<vmem>>, vector<1x64x128xf32>
    %8 = vector.shape_cast %7 : vector<1x64x128xf32> to vector<64x128xf32>
    %cst_10 = arith.constant dense<0.000000e+00> : vector<64x128xf32>
    %9 = tpu.matmul %0, %5, %cst_10 {dimension_numbers = #tpu.dot_dimension_numbers<[1], [0], [0], [1], [0, 0, 1, 1], [], []>} : vector<64x64xf32>, vector<64x128xf32>, vector<64x128xf32> -> vector<64x128xf32>
    %cst_11 = arith.constant dense<0.000000e+00> : vector<64x128xf32>
    %10 = tpu.matmul %9, %1, %cst_11 {dimension_numbers = #tpu.dot_dimension_numbers<[1], [0], [0], [1], [0, 0, 1, 1], [], []>} : vector<64x128xf32>, vector<128x128xf32>, vector<64x128xf32> -> vector<64x128xf32>
    %11 = arith.mulf %10, %8 : vector<64x128xf32>
    %cst_12 = arith.constant 1.000000e+00 : f32
    %12 = vector.broadcast %cst_12 : f32 to vector<64x128xf32>
    %13 = arith.subf %12, %8 : vector<64x128xf32>
    %14 = arith.addf %11, %13 : vector<64x128xf32>
    %c1_i32 = arith.constant 1 : i32
    %c0_13 = arith.constant 0 : index
    %c0_14 = arith.constant 0 : index
    %c0_15 = arith.constant 0 : index
    %15 = vector.load %arg3[%c0_13, %c0_14, %c0_15] : memref<1x64x128xf32, #tpu.memory_space<vmem>>, vector<1x64x128xf32>
    %16 = vector.shape_cast %15 : vector<1x64x128xf32> to vector<64x128xf32>
    %cst_16 = arith.constant dense<0.000000e+00> : vector<64x128xf32>
    %17 = tpu.matmul %0, %14, %cst_16 {dimension_numbers = #tpu.dot_dimension_numbers<[1], [0], [0], [1], [0, 0, 1, 1], [], []>} : vector<64x64xf32>, vector<64x128xf32>, vector<64x128xf32> -> vector<64x128xf32>
    %cst_17 = arith.constant dense<0.000000e+00> : vector<64x128xf32>
    %18 = tpu.matmul %17, %1, %cst_17 {dimension_numbers = #tpu.dot_dimension_numbers<[1], [0], [0], [1], [0, 0, 1, 1], [], []>} : vector<64x128xf32>, vector<128x128xf32>, vector<64x128xf32> -> vector<64x128xf32>
    %19 = arith.mulf %18, %16 : vector<64x128xf32>
    %cst_18 = arith.constant 1.000000e+00 : f32
    %20 = vector.broadcast %cst_18 : f32 to vector<64x128xf32>
    %21 = arith.subf %20, %16 : vector<64x128xf32>
    %22 = arith.addf %19, %21 : vector<64x128xf32>
    %c2_i32 = arith.constant 2 : i32
    %c0_19 = arith.constant 0 : index
    %c0_20 = arith.constant 0 : index
    %c0_21 = arith.constant 0 : index
    %23 = vector.load %arg3[%c0_19, %c0_20, %c0_21] : memref<1x64x128xf32, #tpu.memory_space<vmem>>, vector<1x64x128xf32>
    %24 = vector.shape_cast %23 : vector<1x64x128xf32> to vector<64x128xf32>
    %cst_22 = arith.constant dense<0.000000e+00> : vector<64x128xf32>
    %25 = tpu.matmul %0, %22, %cst_22 {dimension_numbers = #tpu.dot_dimension_numbers<[1], [0], [0], [1], [0, 0, 1, 1], [], []>} : vector<64x64xf32>, vector<64x128xf32>, vector<64x128xf32> -> vector<64x128xf32>
    %cst_23 = arith.constant dense<0.000000e+00> : vector<64x128xf32>
    %26 = tpu.matmul %25, %1, %cst_23 {dimension_numbers = #tpu.dot_dimension_numbers<[1], [0], [0], [1], [0, 0, 1, 1], [], []>} : vector<64x128xf32>, vector<128x128xf32>, vector<64x128xf32> -> vector<64x128xf32>
    %27 = arith.mulf %26, %24 : vector<64x128xf32>
    %cst_24 = arith.constant 1.000000e+00 : f32
    %28 = vector.broadcast %cst_24 : f32 to vector<64x128xf32>
    %29 = arith.subf %28, %24 : vector<64x128xf32>
    %30 = arith.addf %27, %29 : vector<64x128xf32>
    %c3_i32 = arith.constant 3 : i32
    %c0_25 = arith.constant 0 : index
    %c0_26 = arith.constant 0 : index
    %c0_27 = arith.constant 0 : index
    %31 = vector.load %arg3[%c0_25, %c0_26, %c0_27] : memref<1x64x128xf32, #tpu.memory_space<vmem>>, vector<1x64x128xf32>
    %32 = vector.shape_cast %31 : vector<1x64x128xf32> to vector<64x128xf32>
    %cst_28 = arith.constant dense<0.000000e+00> : vector<64x128xf32>
    %33 = tpu.matmul %0, %30, %cst_28 {dimension_numbers = #tpu.dot_dimension_numbers<[1], [0], [0], [1], [0, 0, 1, 1], [], []>} : vector<64x64xf32>, vector<64x128xf32>, vector<64x128xf32> -> vector<64x128xf32>
    %cst_29 = arith.constant dense<0.000000e+00> : vector<64x128xf32>
    %34 = tpu.matmul %33, %1, %cst_29 {dimension_numbers = #tpu.dot_dimension_numbers<[1], [0], [0], [1], [0, 0, 1, 1], [], []>} : vector<64x128xf32>, vector<128x128xf32>, vector<64x128xf32> -> vector<64x128xf32>
    %35 = arith.mulf %34, %32 : vector<64x128xf32>
    %cst_30 = arith.constant 1.000000e+00 : f32
    %36 = vector.broadcast %cst_30 : f32 to vector<64x128xf32>
    %37 = arith.subf %36, %32 : vector<64x128xf32>
    %38 = arith.addf %35, %37 : vector<64x128xf32>
    %c4_i32 = arith.constant 4 : i32
    %c0_31 = arith.constant 0 : index
    %c0_32 = arith.constant 0 : index
    %c0_33 = arith.constant 0 : index
    %39 = vector.load %arg3[%c0_31, %c0_32, %c0_33] : memref<1x64x128xf32, #tpu.memory_space<vmem>>, vector<1x64x128xf32>
    %40 = vector.shape_cast %39 : vector<1x64x128xf32> to vector<64x128xf32>
    %cst_34 = arith.constant dense<0.000000e+00> : vector<64x128xf32>
    %41 = tpu.matmul %0, %38, %cst_34 {dimension_numbers = #tpu.dot_dimension_numbers<[1], [0], [0], [1], [0, 0, 1, 1], [], []>} : vector<64x64xf32>, vector<64x128xf32>, vector<64x128xf32> -> vector<64x128xf32>
    %cst_35 = arith.constant dense<0.000000e+00> : vector<64x128xf32>
    %42 = tpu.matmul %41, %1, %cst_35 {dimension_numbers = #tpu.dot_dimension_numbers<[1], [0], [0], [1], [0, 0, 1, 1], [], []>} : vector<64x128xf32>, vector<128x128xf32>, vector<64x128xf32> -> vector<64x128xf32>
    %43 = arith.mulf %42, %40 : vector<64x128xf32>
    %cst_36 = arith.constant 1.000000e+00 : f32
    %44 = vector.broadcast %cst_36 : f32 to vector<64x128xf32>
    %45 = arith.subf %44, %40 : vector<64x128xf32>
    %46 = arith.addf %43, %45 : vector<64x128xf32>
    %c5_i32 = arith.constant 5 : i32
    %c0_37 = arith.constant 0 : index
    %c0_38 = arith.constant 0 : index
    %c0_39 = arith.constant 0 : index
    %47 = vector.load %arg3[%c0_37, %c0_38, %c0_39] : memref<1x64x128xf32, #tpu.memory_space<vmem>>, vector<1x64x128xf32>
    %48 = vector.shape_cast %47 : vector<1x64x128xf32> to vector<64x128xf32>
    %cst_40 = arith.constant dense<0.000000e+00> : vector<64x128xf32>
    %49 = tpu.matmul %0, %46, %cst_40 {dimension_numbers = #tpu.dot_dimension_numbers<[1], [0], [0], [1], [0, 0, 1, 1], [], []>} : vector<64x64xf32>, vector<64x128xf32>, vector<64x128xf32> -> vector<64x128xf32>
    %cst_41 = arith.constant dense<0.000000e+00> : vector<64x128xf32>
    %50 = tpu.matmul %49, %1, %cst_41 {dimension_numbers = #tpu.dot_dimension_numbers<[1], [0], [0], [1], [0, 0, 1, 1], [], []>} : vector<64x128xf32>, vector<128x128xf32>, vector<64x128xf32> -> vector<64x128xf32>
    %51 = arith.mulf %50, %48 : vector<64x128xf32>
    %cst_42 = arith.constant 1.000000e+00 : f32
    %52 = vector.broadcast %cst_42 : f32 to vector<64x128xf32>
    %53 = arith.subf %52, %48 : vector<64x128xf32>
    %54 = arith.addf %51, %53 : vector<64x128xf32>
    %c6_i32 = arith.constant 6 : i32
    %c0_43 = arith.constant 0 : index
    %c0_44 = arith.constant 0 : index
    %c0_45 = arith.constant 0 : index
    %55 = vector.load %arg3[%c0_43, %c0_44, %c0_45] : memref<1x64x128xf32, #tpu.memory_space<vmem>>, vector<1x64x128xf32>
    %56 = vector.shape_cast %55 : vector<1x64x128xf32> to vector<64x128xf32>
    %cst_46 = arith.constant dense<0.000000e+00> : vector<64x128xf32>
    %57 = tpu.matmul %0, %54, %cst_46 {dimension_numbers = #tpu.dot_dimension_numbers<[1], [0], [0], [1], [0, 0, 1, 1], [], []>} : vector<64x64xf32>, vector<64x128xf32>, vector<64x128xf32> -> vector<64x128xf32>
    %cst_47 = arith.constant dense<0.000000e+00> : vector<64x128xf32>
    %58 = tpu.matmul %57, %1, %cst_47 {dimension_numbers = #tpu.dot_dimension_numbers<[1], [0], [0], [1], [0, 0, 1, 1], [], []>} : vector<64x128xf32>, vector<128x128xf32>, vector<64x128xf32> -> vector<64x128xf32>
    %59 = arith.mulf %58, %56 : vector<64x128xf32>
    %cst_48 = arith.constant 1.000000e+00 : f32
    %60 = vector.broadcast %cst_48 : f32 to vector<64x128xf32>
    %61 = arith.subf %60, %56 : vector<64x128xf32>
    %62 = arith.addf %59, %61 : vector<64x128xf32>
    %c0_49 = arith.constant 0 : index
    %c0_50 = arith.constant 0 : index
    %c0_51 = arith.constant 0 : index
    %63 = vector.load %arg4[%c0_49, %c0_50, %c0_51] : memref<1x64x128xf32, #tpu.memory_space<vmem>>, vector<1x64x128xf32>
    %64 = vector.shape_cast %63 : vector<1x64x128xf32> to vector<64x128xf32>
    %65 = vector.shape_cast %59 : vector<64x128xf32> to vector<1x64x128xf32>
    tpu.vector_store %arg4[%c0_49, %c0_50, %c0_51], %65 {strides = array<i32>} : memref<1x64x128xf32, #tpu.memory_space<vmem>>, vector<1x64x128xf32>,
    return
  }
  func.func @transform_0(%arg0: i32) -> (i32, i32) {
    %c0_i32 = arith.constant 0 : i32
    %c0_i32_0 = arith.constant 0 : i32
    %c0_i32_1 = arith.constant 0 : i32
    return %c0_i32, %c0_i32_0 : i32, i32
  }
  func.func @transform_1(%arg0: i32) -> (i32, i32) {
    %c0_i32 = arith.constant 0 : i32
    %c0_i32_0 = arith.constant 0 : i32
    %c0_i32_1 = arith.constant 0 : i32
    return %c0_i32, %c0_i32_0 : i32, i32
  }
  func.func @transform_2(%arg0: i32) -> (i32, i32, i32) {
    %c0_i32 = arith.constant 0 : i32
    %c0_i32_0 = arith.constant 0 : i32
    %c0_i32_1 = arith.constant 0 : i32
    return %arg0, %c0_i32, %c0_i32_0 : i32, i32, i32
  }
  func.func @transform_3(%arg0: i32) -> (i32, i32, i32) {
    %c0_i32 = arith.constant 0 : i32
    %c0_i32_0 = arith.constant 0 : i32
    %c0_i32_1 = arith.constant 0 : i32
    return %arg0, %c0_i32, %c0_i32_0 : i32, i32, i32
  }
}

module attributes {stable_mosaic.version = 11 : i64} {
  func.func @cdm_kernel(%arg0: i32, %arg1: memref<64x64xf32, #tpu.memory_space<vmem>>, %arg2: memref<128x128xf32, #tpu.memory_space<vmem>>, %arg3: memref<1x64x128xf32, #tpu.memory_space<vmem>>, %arg4: memref<1x64x128xf32, #tpu.memory_space<vmem>>) attributes {dimension_semantics = [#tpu.dimension_semantics<parallel>], iteration_bounds = array<i64: 2>, scalar_prefetch = 0 : i64, scratch_operands = 0 : i64, tpu.core_type = #tpu.core_type<tc>, window_params = [{pipeline_mode = #tpu.pipeline_mode<synchronous>, transform_indices = @transform_0, window_bounds = array<i64: 64, 64>}, {pipeline_mode = #tpu.pipeline_mode<synchronous>, transform_indices = @transform_1, window_bounds = array<i64: 128, 128>}, {transform_indices = @transform_2, window_bounds = array<i64: 1, 64, 128>}, {transform_indices = @transform_3, window_bounds = array<i64: 1, 64, 128>}]} {
    %c0 = arith.constant 0 : index
    %c0_0 = arith.constant 0 : index
    %0 = vector.load %arg1[%c0, %c0_0] : memref<64x64xf32, #tpu.memory_space<vmem>>, vector<64x64xf32>
    %c0_1 = arith.constant 0 : index
    %c0_2 = arith.constant 0 : index
    %1 = vector.load %arg2[%c0_1, %c0_2] : memref<128x128xf32, #tpu.memory_space<vmem>>, vector<128x128xf32>
    %c0_3 = arith.constant 0 : index
    %c0_4 = arith.constant 0 : index
    %c0_5 = arith.constant 0 : index
    %2 = vector.load %arg3[%c0_3, %c0_4, %c0_5] : memref<1x64x128xf32, #tpu.memory_space<vmem>>, vector<1x64x128xf32>
    %3 = vector.shape_cast %2 : vector<1x64x128xf32> to vector<64x128xf32>
    %cst = arith.constant 1.000000e+00 : f32
    %4 = vector.broadcast %cst : f32 to vector<64x128xf32>
    %5 = arith.subf %4, %3 : vector<64x128xf32>
    %cst_6 = arith.constant 0.000000e+00 : f32
    %6 = vector.broadcast %cst_6 : f32 to vector<64x128xf32>
    %c0_i32 = arith.constant 0 : i32
    %c0_7 = arith.constant 0 : index
    %c0_8 = arith.constant 0 : index
    %c0_9 = arith.constant 0 : index
    %7 = vector.load %arg3[%c0_7, %c0_8, %c0_9] : memref<1x64x128xf32, #tpu.memory_space<vmem>>, vector<1x64x128xf32>
    %8 = vector.shape_cast %7 : vector<1x64x128xf32> to vector<64x128xf32>
    %cst_10 = arith.constant dense<0.000000e+00> : vector<64x128xf32>
    %9 = tpu.matmul %0, %5, %cst_10 {dimension_numbers = #tpu.dot_dimension_numbers<[1], [0], [0], [1], [0, 0, 1, 1], [], []>} : vector<64x64xf32>, vector<64x128xf32>, vector<64x128xf32> -> vector<64x128xf32>
    %cst_11 = arith.constant dense<0.000000e+00> : vector<64x128xf32>
    %10 = tpu.matmul %9, %1, %cst_11 {dimension_numbers = #tpu.dot_dimension_numbers<[1], [0], [0], [1], [0, 0, 1, 1], [], []>} : vector<64x128xf32>, vector<128x128xf32>, vector<64x128xf32> -> vector<64x128xf32>
    %11 = arith.mulf %10, %8 : vector<64x128xf32>
    %cst_12 = arith.constant 1.000000e+00 : f32
    %12 = vector.broadcast %cst_12 : f32 to vector<64x128xf32>
    %13 = arith.subf %12, %8 : vector<64x128xf32>
    %14 = arith.addf %11, %13 : vector<64x128xf32>
    %c1_i32 = arith.constant 1 : i32
    %c0_13 = arith.constant 0 : index
    %c0_14 = arith.constant 0 : index
    %c0_15 = arith.constant 0 : index
    %15 = vector.load %arg3[%c0_13, %c0_14, %c0_15] : memref<1x64x128xf32, #tpu.memory_space<vmem>>, vector<1x64x128xf32>
    %16 = vector.shape_cast %15 : vector<1x64x128xf32> to vector<64x128xf32>
    %cst_16 = arith.constant dense<0.000000e+00> : vector<64x128xf32>
    %17 = tpu.matmul %0, %14, %cst_16 {dimension_numbers = #tpu.dot_dimension_numbers<[1], [0], [0], [1], [0, 0, 1, 1], [], []>} : vector<64x64xf32>, vector<64x128xf32>, vector<64x128xf32> -> vector<64x128xf32>
    %cst_17 = arith.constant dense<0.000000e+00> : vector<64x128xf32>
    %18 = tpu.matmul %17, %1, %cst_17 {dimension_numbers = #tpu.dot_dimension_numbers<[1], [0], [0], [1], [0, 0, 1, 1], [], []>} : vector<64x128xf32>, vector<128x128xf32>, vector<64x128xf32> -> vector<64x128xf32>
    %19 = arith.mulf %18, %16 : vector<64x128xf32>
    %cst_18 = arith.constant 1.000000e+00 : f32
    %20 = vector.broadcast %cst_18 : f32 to vector<64x128xf32>
    %21 = arith.subf %20, %16 : vector<64x128xf32>
    %22 = arith.addf %19, %21 : vector<64x128xf32>
    %c2_i32 = arith.constant 2 : i32
    %c0_19 = arith.constant 0 : index
    %c0_20 = arith.constant 0 : index
    %c0_21 = arith.constant 0 : index
    %23 = vector.load %arg3[%c0_19, %c0_20, %c0_21] : memref<1x64x128xf32, #tpu.memory_space<vmem>>, vector<1x64x128xf32>
    %24 = vector.shape_cast %23 : vector<1x64x128xf32> to vector<64x128xf32>
    %cst_22 = arith.constant dense<0.000000e+00> : vector<64x128xf32>
    %25 = tpu.matmul %0, %22, %cst_22 {dimension_numbers = #tpu.dot_dimension_numbers<[1], [0], [0], [1], [0, 0, 1, 1], [], []>} : vector<64x64xf32>, vector<64x128xf32>, vector<64x128xf32> -> vector<64x128xf32>
    %cst_23 = arith.constant dense<0.000000e+00> : vector<64x128xf32>
    %26 = tpu.matmul %25, %1, %cst_23 {dimension_numbers = #tpu.dot_dimension_numbers<[1], [0], [0], [1], [0, 0, 1, 1], [], []>} : vector<64x128xf32>, vector<128x128xf32>, vector<64x128xf32> -> vector<64x128xf32>
    %27 = arith.mulf %26, %24 : vector<64x128xf32>
    %cst_24 = arith.constant 1.000000e+00 : f32
    %28 = vector.broadcast %cst_24 : f32 to vector<64x128xf32>
    %29 = arith.subf %28, %24 : vector<64x128xf32>
    %30 = arith.addf %27, %29 : vector<64x128xf32>
    %c3_i32 = arith.constant 3 : i32
    %c0_25 = arith.constant 0 : index
    %c0_26 = arith.constant 0 : index
    %c0_27 = arith.constant 0 : index
    %31 = vector.load %arg3[%c0_25, %c0_26, %c0_27] : memref<1x64x128xf32, #tpu.memory_space<vmem>>, vector<1x64x128xf32>
    %32 = vector.shape_cast %31 : vector<1x64x128xf32> to vector<64x128xf32>
    %cst_28 = arith.constant dense<0.000000e+00> : vector<64x128xf32>
    %33 = tpu.matmul %0, %30, %cst_28 {dimension_numbers = #tpu.dot_dimension_numbers<[1], [0], [0], [1], [0, 0, 1, 1], [], []>} : vector<64x64xf32>, vector<64x128xf32>, vector<64x128xf32> -> vector<64x128xf32>
    %cst_29 = arith.constant dense<0.000000e+00> : vector<64x128xf32>
    %34 = tpu.matmul %33, %1, %cst_29 {dimension_numbers = #tpu.dot_dimension_numbers<[1], [0], [0], [1], [0, 0, 1, 1], [], []>} : vector<64x128xf32>, vector<128x128xf32>, vector<64x128xf32> -> vector<64x128xf32>
    %35 = arith.mulf %34, %32 : vector<64x128xf32>
    %cst_30 = arith.constant 1.000000e+00 : f32
    %36 = vector.broadcast %cst_30 : f32 to vector<64x128xf32>
    %37 = arith.subf %36, %32 : vector<64x128xf32>
    %38 = arith.addf %35, %37 : vector<64x128xf32>
    %c4_i32 = arith.constant 4 : i32
    %c0_31 = arith.constant 0 : index
    %c0_32 = arith.constant 0 : index
    %c0_33 = arith.constant 0 : index
    %39 = vector.load %arg3[%c0_31, %c0_32, %c0_33] : memref<1x64x128xf32, #tpu.memory_space<vmem>>, vector<1x64x128xf32>
    %40 = vector.shape_cast %39 : vector<1x64x128xf32> to vector<64x128xf32>
    %cst_34 = arith.constant dense<0.000000e+00> : vector<64x128xf32>
    %41 = tpu.matmul %0, %38, %cst_34 {dimension_numbers = #tpu.dot_dimension_numbers<[1], [0], [0], [1], [0, 0, 1, 1], [], []>} : vector<64x64xf32>, vector<64x128xf32>, vector<64x128xf32> -> vector<64x128xf32>
    %cst_35 = arith.constant dense<0.000000e+00> : vector<64x128xf32>
    %42 = tpu.matmul %41, %1, %cst_35 {dimension_numbers = #tpu.dot_dimension_numbers<[1], [0], [0], [1], [0, 0, 1, 1], [], []>} : vector<64x128xf32>, vector<128x128xf32>, vector<64x128xf32> -> vector<64x128xf32>
    %43 = arith.mulf %42, %40 : vector<64x128xf32>
    %cst_36 = arith.constant 1.000000e+00 : f32
    %44 = vector.broadcast %cst_36 : f32 to vector<64x128xf32>
    %45 = arith.subf %44, %40 : vector<64x128xf32>
    %46 = arith.addf %43, %45 : vector<64x128xf32>
    %c5_i32 = arith.constant 5 : i32
    %c0_37 = arith.constant 0 : index
    %c0_38 = arith.constant 0 : index
    %c0_39 = arith.constant 0 : index
    %47 = vector.load %arg3[%c0_37, %c0_38, %c0_39] : memref<1x64x128xf32, #tpu.memory_space<vmem>>, vector<1x64x128xf32>
    %48 = vector.shape_cast %47 : vector<1x64x128xf32> to vector<64x128xf32>
    %cst_40 = arith.constant dense<0.000000e+00> : vector<64x128xf32>
    %49 = tpu.matmul %0, %46, %cst_40 {dimension_numbers = #tpu.dot_dimension_numbers<[1], [0], [0], [1], [0, 0, 1, 1], [], []>} : vector<64x64xf32>, vector<64x128xf32>, vector<64x128xf32> -> vector<64x128xf32>
    %cst_41 = arith.constant dense<0.000000e+00> : vector<64x128xf32>
    %50 = tpu.matmul %49, %1, %cst_41 {dimension_numbers = #tpu.dot_dimension_numbers<[1], [0], [0], [1], [0, 0, 1, 1], [], []>} : vector<64x128xf32>, vector<128x128xf32>, vector<64x128xf32> -> vector<64x128xf32>
    %51 = arith.mulf %50, %48 : vector<64x128xf32>
    %cst_42 = arith.constant 1.000000e+00 : f32
    %52 = vector.broadcast %cst_42 : f32 to vector<64x128xf32>
    %53 = arith.subf %52, %48 : vector<64x128xf32>
    %54 = arith.addf %51, %53 : vector<64x128xf32>
    %c6_i32 = arith.constant 6 : i32
    %c0_43 = arith.constant 0 : index
    %c0_44 = arith.constant 0 : index
    %c0_45 = arith.constant 0 : index
    %55 = vector.load %arg3[%c0_43, %c0_44, %c0_45] : memref<1x64x128xf32, #tpu.memory_space<vmem>>, vector<1x64x128xf32>
    %56 = vector.shape_cast %55 : vector<1x64x128xf32> to vector<64x128xf32>
    %cst_46 = arith.constant dense<0.000000e+00> : vector<64x128xf32>
    %57 = tpu.matmul %0, %54, %cst_46 {dimension_numbers = #tpu.dot_dimension_numbers<[1], [0], [0], [1], [0, 0, 1, 1], [], []>} : vector<64x64xf32>, vector<64x128xf32>, vector<64x128xf32> -> vector<64x128xf32>
    %cst_47 = arith.constant dense<0.000000e+00> : vector<64x128xf32>
    %58 = tpu.matmul %57, %1, %cst_47 {dimension_numbers = #tpu.dot_dimension_numbers<[1], [0], [0], [1], [0, 0, 1, 1], [], []>} : vector<64x128xf32>, vector<128x128xf32>, vector<64x128xf32> -> vector<64x128xf32>
    %59 = arith.mulf %58, %56 : vector<64x128xf32>
    %cst_48 = arith.constant 1.000000e+00 : f32
    %60 = vector.broadcast %cst_48 : f32 to vector<64x128xf32>
    %61 = arith.subf %60, %56 : vector<64x128xf32>
    %62 = arith.addf %59, %61 : vector<64x128xf32>
    %c0_49 = arith.constant 0 : index
    %c0_50 = arith.constant 0 : index
    %c0_51 = arith.constant 0 : index
    %63 = vector.load %arg4[%c0_49, %c0_50, %c0_51] : memref<1x64x128xf32, #tpu.memory_space<vmem>>, vector<1x64x128xf32>
    %64 = vector.shape_cast %63 : vector<1x64x128xf32> to vector<64x128xf32>
    %65 = vector.shape_cast %59 : vector<64x128xf32> to vector<1x64x128xf32>
    tpu.vector_store %arg4[%c0_49, %c0_50, %c0_51], %65 {strides = array<i32>} : memref<1x64x128xf32, #tpu.memory_space<vmem>>, vector<1x64x128xf32>,
    return
  }
  func.func @transform_0(%arg0: i32) -> (i32, i32) {
    %c0_i32 = arith.constant 0 : i32
    %c0_i32_0 = arith.constant 0 : i32
    %c0_i32_1 = arith.constant 0 : i32
    return %c0_i32, %c0_i32_0 : i32, i32
  }
  func.func @transform_1(%arg0: i32) -> (i32, i32) {
    %c0_i32 = arith.constant 0 : i32
    %c0_i32_0 = arith.constant 0 : i32
    %c0_i32_1 = arith.constant 0 : i32
    return %c0_i32, %c0_i32_0 : i32, i32
  }
  func.func @transform_2(%arg0: i32) -> (i32, i32, i32) {
    %c0_i32 = arith.constant 0 : i32
    %c0_i32_0 = arith.constant 0 : i32
    %c0_i32_1 = arith.constant 0 : i32
    return %arg0, %c0_i32, %c0_i32_0 : i32, i32, i32
  }
  func.func @transform_3(%arg0: i32) -> (i32, i32, i32) {
    %c0_i32 = arith.constant 0 : i32
    %c0_i32_0 = arith.constant 0 : i32
    %c0_i32_1 = arith.constant 0 : i32
    return %arg0, %c0_i32, %c0_i32_0 : i32, i32, i32
  }
}

</mosaic_0001>

<llo_original>
// kernel: tpu_custom_call.1
$region0: #{tpu_custom_call.1}
  #allocation0 [shape = 'u32[]', space=smem, size = 0x4, offset = 0x4, fixed_abs, tag = 'smem constant byte address 0x4 - core index']
  #allocation1 [shape = 'u32[144,128]{1,0:T(1,128)}', space=vmem, size = 0x12000, scoped, tag = 'internal scratch']
  %s0 = inlined_call_operand.hbm [shape: f32[64,64], index: 0, kind: input, shape index: {}]
  %s1 = inlined_call_operand.hbm [shape: f32[128,128], index: 1, kind: input, shape index: {}]
  %s2 = inlined_call_operand.hbm [shape: f32[2,64,128], index: 2, kind: input, shape index: {}]
  %s3 = inlined_call_operand.hbm [shape: f32[2,64,128], index: 3, kind: output, shape index: {}]
  %s4 = sld [smem:[#allocation0]]
  $region57: #{tpu_custom_call.1} parent=0
    _
  %s6 = ssub.s32 1, %s4
  %s7 = scalar_select 0, %s6, %s4
  $region1: #{tpu_custom_call.1} parent=0
    #allocation2 [shape = 'u8[32768]{0}', space=vmem, size = 0x8000, scoped, tag = 'input window, operand 0, single buffered']
    #allocation3 [shape = 's32[2]{0}', space=sflag, size = 0x8, scoped, tag = 'scoped memory for tpu_custom_call.1']
    #allocation4 [shape = 's32[2]{0}', space=sflag, size = 0x8, scoped, tag = 'scoped memory for tpu_custom_call.1']
    #allocation5 [shape = 'u8[65536]{0}', space=vmem, size = 0x10000, scoped, tag = 'input window, operand 1, single buffered']
    #allocation6 [shape = 's32[1]{0}', space=sflag, size = 0x4, scoped, tag = 'scoped memory for tpu_custom_call.1']
    #allocation7 [shape = 'u8[65536]{0}', space=vmem, size = 0x10000, scoped, tag = 'input window, operand 2']
    #allocation8 [shape = 'u8[65536]{0}', space=vmem, size = 0x10000, scoped, tag = 'output window, operand 0']
    %8 = vsyncpa [#allocation3], 0
    %9 = vsyncpa [#allocation6], 0
    %10 = vsyncpa [#allocation4], 0
    %s11 = scalar_lea.sflag [#allocation4], 1
    %12 = vsyncpa %s11, 0
    loop: start=0, step=1, limit=4
    $region2: #{tpu_custom_call.1} parent=1 // loop_pre_header
      _
    $region3: #{tpu_custom_call.1} parent=1 // loop_header
      %s14 = sphi 0, %s18
      %p15 = scmp.ge.s32.totalorder %s14, 4
      %s22 = sphi 0, %s22
      %s24 = sphi 0, %s22
      %s25 = sphi 0, %s24
      %s39 = sphi 0, %s25
      %s43 = sphi 0, %s43
      %s45 = sphi 0, %s43
      %s46 = sphi 0, %s45
      %s60 = sphi 0, %s46
      %s66 = sphi 0, %s68
      %s69 = sphi 0, %s66
      %s70 = sphi 0, %s69
      %s86 = sphi 0, %s70
      %s92 = sphi 0, %s94
      %s95 = sphi 0, %s92
      %s96 = sphi 0, %s95
      %s112 = sphi 0, %s96
    $region4: #{tpu_custom_call.1} parent=1 // loop_header_branch
      %17 = sbr.rel (%p15) target = $region8
    $region5: #{tpu_custom_call.1} parent=1 // loop_body
      %s19 = ssub.s32 %s14, 1
      %s20 = ssub.s32 %s14, 2
      %s21 = sadd.s32 %s14, 1
      %s23 = sadd.s32 %s22, 1
      %p26 = scmp.eq.s32.totalorder %s14, 1
      %p27 = scmp.ne.s32.totalorder %s22, %s24
      %p28 = scmp.eq.s32.totalorder %s14, 0
      %p29 = por %p27, %p28
      %p30 = scmp.ne.s32.totalorder %s22, %s24
      %p31 = scmp.eq.s32.totalorder %s19, 1
      %p32 = por %p30, %p31
      %p33 = scmp.ne.s32.totalorder %s24, %s25
      %p34 = scmp.eq.s32.totalorder %s19, 0
      %p35 = por %p33, %p34
      %p36 = scmp.ne.s32.totalorder %s24, %s25
      %p37 = scmp.eq.s32.totalorder %s20, 1
      %p38 = por %p36, %p37
      %p40 = scmp.ne.s32.totalorder %s25, %s39
      %p41 = scmp.eq.s32.totalorder %s20, 0
      %p42 = por %p40, %p41
      %s44 = sadd.s32 %s43, 1
      %p47 = scmp.eq.s32.totalorder %s14, 1
      %p48 = scmp.ne.s32.totalorder %s43, %s45
      %p49 = scmp.eq.s32.totalorder %s14, 0
      %p50 = por %p48, %p49
      %p51 = scmp.ne.s32.totalorder %s43, %s45
      %p52 = scmp.eq.s32.totalorder %s19, 1
      %p53 = por %p51, %p52
      %p54 = scmp.ne.s32.totalorder %s45, %s46
      %p55 = scmp.eq.s32.totalorder %s19, 0
      %p56 = por %p54, %p55
      %p57 = scmp.ne.s32.totalorder %s45, %s46
      %p58 = scmp.eq.s32.totalorder %s20, 1
      %p59 = por %p57, %p58
      %p61 = scmp.ne.s32.totalorder %s46, %s60
      %p62 = scmp.eq.s32.totalorder %s20, 0
      %p63 = por %p61, %p62
      %s64 = ssub.s32 %s14, %s21
      %p65 = scmp.eq.s32.totalorder %s64, 0
      %s67 = sadd.s32 %s66, 1
      %s68 = scalar_select %p65, %s66, %s67
      %p71 = pneg %p65
      %p72 = scmp.eq.s32.totalorder %s14, 1
      %p73 = por %p71, %p72
      %p74 = scmp.ne.s32.totalorder %s66, %s69
      %p75 = scmp.eq.s32.totalorder %s14, 0
      %p76 = por %p74, %p75
      %p77 = scmp.ne.s32.totalorder %s66, %s69
      %p78 = scmp.eq.s32.totalorder %s19, 1
      %p79 = por %p77, %p78
      %p80 = scmp.ne.s32.totalorder %s69, %s70
      %p81 = scmp.eq.s32.totalorder %s19, 0
      %p82 = por %p80, %p81
      %p83 = scmp.ne.s32.totalorder %s69, %s70
      %p84 = scmp.eq.s32.totalorder %s20, 1
      %p85 = por %p83, %p84
      %p87 = scmp.ne.s32.totalorder %s70, %s86
      %p88 = scmp.eq.s32.totalorder %s20, 0
      %p89 = por %p87, %p88
      %s90 = ssub.s32 %s14, %s21
      %p91 = scmp.eq.s32.totalorder %s90, 0
      %s93 = sadd.s32 %s92, 1
      %s94 = scalar_select %p91, %s92, %s93
      %p97 = pneg %p91
      %p98 = scmp.eq.s32.totalorder %s14, 1
      %p99 = por %p97, %p98
      %p100 = scmp.ne.s32.totalorder %s92, %s95
      %p101 = scmp.eq.s32.totalorder %s14, 0
      %p102 = por %p100, %p101
      %p103 = scmp.ne.s32.totalorder %s92, %s95
      %p104 = scmp.eq.s32.totalorder %s19, 1
      %p105 = por %p103, %p104
      %p106 = scmp.ne.s32.totalorder %s95, %s96
      %p107 = scmp.eq.s32.totalorder %s19, 0
      %p108 = por %p106, %p107
      %p109 = scmp.ne.s32.totalorder %s95, %s96
      %p110 = scmp.eq.s32.totalorder %s20, 1
      %p111 = por %p109, %p110
      %p113 = scmp.ne.s32.totalorder %s96, %s112
      %p114 = scmp.eq.s32.totalorder %s20, 0
      %p115 = por %p113, %p114
      %p116 = scmp.le.s32.totalorder 1, %s14
      %p117 = scmp.lt.s32.totalorder %s14, 3
      %p118 = pnand %p116, %p117
      %p119 = pneg %p118
      // Predicated region
      $region9: #{tpu_custom_call.1} parent=5 // pred_check
        _
      $region10: #{tpu_custom_call.1} parent=5 // pred_check_branch
        %121 = sbr.rel (%p118) target = $region12
      $region11: #{tpu_custom_call.1} parent=5 // pred_region
        %s122 = ssub.s32 %s14, 1
        // Predicated region
        $region13: #{tpu_custom_call.1} parent=11 // pred_check
          %p123 = pneg %p35
        $region14: #{tpu_custom_call.1} parent=11 // pred_check_branch
          %125 = sbr.rel (%p123) target = $region16
        $region15: #{tpu_custom_call.1} parent=11 // pred_region
          %s127 = ssub.s32 1024, 1024
          %128 = vsyncadd [#allocation3], %s127
          %s129 = sshll.u32 [#allocation2], 4
          %s130 = int_to_ptr.vmem [resolvable:$true] %s129
          %135 = dma.hbm_to_vmem [thread:$0]  %s0, 1024, %s130, [#allocation3], 128, 128, 8
        $region16: #{tpu_custom_call.1} parent=11 // pred_fallthru
          _
        // Predicated region
        $region17: #{tpu_custom_call.1} parent=11 // pred_check
          %p136 = pneg %p56
        $region18: #{tpu_custom_call.1} parent=11 // pred_check_branch
          %138 = sbr.rel (%p136) target = $region20
        $region19: #{tpu_custom_call.1} parent=11 // pred_region
          %s140 = ssub.s32 2048, 2048
          %141 = vsyncadd [#allocation6], %s140
          %s142 = sshll.u32 [#allocation5], 4
          %s143 = int_to_ptr.vmem [resolvable:$true] %s142
          %148 = dma.hbm_to_vmem [thread:$0]  %s1, 2048, %s143, [#allocation6], 128, 128, 8
        $region20: #{tpu_custom_call.1} parent=11 // pred_fallthru
          _
      $region12: #{tpu_custom_call.1} parent=5 // pred_fallthru
        _
      %p149 = scmp.lt.s32.totalorder %s14, 2
      // Predicated region
      $region21: #{tpu_custom_call.1} parent=5 // pred_check
        %p150 = pneg %p149
      $region22: #{tpu_custom_call.1} parent=5 // pred_check_branch
        %152 = sbr.rel (%p150) target = $region24
      $region23: #{tpu_custom_call.1} parent=5 // pred_region
        // Predicated region
        $region25: #{tpu_custom_call.1} parent=23 // pred_check
          %p153 = pneg %p76
        $region26: #{tpu_custom_call.1} parent=23 // pred_check_branch
          %155 = sbr.rel (%p153) target = $region28
        $region27: #{tpu_custom_call.1} parent=23 // pred_region
          %s156 = sand.u32 %s14, 1
          %s157 = scalar_lea.sflag [#allocation3], %s156
          %s158 = sand.u32 %s66, 1
          %s159 = smul.addr %s158, 64
          %s160 = scalar_lea.vmem [#allocation7], %s159
          %s162 = ssub.s32 1024, 1024
          %163 = vsyncadd %s157, %s162
          %s164 = smul.addr %s14, 8
          %s165 = smul.addr %s164, 128
          %s166 = scalar_lea.hbm %s2, %s165
          %s167 = sshll.u32 %s160, 4
          %s168 = int_to_ptr.vmem [resolvable:$true] %s167
          %173 = dma.hbm_to_vmem [thread:$0]  %s166, 1024, %s168, %s157, 128, 128, 8
        $region28: #{tpu_custom_call.1} parent=23 // pred_fallthru
          _
      $region24: #{tpu_custom_call.1} parent=5 // pred_fallthru
        _
      %p174 = scmp.le.s32.totalorder 1, %s14
      %p175 = scmp.lt.s32.totalorder %s14, 3
      %p176 = pnand %p174, %p175
      %p177 = pneg %p176
      // Predicated region
      $region29: #{tpu_custom_call.1} parent=5 // pred_check
        _
      $region30: #{tpu_custom_call.1} parent=5 // pred_check_branch
        %179 = sbr.rel (%p176) target = $region32
      $region31: #{tpu_custom_call.1} parent=5 // pred_region
        %s180 = ssub.s32 %s14, 1
        // Predicated region
        $region33: #{tpu_custom_call.1} parent=31 // pred_check
          %p181 = pneg %p35
        $region34: #{tpu_custom_call.1} parent=31 // pred_check_branch
          %183 = sbr.rel (%p181) target = $region36
        $region35: #{tpu_custom_call.1} parent=31 // pred_region
          %184 = dma.done [#allocation3], 1024
        $region36: #{tpu_custom_call.1} parent=31 // pred_fallthru
          _
        // Predicated region
        $region37: #{tpu_custom_call.1} parent=31 // pred_check
          %p185 = pneg %p56
        $region38: #{tpu_custom_call.1} parent=31 // pred_check_branch
          %187 = sbr.rel (%p185) target = $region40
        $region39: #{tpu_custom_call.1} parent=31 // pred_region
          %188 = dma.done [#allocation6], 2048
        $region40: #{tpu_custom_call.1} parent=31 // pred_fallthru
          _
        %s189 = sand.u32 %s19, 1
        %s190 = scalar_lea.sflag [#allocation3], %s189
        %s191 = sand.u32 %s69, 1
        %s192 = smul.addr %s191, 64
        %s193 = scalar_lea.vmem [#allocation7], %s192
        // Predicated region
        $region41: #{tpu_custom_call.1} parent=31 // pred_check
          %p194 = pneg %p82
        $region42: #{tpu_custom_call.1} parent=31 // pred_check_branch
          %196 = sbr.rel (%p194) target = $region44
        $region43: #{tpu_custom_call.1} parent=31 // pred_region
          %197 = dma.done %s190, 1024
        $region44: #{tpu_custom_call.1} parent=31 // pred_fallthru
          _
        %p198 = pneg %p35
        %p199 = pneg %p32
        %p200 = pneg %p56
        %p201 = pneg %p53
        %s202 = sand.u32 %s19, 1
        %s203 = scalar_lea.sflag [#allocation3], %s202
        %s204 = sand.u32 %s69, 1
        %s205 = smul.addr %s204, 64
        %s206 = scalar_lea.vmem [#allocation7], %s205
        %p207 = pneg %p82
        %p208 = pneg %p79
        %p209 = pneg %p108
        %p210 = pneg %p105
        %s211 = sand.u32 %s95, 1
        %s212 = scalar_lea.sflag [#allocation4], %s211
        %s213 = sand.u32 %s95, 1
        %s214 = smul.addr %s213, 64
        %s215 = scalar_lea.vmem [#allocation8], %s214
        %v216 = vld [vmem:[#allocation2] sm:$0xff]
        %v217 = vld [vmem:[#allocation2 + $0x8] sm:$0xff]
        %v218 = vld [vmem:[#allocation2 + $0x10] sm:$0xff]
        %v219 = vld [vmem:[#allocation2 + $0x18] sm:$0xff]
        %v220 = vld [vmem:[#allocation2 + $0x20] sm:$0xff]
        %v221 = vld [vmem:[#allocation2 + $0x28] sm:$0xff]
        %v222 = vld [vmem:[#allocation2 + $0x30] sm:$0xff]
        %v223 = vld [vmem:[#allocation2 + $0x38] sm:$0xff]
        %v224 = vld [vmem:[#allocation5] sm:$0xff]
        %v225 = vld [vmem:[#allocation5 + $0x8] sm:$0xff]
        %v226 = vld [vmem:[#allocation5 + $0x10] sm:$0xff]
        %v227 = vld [vmem:[#allocation5 + $0x18] sm:$0xff]
        %v228 = vld [vmem:[#allocation5 + $0x20] sm:$0xff]
        %v229 = vld [vmem:[#allocation5 + $0x28] sm:$0xff]
        %v230 = vld [vmem:[#allocation5 + $0x30] sm:$0xff]
        %v231 = vld [vmem:[#allocation5 + $0x38] sm:$0xff]
        %v232 = vld [vmem:[#allocation5 + $0x40] sm:$0xff]
        %v233 = vld [vmem:[#allocation5 + $0x48] sm:$0xff]
        %v234 = vld [vmem:[#allocation5 + $0x50] sm:$0xff]
        %v235 = vld [vmem:[#allocation5 + $0x58] sm:$0xff]
        %v236 = vld [vmem:[#allocation5 + $0x60] sm:$0xff]
        %v237 = vld [vmem:[#allocation5 + $0x68] sm:$0xff]
        %v238 = vld [vmem:[#allocation5 + $0x70] sm:$0xff]
        %v239 = vld [vmem:[#allocation5 + $0x78] sm:$0xff]
        %v240 = vld [vmem:[%s193] sm:$0xff]
        %v241 = vld [vmem:[%s193 + $0x8] sm:$0xff]
        %v242 = vld [vmem:[%s193 + $0x10] sm:$0xff]
        %v243 = vld [vmem:[%s193 + $0x18] sm:$0xff]
        %v244 = vld [vmem:[%s193 + $0x20] sm:$0xff]
        %v245 = vld [vmem:[%s193 + $0x28] sm:$0xff]
        %v246 = vld [vmem:[%s193 + $0x30] sm:$0xff]
        %v247 = vld [vmem:[%s193 + $0x38] sm:$0xff]
        %v248 = vsub.f32 1.0, %v240
        %v249 = vsub.f32 1.0, %v241
        %v250 = vsub.f32 1.0, %v242
        %v251 = vsub.f32 1.0, %v243
        %v252 = vsub.f32 1.0, %v244
        %v253 = vsub.f32 1.0, %v245
        %v254 = vsub.f32 1.0, %v246
        %v255 = vsub.f32 1.0, %v247
        %vm256 = vcmask 523264
        %v258 = vsel %vm256, %v216, 0
        %v261 = vsel %vm256, %v217, 0
        %v264 = vsel %vm256, %v218, 0
        %v267 = vsel %vm256, %v219, 0
        %v270 = vsel %vm256, %v220, 0
        %v273 = vsel %vm256, %v221, 0
        %v276 = vsel %vm256, %v222, 0
        %v279 = vsel %vm256, %v223, 0
        %281 = vmatprep.subr.mxu0 0.0
        %282 = vmatpush1.msra.mxu0 0.0
        %283 = vmatprep.subr.mxu0 0.0
        %284 = vmatpush1.msra.mxu0 0.0
        %285 = vmatprep.subr.mxu0 0.0
        %286 = vmatpush1.msra.mxu0 0.0
        %287 = vmatprep.subr.mxu0 0.0
        %288 = vmatpush1.msra.mxu0 0.0
        %289 = vmatprep.subr.mxu0 0.0
        %290 = vmatpush1.msra.mxu0 0.0
        %291 = vmatprep.subr.mxu0 0.0
        %292 = vmatpush1.msra.mxu0 0.0
        %293 = vmatprep.subr.mxu0 0.0
        %294 = vmatpush1.msra.mxu0 0.0
        %295 = vmatprep.subr.mxu0 0.0
        %296 = vmatpush1.msra.mxu0 0.0
        %297 = vmatprep.subr.mxu0 0.0
        %298 = vmatpush1.msra.mxu0 %v255
        %299 = vmatprep.subr.mxu0 0.0
        %300 = vmatpush1.msra.mxu0 %v254
        %301 = vmatprep.subr.mxu0 0.0
        %302 = vmatpush1.msra.mxu0 %v253
        %303 = vmatprep.subr.mxu0 0.0
        %304 = vmatpush1.msra.mxu0 %v252
        %305 = vmatprep.subr.mxu0 0.0
        %306 = vmatpush1.msra.mxu0 %v251
        %307 = vmatprep.subr.mxu0 0.0
        %308 = vmatpush1.msra.mxu0 %v250
        %309 = vmatprep.subr.mxu0 0.0
        %310 = vmatpush1.msra.mxu0 %v249
        %311 = vmatprep.subr.mxu0 0.0
        %312 = vmatpush1.msra.mxu0 %v248
        %313 = vmatprep.subr.mxu0 0.0
        %314 = vmatpush2.msra.mxu0 0.0
        %315 = vmatprep.subr.mxu0 0.0
        %316 = vmatpush2.msra.mxu0 0.0
        %317 = vmatprep.subr.mxu0 0.0
        %318 = vmatpush2.msra.mxu0 0.0
        %319 = vmatprep.subr.mxu0 0.0
        %320 = vmatpush2.msra.mxu0 0.0
        %321 = vmatprep.subr.mxu0 0.0
        %322 = vmatpush2.msra.mxu0 0.0
        %323 = vmatprep.subr.mxu0 0.0
        %324 = vmatpush2.msra.mxu0 0.0
        %325 = vmatprep.subr.mxu0 0.0
        %326 = vmatpush2.msra.mxu0 0.0
        %327 = vmatprep.subr.mxu0 0.0
        %328 = vmatpush2.msra.mxu0 0.0
        %329 = vmatprep.subr.mxu0 0.0
        %330 = vmatpush2.msra.mxu0 0.0
        %331 = vmatprep.subr.mxu0 0.0
        %332 = vmatpush2.msra.mxu0 0.0
        %333 = vmatprep.subr.mxu0 0.0
        %334 = vmatpush2.msra.mxu0 0.0
        %335 = vmatprep.subr.mxu0 0.0
        %336 = vmatpush2.msra.mxu0 0.0
        %337 = vmatprep.subr.mxu0 0.0
        %338 = vmatpush2.msra.mxu0 0.0
        %339 = vmatprep.subr.mxu0 0.0
        %340 = vmatpush2.msra.mxu0 0.0
        %341 = vmatprep.subr.mxu0 0.0
        %342 = vmatpush2.msra.mxu0 0.0
        %343 = vmatprep.subr.mxu0 0.0
        %344 = vmatpush2.msra.mxu0 0.0
        %345 = vmatprep.mubr.f32.mxu0 0.0
        %346 = vmatmul.mubr.f32.gmra.mxu0 %v258
        %v347 = vpop.f32.mrf.mxu0
        %v348 = vadd.f32 0.0, %v347
        %v349 = vpop.f32.mrf.mxu0
        %350 = vmatprep.mubr.f32.mxu0 0.0
        %351 = vmatmul.mubr.f32.gmra.mxu0 %v261
        %v352 = vpop.f32.mrf.mxu0
        %v353 = vadd.f32 0.0, %v352
        %v354 = vpop.f32.mrf.mxu0
        %355 = vmatprep.mubr.f32.mxu0 0.0
        %356 = vmatmul.mubr.f32.gmra.mxu0 %v264
        %v357 = vpop.f32.mrf.mxu0
        %v358 = vadd.f32 0.0, %v357
        %v359 = vpop.f32.mrf.mxu0
        %360 = vmatprep.mubr.f32.mxu0 0.0
        %361 = vmatmul.mubr.f32.gmra.mxu0 %v267
        %v362 = vpop.f32.mrf.mxu0
        %v363 = vadd.f32 0.0, %v362
        %v364 = vpop.f32.mrf.mxu0
        %365 = vmatprep.mubr.f32.mxu0 0.0
        %366 = vmatmul.mubr.f32.gmra.mxu0 %v270
        %v367 = vpop.f32.mrf.mxu0
        %v368 = vadd.f32 0.0, %v367
        %v369 = vpop.f32.mrf.mxu0
        %370 = vmatprep.mubr.f32.mxu0 0.0
        %371 = vmatmul.mubr.f32.gmra.mxu0 %v273
        %v372 = vpop.f32.mrf.mxu0
        %v373 = vadd.f32 0.0, %v372
        %v374 = vpop.f32.mrf.mxu0
        %375 = vmatprep.mubr.f32.mxu0 0.0
        %376 = vmatmul.mubr.f32.gmra.mxu0 %v276
        %v377 = vpop.f32.mrf.mxu0
        %v378 = vadd.f32 0.0, %v377
        %v379 = vpop.f32.mrf.mxu0
        %380 = vmatprep.mubr.f32.mxu0 0.0
        %381 = vmatmul.mubr.f32.gmra.mxu0 %v279
        %v382 = vpop.f32.mrf.mxu0
        %v383 = vadd.f32 0.0, %v382
        %v384 = vpop.f32.mrf.mxu0
        %385 = vdwg.mxu0
        %386 = vmatprep.subr.mxu0 0.0
        %387 = vmatpush1.msra.mxu0 %v239
        %388 = vmatprep.subr.mxu0 0.0
        %389 = vmatpush1.msra.mxu0 %v238
        %390 = vmatprep.subr.mxu0 0.0
        %391 = vmatpush1.msra.mxu0 %v237
        %392 = vmatprep.subr.mxu0 0.0
        %393 = vmatpush1.msra.mxu0 %v236
        %394 = vmatprep.subr.mxu0 0.0
        %395 = vmatpush1.msra.mxu0 %v235
        %396 = vmatprep.subr.mxu0 0.0
        %397 = vmatpush1.msra.mxu0 %v234
        %398 = vmatprep.subr.mxu0 0.0
        %399 = vmatpush1.msra.mxu0 %v233
        %400 = vmatprep.subr.mxu0 0.0
        %401 = vmatpush1.msra.mxu0 %v232
        %402 = vmatprep.subr.mxu0 0.0
        %403 = vmatpush1.msra.mxu0 %v231
        %404 = vmatprep.subr.mxu0 0.0
        %405 = vmatpush1.msra.mxu0 %v230
        %406 = vmatprep.subr.mxu0 0.0
        %407 = vmatpush1.msra.mxu0 %v229
        %408 = vmatprep.subr.mxu0 0.0
        %409 = vmatpush1.msra.mxu0 %v228
        %410 = vmatprep.subr.mxu0 0.0
        %411 = vmatpush1.msra.mxu0 %v227
        %412 = vmatprep.subr.mxu0 0.0
        %413 = vmatpush1.msra.mxu0 %v226
        %414 = vmatprep.subr.mxu0 0.0
        %415 = vmatpush1.msra.mxu0 %v225
        %416 = vmatprep.subr.mxu0 0.0
        %417 = vmatpush1.msra.mxu0 %v224
        %418 = vmatprep.subr.mxu0 0.0
        %419 = vmatpush2.msra.mxu0 0.0
        %420 = vmatprep.subr.mxu0 0.0
        %421 = vmatpush2.msra.mxu0 0.0
        %422 = vmatprep.subr.mxu0 0.0
        %423 = vmatpush2.msra.mxu0 0.0
        %424 = vmatprep.subr.mxu0 0.0
        %425 = vmatpush2.msra.mxu0 0.0
        %426 = vmatprep.subr.mxu0 0.0
        %427 = vmatpush2.msra.mxu0 0.0
        %428 = vmatprep.subr.mxu0 0.0
        %429 = vmatpush2.msra.mxu0 0.0
        %430 = vmatprep.subr.mxu0 0.0
        %431 = vmatpush2.msra.mxu0 0.0
        %432 = vmatprep.subr.mxu0 0.0
        %433 = vmatpush2.msra.mxu0 0.0
        %434 = vmatprep.subr.mxu0 0.0
        %435 = vmatpush2.msra.mxu0 0.0
        %436 = vmatprep.subr.mxu0 0.0
        %437 = vmatpush2.msra.mxu0 0.0
        %438 = vmatprep.subr.mxu0 0.0
        %439 = vmatpush2.msra.mxu0 0.0
        %440 = vmatprep.subr.mxu0 0.0
        %441 = vmatpush2.msra.mxu0 0.0
        %442 = vmatprep.subr.mxu0 0.0
        %443 = vmatpush2.msra.mxu0 0.0
        %444 = vmatprep.subr.mxu0 0.0
        %445 = vmatpush2.msra.mxu0 0.0
        %446 = vmatprep.subr.mxu0 0.0
        %447 = vmatpush2.msra.mxu0 0.0
        %448 = vmatprep.subr.mxu0 0.0
        %449 = vmatpush2.msra.mxu0 0.0
        %450 = vmatprep.mubr.f32.mxu0 0.0
        %451 = vmatmul.mubr.f32.gmra.mxu0 %v348
        %v452 = vpop.f32.mrf.mxu0
        %v453 = vadd.f32 0.0, %v452
        %v454 = vpop.f32.mrf.mxu0
        %455 = vmatprep.mubr.f32.mxu0 0.0
        %456 = vmatmul.mubr.f32.gmra.mxu0 %v353
        %v457 = vpop.f32.mrf.mxu0
        %v458 = vadd.f32 0.0, %v457
        %v459 = vpop.f32.mrf.mxu0
        %460 = vmatprep.mubr.f32.mxu0 0.0
        %461 = vmatmul.mubr.f32.gmra.mxu0 %v358
        %v462 = vpop.f32.mrf.mxu0
        %v463 = vadd.f32 0.0, %v462
        %v464 = vpop.f32.mrf.mxu0
        %465 = vmatprep.mubr.f32.mxu0 0.0
        %466 = vmatmul.mubr.f32.gmra.mxu0 %v363
        %v467 = vpop.f32.mrf.mxu0
        %v468 = vadd.f32 0.0, %v467
        %v469 = vpop.f32.mrf.mxu0
        %470 = vmatprep.mubr.f32.mxu0 0.0
        %471 = vmatmul.mubr.f32.gmra.mxu0 %v368
        %v472 = vpop.f32.mrf.mxu0
        %v473 = vadd.f32 0.0, %v472
        %v474 = vpop.f32.mrf.mxu0
        %475 = vmatprep.mubr.f32.mxu0 0.0
        %476 = vmatmul.mubr.f32.gmra.mxu0 %v373
        %v477 = vpop.f32.mrf.mxu0
        %v478 = vadd.f32 0.0, %v477
        %v479 = vpop.f32.mrf.mxu0
        %480 = vmatprep.mubr.f32.mxu0 0.0
        %481 = vmatmul.mubr.f32.gmra.mxu0 %v378
        %v482 = vpop.f32.mrf.mxu0
        %v483 = vadd.f32 0.0, %v482
        %v484 = vpop.f32.mrf.mxu0
        %485 = vmatprep.mubr.f32.mxu0 0.0
        %486 = vmatmul.mubr.f32.gmra.mxu0 %v383
        %v487 = vpop.f32.mrf.mxu0
        %v488 = vadd.f32 0.0, %v487
        %v489 = vpop.f32.mrf.mxu0
        %490 = vdwg.mxu0
        %v491 = vmul.f32 %v453, %v240
        %v492 = vmul.f32 %v458, %v241
        %v493 = vmul.f32 %v463, %v242
        %v494 = vmul.f32 %v468, %v243
        %v495 = vmul.f32 %v473, %v244
        %v496 = vmul.f32 %v478, %v245
        %v497 = vmul.f32 %v483, %v246
        %v498 = vmul.f32 %v488, %v247
        %v499 = vadd.f32 %v491, %v248
        %v500 = vadd.f32 %v492, %v249
        %v501 = vadd.f32 %v493, %v250
        %v502 = vadd.f32 %v494, %v251
        %v503 = vadd.f32 %v495, %v252
        %v504 = vadd.f32 %v496, %v253
        %v505 = vadd.f32 %v497, %v254
        %v506 = vadd.f32 %v498, %v255
        %507 = vmatprep.subr.mxu0 0.0
        %508 = vmatpush1.msra.mxu0 0.0
        %509 = vmatprep.subr.mxu0 0.0
        %510 = vmatpush1.msra.mxu0 0.0
        %511 = vmatprep.subr.mxu0 0.0
        %512 = vmatpush1.msra.mxu0 0.0
        %513 = vmatprep.subr.mxu0 0.0
        %514 = vmatpush1.msra.mxu0 0.0
        %515 = vmatprep.subr.mxu0 0.0
        %516 = vmatpush1.msra.mxu0 0.0
        %517 = vmatprep.subr.mxu0 0.0
        %518 = vmatpush1.msra.mxu0 0.0
        %519 = vmatprep.subr.mxu0 0.0
        %520 = vmatpush1.msra.mxu0 0.0
        %521 = vmatprep.subr.mxu0 0.0
        %522 = vmatpush1.msra.mxu0 0.0
        %523 = vmatprep.subr.mxu0 0.0
        %524 = vmatpush1.msra.mxu0 %v506
        %525 = vmatprep.subr.mxu0 0.0
        %526 = vmatpush1.msra.mxu0 %v505
        %527 = vmatprep.subr.mxu0 0.0
        %528 = vmatpush1.msra.mxu0 %v504
        %529 = vmatprep.subr.mxu0 0.0
        %530 = vmatpush1.msra.mxu0 %v503
        %531 = vmatprep.subr.mxu0 0.0
        %532 = vmatpush1.msra.mxu0 %v502
        %533 = vmatprep.subr.mxu0 0.0
        %534 = vmatpush1.msra.mxu0 %v501
        %535 = vmatprep.subr.mxu0 0.0
        %536 = vmatpush1.msra.mxu0 %v500
        %537 = vmatprep.subr.mxu0 0.0
        %538 = vmatpush1.msra.mxu0 %v499
        %539 = vmatprep.subr.mxu0 0.0
        %540 = vmatpush2.msra.mxu0 0.0
        %541 = vmatprep.subr.mxu0 0.0
        %542 = vmatpush2.msra.mxu0 0.0
        %543 = vmatprep.subr.mxu0 0.0
        %544 = vmatpush2.msra.mxu0 0.0
        %545 = vmatprep.subr.mxu0 0.0
        %546 = vmatpush2.msra.mxu0 0.0
        %547 = vmatprep.subr.mxu0 0.0
        %548 = vmatpush2.msra.mxu0 0.0
        %549 = vmatprep.subr.mxu0 0.0
        %550 = vmatpush2.msra.mxu0 0.0
        %551 = vmatprep.subr.mxu0 0.0
        %552 = vmatpush2.msra.mxu0 0.0
        %553 = vmatprep.subr.mxu0 0.0
        %554 = vmatpush2.msra.mxu0 0.0
        %555 = vmatprep.subr.mxu0 0.0
        %556 = vmatpush2.msra.mxu0 0.0
        %557 = vmatprep.subr.mxu0 0.0
        %558 = vmatpush2.msra.mxu0 0.0
        %559 = vmatprep.subr.mxu0 0.0
        %560 = vmatpush2.msra.mxu0 0.0
        %561 = vmatprep.subr.mxu0 0.0
        %562 = vmatpush2.msra.mxu0 0.0
        %563 = vmatprep.subr.mxu0 0.0
        %564 = vmatpush2.msra.mxu0 0.0
        %565 = vmatprep.subr.mxu0 0.0
        %566 = vmatpush2.msra.mxu0 0.0
        %567 = vmatprep.subr.mxu0 0.0
        %568 = vmatpush2.msra.mxu0 0.0
        %569 = vmatprep.subr.mxu0 0.0
        %570 = vmatpush2.msra.mxu0 0.0
        %571 = vmatprep.mubr.f32.mxu0 0.0
        %572 = vmatmul.mubr.f32.gmra.mxu0 %v258
        %v573 = vpop.f32.mrf.mxu0
        %v574 = vadd.f32 0.0, %v573
        %v575 = vpop.f32.mrf.mxu0
        %576 = vmatprep.mubr.f32.mxu0 0.0
        %577 = vmatmul.mubr.f32.gmra.mxu0 %v261
        %v578 = vpop.f32.mrf.mxu0
        %v579 = vadd.f32 0.0, %v578
        %v580 = vpop.f32.mrf.mxu0
        %581 = vmatprep.mubr.f32.mxu0 0.0
        %582 = vmatmul.mubr.f32.gmra.mxu0 %v264
        %v583 = vpop.f32.mrf.mxu0
        %v584 = vadd.f32 0.0, %v583
        %v585 = vpop.f32.mrf.mxu0
        %586 = vmatprep.mubr.f32.mxu0 0.0
        %587 = vmatmul.mubr.f32.gmra.mxu0 %v267
        %v588 = vpop.f32.mrf.mxu0
        %v589 = vadd.f32 0.0, %v588
        %v590 = vpop.f32.mrf.mxu0
        %591 = vmatprep.mubr.f32.mxu0 0.0
        %592 = vmatmul.mubr.f32.gmra.mxu0 %v270
        %v593 = vpop.f32.mrf.mxu0
        %v594 = vadd.f32 0.0, %v593
        %v595 = vpop.f32.mrf.mxu0
        %596 = vmatprep.mubr.f32.mxu0 0.0
        %597 = vmatmul.mubr.f32.gmra.mxu0 %v273
        %v598 = vpop.f32.mrf.mxu0
        %v599 = vadd.f32 0.0, %v598
        %v600 = vpop.f32.mrf.mxu0
        %601 = vmatprep.mubr.f32.mxu0 0.0
        %602 = vmatmul.mubr.f32.gmra.mxu0 %v276
        %v603 = vpop.f32.mrf.mxu0
        %v604 = vadd.f32 0.0, %v603
        %v605 = vpop.f32.mrf.mxu0
        %606 = vmatprep.mubr.f32.mxu0 0.0
        %607 = vmatmul.mubr.f32.gmra.mxu0 %v279
        %v608 = vpop.f32.mrf.mxu0
        %v609 = vadd.f32 0.0, %v608
        %v610 = vpop.f32.mrf.mxu0
        %611 = vdwg.mxu0
        %612 = vmatprep.subr.mxu0 0.0
        %613 = vmatpush1.msra.mxu0 %v239
        %614 = vmatprep.subr.mxu0 0.0
        %615 = vmatpush1.msra.mxu0 %v238
        %616 = vmatprep.subr.mxu0 0.0
        %617 = vmatpush1.msra.mxu0 %v237
        %618 = vmatprep.subr.mxu0 0.0
        %619 = vmatpush1.msra.mxu0 %v236
        %620 = vmatprep.subr.mxu0 0.0
        %621 = vmatpush1.msra.mxu0 %v235
        %622 = vmatprep.subr.mxu0 0.0
        %623 = vmatpush1.msra.mxu0 %v234
        %624 = vmatprep.subr.mxu0 0.0
        %625 = vmatpush1.msra.mxu0 %v233
        %626 = vmatprep.subr.mxu0 0.0
        %627 = vmatpush1.msra.mxu0 %v232
        %628 = vmatprep.subr.mxu0 0.0
        %629 = vmatpush1.msra.mxu0 %v231
        %630 = vmatprep.subr.mxu0 0.0
        %631 = vmatpush1.msra.mxu0 %v230
        %632 = vmatprep.subr.mxu0 0.0
        %633 = vmatpush1.msra.mxu0 %v229
        %634 = vmatprep.subr.mxu0 0.0
        %635 = vmatpush1.msra.mxu0 %v228
        %636 = vmatprep.subr.mxu0 0.0
        %637 = vmatpush1.msra.mxu0 %v227
        %638 = vmatprep.subr.mxu0 0.0
        %639 = vmatpush1.msra.mxu0 %v226
        %640 = vmatprep.subr.mxu0 0.0
        %641 = vmatpush1.msra.mxu0 %v225
        %642 = vmatprep.subr.mxu0 0.0
        %643 = vmatpush1.msra.mxu0 %v224
        %644 = vmatprep.subr.mxu0 0.0
        %645 = vmatpush2.msra.mxu0 0.0
        %646 = vmatprep.subr.mxu0 0.0
        %647 = vmatpush2.msra.mxu0 0.0
        %648 = vmatprep.subr.mxu0 0.0
        %649 = vmatpush2.msra.mxu0 0.0
        %650 = vmatprep.subr.mxu0 0.0
        %651 = vmatpush2.msra.mxu0 0.0
        %652 = vmatprep.subr.mxu0 0.0
        %653 = vmatpush2.msra.mxu0 0.0
        %654 = vmatprep.subr.mxu0 0.0
        %655 = vmatpush2.msra.mxu0 0.0
        %656 = vmatprep.subr.mxu0 0.0
        %657 = vmatpush2.msra.mxu0 0.0
        %658 = vmatprep.subr.mxu0 0.0
        %659 = vmatpush2.msra.mxu0 0.0
        %660 = vmatprep.subr.mxu0 0.0
        %661 = vmatpush2.msra.mxu0 0.0
        %662 = vmatprep.subr.mxu0 0.0
        %663 = vmatpush2.msra.mxu0 0.0
        %664 = vmatprep.subr.mxu0 0.0
        %665 = vmatpush2.msra.mxu0 0.0
        %666 = vmatprep.subr.mxu0 0.0
        %667 = vmatpush2.msra.mxu0 0.0
        %668 = vmatprep.subr.mxu0 0.0
        %669 = vmatpush2.msra.mxu0 0.0
        %670 = vmatprep.subr.mxu0 0.0
        %671 = vmatpush2.msra.mxu0 0.0
        %672 = vmatprep.subr.mxu0 0.0
        %673 = vmatpush2.msra.mxu0 0.0
        %674 = vmatprep.subr.mxu0 0.0
        %675 = vmatpush2.msra.mxu0 0.0
        %676 = vmatprep.mubr.f32.mxu0 0.0
        %677 = vmatmul.mubr.f32.gmra.mxu0 %v574
        %v678 = vpop.f32.mrf.mxu0
        %v679 = vadd.f32 0.0, %v678
        %v680 = vpop.f32.mrf.mxu0
        %681 = vmatprep.mubr.f32.mxu0 0.0
        %682 = vmatmul.mubr.f32.gmra.mxu0 %v579
        %v683 = vpop.f32.mrf.mxu0
        %v684 = vadd.f32 0.0, %v683
        %v685 = vpop.f32.mrf.mxu0
        %686 = vmatprep.mubr.f32.mxu0 0.0
        %687 = vmatmul.mubr.f32.gmra.mxu0 %v584
        %v688 = vpop.f32.mrf.mxu0
        %v689 = vadd.f32 0.0, %v688
        %v690 = vpop.f32.mrf.mxu0
        %691 = vmatprep.mubr.f32.mxu0 0.0
        %692 = vmatmul.mubr.f32.gmra.mxu0 %v589
        %v693 = vpop.f32.mrf.mxu0
        %v694 = vadd.f32 0.0, %v693
        %v695 = vpop.f32.mrf.mxu0
        %696 = vmatprep.mubr.f32.mxu0 0.0
        %697 = vmatmul.mubr.f32.gmra.mxu0 %v594
        %v698 = vpop.f32.mrf.mxu0
        %v699 = vadd.f32 0.0, %v698
        %v700 = vpop.f32.mrf.mxu0
        %701 = vmatprep.mubr.f32.mxu0 0.0
        %702 = vmatmul.mubr.f32.gmra.mxu0 %v599
        %v703 = vpop.f32.mrf.mxu0
        %v704 = vadd.f32 0.0, %v703
        %v705 = vpop.f32.mrf.mxu0
        %706 = vmatprep.mubr.f32.mxu0 0.0
        %707 = vmatmul.mubr.f32.gmra.mxu0 %v604
        %v708 = vpop.f32.mrf.mxu0
        %v709 = vadd.f32 0.0, %v708
        %v710 = vpop.f32.mrf.mxu0
        %711 = vmatprep.mubr.f32.mxu0 0.0
        %712 = vmatmul.mubr.f32.gmra.mxu0 %v609
        %v713 = vpop.f32.mrf.mxu0
        %v714 = vadd.f32 0.0, %v713
        %v715 = vpop.f32.mrf.mxu0
        %716 = vdwg.mxu0
        %v717 = vmul.f32 %v679, %v240
        %v718 = vmul.f32 %v684, %v241
        %v719 = vmul.f32 %v689, %v242
        %v720 = vmul.f32 %v694, %v243
        %v721 = vmul.f32 %v699, %v244
        %v722 = vmul.f32 %v704, %v245
        %v723 = vmul.f32 %v709, %v246
        %v724 = vmul.f32 %v714, %v247
        %v725 = vadd.f32 %v717, %v248
        %v726 = vadd.f32 %v718, %v249
        %v727 = vadd.f32 %v719, %v250
        %v728 = vadd.f32 %v720, %v251
        %v729 = vadd.f32 %v721, %v252
        %v730 = vadd.f32 %v722, %v253
        %v731 = vadd.f32 %v723, %v254
        %v732 = vadd.f32 %v724, %v255
        %733 = vmatprep.subr.mxu0 0.0
        %734 = vmatpush1.msra.mxu0 0.0
        %735 = vmatprep.subr.mxu0 0.0
        %736 = vmatpush1.msra.mxu0 0.0
        %737 = vmatprep.subr.mxu0 0.0
        %738 = vmatpush1.msra.mxu0 0.0
        %739 = vmatprep.subr.mxu0 0.0
        %740 = vmatpush1.msra.mxu0 0.0
        %741 = vmatprep.subr.mxu0 0.0
        %742 = vmatpush1.msra.mxu0 0.0
        %743 = vmatprep.subr.mxu0 0.0
        %744 = vmatpush1.msra.mxu0 0.0
        %745 = vmatprep.subr.mxu0 0.0
        %746 = vmatpush1.msra.mxu0 0.0
        %747 = vmatprep.subr.mxu0 0.0
        %748 = vmatpush1.msra.mxu0 0.0
        %749 = vmatprep.subr.mxu0 0.0
        %750 = vmatpush1.msra.mxu0 %v732
        %751 = vmatprep.subr.mxu0 0.0
        %752 = vmatpush1.msra.mxu0 %v731
        %753 = vmatprep.subr.mxu0 0.0
        %754 = vmatpush1.msra.mxu0 %v730
        %755 = vmatprep.subr.mxu0 0.0
        %756 = vmatpush1.msra.mxu0 %v729
        %757 = vmatprep.subr.mxu0 0.0
        %758 = vmatpush1.msra.mxu0 %v728
        %759 = vmatprep.subr.mxu0 0.0
        %760 = vmatpush1.msra.mxu0 %v727
        %761 = vmatprep.subr.mxu0 0.0
        %762 = vmatpush1.msra.mxu0 %v726
        %763 = vmatprep.subr.mxu0 0.0
        %764 = vmatpush1.msra.mxu0 %v725
        %765 = vmatprep.subr.mxu0 0.0
        %766 = vmatpush2.msra.mxu0 0.0
        %767 = vmatprep.subr.mxu0 0.0
        %768 = vmatpush2.msra.mxu0 0.0
        %769 = vmatprep.subr.mxu0 0.0
        %770 = vmatpush2.msra.mxu0 0.0
        %771 = vmatprep.subr.mxu0 0.0
        %772 = vmatpush2.msra.mxu0 0.0
        %773 = vmatprep.subr.mxu0 0.0
        %774 = vmatpush2.msra.mxu0 0.0
        %775 = vmatprep.subr.mxu0 0.0
        %776 = vmatpush2.msra.mxu0 0.0
        %777 = vmatprep.subr.mxu0 0.0
        %778 = vmatpush2.msra.mxu0 0.0
        %779 = vmatprep.subr.mxu0 0.0
        %780 = vmatpush2.msra.mxu0 0.0
        %781 = vmatprep.subr.mxu0 0.0
        %782 = vmatpush2.msra.mxu0 0.0
        %783 = vmatprep.subr.mxu0 0.0
        %784 = vmatpush2.msra.mxu0 0.0
        %785 = vmatprep.subr.mxu0 0.0
        %786 = vmatpush2.msra.mxu0 0.0
        %787 = vmatprep.subr.mxu0 0.0
        %788 = vmatpush2.msra.mxu0 0.0
        %789 = vmatprep.subr.mxu0 0.0
        %790 = vmatpush2.msra.mxu0 0.0
        %791 = vmatprep.subr.mxu0 0.0
        %792 = vmatpush2.msra.mxu0 0.0
        %793 = vmatprep.subr.mxu0 0.0
        %794 = vmatpush2.msra.mxu0 0.0
        %795 = vmatprep.subr.mxu0 0.0
        %796 = vmatpush2.msra.mxu0 0.0
        %797 = vmatprep.mubr.f32.mxu0 0.0
        %798 = vmatmul.mubr.f32.gmra.mxu0 %v258
        %v799 = vpop.f32.mrf.mxu0
        %v800 = vadd.f32 0.0, %v799
        %v801 = vpop.f32.mrf.mxu0
        %802 = vmatprep.mubr.f32.mxu0 0.0
        %803 = vmatmul.mubr.f32.gmra.mxu0 %v261
        %v804 = vpop.f32.mrf.mxu0
        %v805 = vadd.f32 0.0, %v804
        %v806 = vpop.f32.mrf.mxu0
        %807 = vmatprep.mubr.f32.mxu0 0.0
        %808 = vmatmul.mubr.f32.gmra.mxu0 %v264
        %v809 = vpop.f32.mrf.mxu0
        %v810 = vadd.f32 0.0, %v809
        %v811 = vpop.f32.mrf.mxu0
        %812 = vmatprep.mubr.f32.mxu0 0.0
        %813 = vmatmul.mubr.f32.gmra.mxu0 %v267
        %v814 = vpop.f32.mrf.mxu0
        %v815 = vadd.f32 0.0, %v814
        %v816 = vpop.f32.mrf.mxu0
        %817 = vmatprep.mubr.f32.mxu0 0.0
        %818 = vmatmul.mubr.f32.gmra.mxu0 %v270
        %v819 = vpop.f32.mrf.mxu0
        %v820 = vadd.f32 0.0, %v819
        %v821 = vpop.f32.mrf.mxu0
        %822 = vmatprep.mubr.f32.mxu0 0.0
        %823 = vmatmul.mubr.f32.gmra.mxu0 %v273
        %v824 = vpop.f32.mrf.mxu0
        %v825 = vadd.f32 0.0, %v824
        %v826 = vpop.f32.mrf.mxu0
        %827 = vmatprep.mubr.f32.mxu0 0.0
        %828 = vmatmul.mubr.f32.gmra.mxu0 %v276
        %v829 = vpop.f32.mrf.mxu0
        %v830 = vadd.f32 0.0, %v829
        %v831 = vpop.f32.mrf.mxu0
        %832 = vmatprep.mubr.f32.mxu0 0.0
        %833 = vmatmul.mubr.f32.gmra.mxu0 %v279
        %v834 = vpop.f32.mrf.mxu0
        %v835 = vadd.f32 0.0, %v834
        %v836 = vpop.f32.mrf.mxu0
        %837 = vdwg.mxu0
        %838 = vmatprep.subr.mxu0 0.0
        %839 = vmatpush1.msra.mxu0 %v239
        %840 = vmatprep.subr.mxu0 0.0
        %841 = vmatpush1.msra.mxu0 %v238
        %842 = vmatprep.subr.mxu0 0.0
        %843 = vmatpush1.msra.mxu0 %v237
        %844 = vmatprep.subr.mxu0 0.0
        %845 = vmatpush1.msra.mxu0 %v236
        %846 = vmatprep.subr.mxu0 0.0
        %847 = vmatpush1.msra.mxu0 %v235
        %848 = vmatprep.subr.mxu0 0.0
        %849 = vmatpush1.msra.mxu0 %v234
        %850 = vmatprep.subr.mxu0 0.0
        %851 = vmatpush1.msra.mxu0 %v233
        %852 = vmatprep.subr.mxu0 0.0
        %853 = vmatpush1.msra.mxu0 %v232
        %854 = vmatprep.subr.mxu0 0.0
        %855 = vmatpush1.msra.mxu0 %v231
        %856 = vmatprep.subr.mxu0 0.0
        %857 = vmatpush1.msra.mxu0 %v230
        %858 = vmatprep.subr.mxu0 0.0
        %859 = vmatpush1.msra.mxu0 %v229
        %860 = vmatprep.subr.mxu0 0.0
        %861 = vmatpush1.msra.mxu0 %v228
        %862 = vmatprep.subr.mxu0 0.0
        %863 = vmatpush1.msra.mxu0 %v227
        %864 = vmatprep.subr.mxu0 0.0
        %865 = vmatpush1.msra.mxu0 %v226
        %866 = vmatprep.subr.mxu0 0.0
        %867 = vmatpush1.msra.mxu0 %v225
        %868 = vmatprep.subr.mxu0 0.0
        %869 = vmatpush1.msra.mxu0 %v224
        %870 = vmatprep.subr.mxu0 0.0
        %871 = vmatpush2.msra.mxu0 0.0
        %872 = vmatprep.subr.mxu0 0.0
        %873 = vmatpush2.msra.mxu0 0.0
        %874 = vmatprep.subr.mxu0 0.0
        %875 = vmatpush2.msra.mxu0 0.0
        %876 = vmatprep.subr.mxu0 0.0
        %877 = vmatpush2.msra.mxu0 0.0
        %878 = vmatprep.subr.mxu0 0.0
        %879 = vmatpush2.msra.mxu0 0.0
        %880 = vmatprep.subr.mxu0 0.0
        %881 = vmatpush2.msra.mxu0 0.0
        %882 = vmatprep.subr.mxu0 0.0
        %883 = vmatpush2.msra.mxu0 0.0
        %884 = vmatprep.subr.mxu0 0.0
        %885 = vmatpush2.msra.mxu0 0.0
        %886 = vmatprep.subr.mxu0 0.0
        %887 = vmatpush2.msra.mxu0 0.0
        %888 = vmatprep.subr.mxu0 0.0
        %889 = vmatpush2.msra.mxu0 0.0
        %890 = vmatprep.subr.mxu0 0.0
        %891 = vmatpush2.msra.mxu0 0.0
        %892 = vmatprep.subr.mxu0 0.0
        %893 = vmatpush2.msra.mxu0 0.0
        %894 = vmatprep.subr.mxu0 0.0
        %895 = vmatpush2.msra.mxu0 0.0
        %896 = vmatprep.subr.mxu0 0.0
        %897 = vmatpush2.msra.mxu0 0.0
        %898 = vmatprep.subr.mxu0 0.0
        %899 = vmatpush2.msra.mxu0 0.0
        %900 = vmatprep.subr.mxu0 0.0
        %901 = vmatpush2.msra.mxu0 0.0
        %902 = vmatprep.mubr.f32.mxu0 0.0
        %903 = vmatmul.mubr.f32.gmra.mxu0 %v800
        %v904 = vpop.f32.mrf.mxu0
        %v905 = vadd.f32 0.0, %v904
        %v906 = vpop.f32.mrf.mxu0
        %907 = vmatprep.mubr.f32.mxu0 0.0
        %908 = vmatmul.mubr.f32.gmra.mxu0 %v805
        %v909 = vpop.f32.mrf.mxu0
        %v910 = vadd.f32 0.0, %v909
        %v911 = vpop.f32.mrf.mxu0
        %912 = vmatprep.mubr.f32.mxu0 0.0
        %913 = vmatmul.mubr.f32.gmra.mxu0 %v810
        %v914 = vpop.f32.mrf.mxu0
        %v915 = vadd.f32 0.0, %v914
        %v916 = vpop.f32.mrf.mxu0
        %917 = vmatprep.mubr.f32.mxu0 0.0
        %918 = vmatmul.mubr.f32.gmra.mxu0 %v815
        %v919 = vpop.f32.mrf.mxu0
        %v920 = vadd.f32 0.0, %v919
        %v921 = vpop.f32.mrf.mxu0
        %922 = vmatprep.mubr.f32.mxu0 0.0
        %923 = vmatmul.mubr.f32.gmra.mxu0 %v820
        %v924 = vpop.f32.mrf.mxu0
        %v925 = vadd.f32 0.0, %v924
        %v926 = vpop.f32.mrf.mxu0
        %927 = vmatprep.mubr.f32.mxu0 0.0
        %928 = vmatmul.mubr.f32.gmra.mxu0 %v825
        %v929 = vpop.f32.mrf.mxu0
        %v930 = vadd.f32 0.0, %v929
        %v931 = vpop.f32.mrf.mxu0
        %932 = vmatprep.mubr.f32.mxu0 0.0
        %933 = vmatmul.mubr.f32.gmra.mxu0 %v830
        %v934 = vpop.f32.mrf.mxu0
        %v935 = vadd.f32 0.0, %v934
        %v936 = vpop.f32.mrf.mxu0
        %937 = vmatprep.mubr.f32.mxu0 0.0
        %938 = vmatmul.mubr.f32.gmra.mxu0 %v835
        %v939 = vpop.f32.mrf.mxu0
        %v940 = vadd.f32 0.0, %v939
        %v941 = vpop.f32.mrf.mxu0
        %942 = vdwg.mxu0
        %v943 = vmul.f32 %v905, %v240
        %v944 = vmul.f32 %v910, %v241
        %v945 = vmul.f32 %v915, %v242
        %v946 = vmul.f32 %v920, %v243
        %v947 = vmul.f32 %v925, %v244
        %v948 = vmul.f32 %v930, %v245
        %v949 = vmul.f32 %v935, %v246
        %v950 = vmul.f32 %v940, %v247
        %v951 = vadd.f32 %v943, %v248
        %v952 = vadd.f32 %v944, %v249
        %v953 = vadd.f32 %v945, %v250
        %v954 = vadd.f32 %v946, %v251
        %v955 = vadd.f32 %v947, %v252
        %v956 = vadd.f32 %v948, %v253
        %v957 = vadd.f32 %v949, %v254
        %v958 = vadd.f32 %v950, %v255
        %959 = vmatprep.subr.mxu0 0.0
        %960 = vmatpush1.msra.mxu0 0.0
        %961 = vmatprep.subr.mxu0 0.0
        %962 = vmatpush1.msra.mxu0 0.0
        %963 = vmatprep.subr.mxu0 0.0
        %964 = vmatpush1.msra.mxu0 0.0
        %965 = vmatprep.subr.mxu0 0.0
        %966 = vmatpush1.msra.mxu0 0.0
        %967 = vmatprep.subr.mxu0 0.0
        %968 = vmatpush1.msra.mxu0 0.0
        %969 = vmatprep.subr.mxu0 0.0
        %970 = vmatpush1.msra.mxu0 0.0
        %971 = vmatprep.subr.mxu0 0.0
        %972 = vmatpush1.msra.mxu0 0.0
        %973 = vmatprep.subr.mxu0 0.0
        %974 = vmatpush1.msra.mxu0 0.0
        %975 = vmatprep.subr.mxu0 0.0
        %976 = vmatpush1.msra.mxu0 %v958
        %977 = vmatprep.subr.mxu0 0.0
        %978 = vmatpush1.msra.mxu0 %v957
        %979 = vmatprep.subr.mxu0 0.0
        %980 = vmatpush1.msra.mxu0 %v956
        %981 = vmatprep.subr.mxu0 0.0
        %982 = vmatpush1.msra.mxu0 %v955
        %983 = vmatprep.subr.mxu0 0.0
        %984 = vmatpush1.msra.mxu0 %v954
        %985 = vmatprep.subr.mxu0 0.0
        %986 = vmatpush1.msra.mxu0 %v953
        %987 = vmatprep.subr.mxu0 0.0
        %988 = vmatpush1.msra.mxu0 %v952
        %989 = vmatprep.subr.mxu0 0.0
        %990 = vmatpush1.msra.mxu0 %v951
        %991 = vmatprep.subr.mxu0 0.0
        %992 = vmatpush2.msra.mxu0 0.0
        %993 = vmatprep.subr.mxu0 0.0
        %994 = vmatpush2.msra.mxu0 0.0
        %995 = vmatprep.subr.mxu0 0.0
        %996 = vmatpush2.msra.mxu0 0.0
        %997 = vmatprep.subr.mxu0 0.0
        %998 = vmatpush2.msra.mxu0 0.0
        %999 = vmatprep.subr.mxu0 0.0
        %1000 = vmatpush2.msra.mxu0 0.0
        %1001 = vmatprep.subr.mxu0 0.0
        %1002 = vmatpush2.msra.mxu0 0.0
        %1003 = vmatprep.subr.mxu0 0.0
        %1004 = vmatpush2.msra.mxu0 0.0
        %1005 = vmatprep.subr.mxu0 0.0
        %1006 = vmatpush2.msra.mxu0 0.0
        %1007 = vmatprep.subr.mxu0 0.0
        %1008 = vmatpush2.msra.mxu0 0.0
        %1009 = vmatprep.subr.mxu0 0.0
        %1010 = vmatpush2.msra.mxu0 0.0
        %1011 = vmatprep.subr.mxu0 0.0
        %1012 = vmatpush2.msra.mxu0 0.0
        %1013 = vmatprep.subr.mxu0 0.0
        %1014 = vmatpush2.msra.mxu0 0.0
        %1015 = vmatprep.subr.mxu0 0.0
        %1016 = vmatpush2.msra.mxu0 0.0
        %1017 = vmatprep.subr.mxu0 0.0
        %1018 = vmatpush2.msra.mxu0 0.0
        %1019 = vmatprep.subr.mxu0 0.0
        %1020 = vmatpush2.msra.mxu0 0.0
        %1021 = vmatprep.subr.mxu0 0.0
        %1022 = vmatpush2.msra.mxu0 0.0
        %1023 = vmatprep.mubr.f32.mxu0 0.0
        %1024 = vmatmul.mubr.f32.gmra.mxu0 %v258
        %v1025 = vpop.f32.mrf.mxu0
        %v1026 = vadd.f32 0.0, %v1025
        %v1027 = vpop.f32.mrf.mxu0
        %1028 = vmatprep.mubr.f32.mxu0 0.0
        %1029 = vmatmul.mubr.f32.gmra.mxu0 %v261
        %v1030 = vpop.f32.mrf.mxu0
        %v1031 = vadd.f32 0.0, %v1030
        %v1032 = vpop.f32.mrf.mxu0
        %1033 = vmatprep.mubr.f32.mxu0 0.0
        %1034 = vmatmul.mubr.f32.gmra.mxu0 %v264
        %v1035 = vpop.f32.mrf.mxu0
        %v1036 = vadd.f32 0.0, %v1035
        %v1037 = vpop.f32.mrf.mxu0
        %1038 = vmatprep.mubr.f32.mxu0 0.0
        %1039 = vmatmul.mubr.f32.gmra.mxu0 %v267
        %v1040 = vpop.f32.mrf.mxu0
        %v1041 = vadd.f32 0.0, %v1040
        %v1042 = vpop.f32.mrf.mxu0
        %1043 = vmatprep.mubr.f32.mxu0 0.0
        %1044 = vmatmul.mubr.f32.gmra.mxu0 %v270
        %v1045 = vpop.f32.mrf.mxu0
        %v1046 = vadd.f32 0.0, %v1045
        %v1047 = vpop.f32.mrf.mxu0
        %1048 = vmatprep.mubr.f32.mxu0 0.0
        %1049 = vmatmul.mubr.f32.gmra.mxu0 %v273
        %v1050 = vpop.f32.mrf.mxu0
        %v1051 = vadd.f32 0.0, %v1050
        %v1052 = vpop.f32.mrf.mxu0
        %1053 = vmatprep.mubr.f32.mxu0 0.0
        %1054 = vmatmul.mubr.f32.gmra.mxu0 %v276
        %v1055 = vpop.f32.mrf.mxu0
        %v1056 = vadd.f32 0.0, %v1055
        %v1057 = vpop.f32.mrf.mxu0
        %1058 = vmatprep.mubr.f32.mxu0 0.0
        %1059 = vmatmul.mubr.f32.gmra.mxu0 %v279
        %v1060 = vpop.f32.mrf.mxu0
        %v1061 = vadd.f32 0.0, %v1060
        %v1062 = vpop.f32.mrf.mxu0
        %1063 = vdwg.mxu0
        %1064 = vmatprep.subr.mxu0 0.0
        %1065 = vmatpush1.msra.mxu0 %v239
        %1066 = vmatprep.subr.mxu0 0.0
        %1067 = vmatpush1.msra.mxu0 %v238
        %1068 = vmatprep.subr.mxu0 0.0
        %1069 = vmatpush1.msra.mxu0 %v237
        %1070 = vmatprep.subr.mxu0 0.0
        %1071 = vmatpush1.msra.mxu0 %v236
        %1072 = vmatprep.subr.mxu0 0.0
        %1073 = vmatpush1.msra.mxu0 %v235
        %1074 = vmatprep.subr.mxu0 0.0
        %1075 = vmatpush1.msra.mxu0 %v234
        %1076 = vmatprep.subr.mxu0 0.0
        %1077 = vmatpush1.msra.mxu0 %v233
        %1078 = vmatprep.subr.mxu0 0.0
        %1079 = vmatpush1.msra.mxu0 %v232
        %1080 = vmatprep.subr.mxu0 0.0
        %1081 = vmatpush1.msra.mxu0 %v231
        %1082 = vmatprep.subr.mxu0 0.0
        %1083 = vmatpush1.msra.mxu0 %v230
        %1084 = vmatprep.subr.mxu0 0.0
        %1085 = vmatpush1.msra.mxu0 %v229
        %1086 = vmatprep.subr.mxu0 0.0
        %1087 = vmatpush1.msra.mxu0 %v228
        %1088 = vmatprep.subr.mxu0 0.0
        %1089 = vmatpush1.msra.mxu0 %v227
        %1090 = vmatprep.subr.mxu0 0.0
        %1091 = vmatpush1.msra.mxu0 %v226
        %1092 = vmatprep.subr.mxu0 0.0
        %1093 = vmatpush1.msra.mxu0 %v225
        %1094 = vmatprep.subr.mxu0 0.0
        %1095 = vmatpush1.msra.mxu0 %v224
        %1096 = vmatprep.subr.mxu0 0.0
        %1097 = vmatpush2.msra.mxu0 0.0
        %1098 = vmatprep.subr.mxu0 0.0
        %1099 = vmatpush2.msra.mxu0 0.0
        %1100 = vmatprep.subr.mxu0 0.0
        %1101 = vmatpush2.msra.mxu0 0.0
        %1102 = vmatprep.subr.mxu0 0.0
        %1103 = vmatpush2.msra.mxu0 0.0
        %1104 = vmatprep.subr.mxu0 0.0
        %1105 = vmatpush2.msra.mxu0 0.0
        %1106 = vmatprep.subr.mxu0 0.0
        %1107 = vmatpush2.msra.mxu0 0.0
        %1108 = vmatprep.subr.mxu0 0.0
        %1109 = vmatpush2.msra.mxu0 0.0
        %1110 = vmatprep.subr.mxu0 0.0
        %1111 = vmatpush2.msra.mxu0 0.0
        %1112 = vmatprep.subr.mxu0 0.0
        %1113 = vmatpush2.msra.mxu0 0.0
        %1114 = vmatprep.subr.mxu0 0.0
        %1115 = vmatpush2.msra.mxu0 0.0
        %1116 = vmatprep.subr.mxu0 0.0
        %1117 = vmatpush2.msra.mxu0 0.0
        %1118 = vmatprep.subr.mxu0 0.0
        %1119 = vmatpush2.msra.mxu0 0.0
        %1120 = vmatprep.subr.mxu0 0.0
        %1121 = vmatpush2.msra.mxu0 0.0
        %1122 = vmatprep.subr.mxu0 0.0
        %1123 = vmatpush2.msra.mxu0 0.0
        %1124 = vmatprep.subr.mxu0 0.0
        %1125 = vmatpush2.msra.mxu0 0.0
        %1126 = vmatprep.subr.mxu0 0.0
        %1127 = vmatpush2.msra.mxu0 0.0
        %1128 = vmatprep.mubr.f32.mxu0 0.0
        %1129 = vmatmul.mubr.f32.gmra.mxu0 %v1026
        %v1130 = vpop.f32.mrf.mxu0
        %v1131 = vadd.f32 0.0, %v1130
        %v1132 = vpop.f32.mrf.mxu0
        %1133 = vmatprep.mubr.f32.mxu0 0.0
        %1134 = vmatmul.mubr.f32.gmra.mxu0 %v1031
        %v1135 = vpop.f32.mrf.mxu0
        %v1136 = vadd.f32 0.0, %v1135
        %v1137 = vpop.f32.mrf.mxu0
        %1138 = vmatprep.mubr.f32.mxu0 0.0
        %1139 = vmatmul.mubr.f32.gmra.mxu0 %v1036
        %v1140 = vpop.f32.mrf.mxu0
        %v1141 = vadd.f32 0.0, %v1140
        %v1142 = vpop.f32.mrf.mxu0
        %1143 = vmatprep.mubr.f32.mxu0 0.0
        %1144 = vmatmul.mubr.f32.gmra.mxu0 %v1041
        %v1145 = vpop.f32.mrf.mxu0
        %v1146 = vadd.f32 0.0, %v1145
        %v1147 = vpop.f32.mrf.mxu0
        %1148 = vmatprep.mubr.f32.mxu0 0.0
        %1149 = vmatmul.mubr.f32.gmra.mxu0 %v1046
        %v1150 = vpop.f32.mrf.mxu0
        %v1151 = vadd.f32 0.0, %v1150
        %v1152 = vpop.f32.mrf.mxu0
        %1153 = vmatprep.mubr.f32.mxu0 0.0
        %1154 = vmatmul.mubr.f32.gmra.mxu0 %v1051
        %v1155 = vpop.f32.mrf.mxu0
        %v1156 = vadd.f32 0.0, %v1155
        %v1157 = vpop.f32.mrf.mxu0
        %1158 = vmatprep.mubr.f32.mxu0 0.0
        %1159 = vmatmul.mubr.f32.gmra.mxu0 %v1056
        %v1160 = vpop.f32.mrf.mxu0
        %v1161 = vadd.f32 0.0, %v1160
        %v1162 = vpop.f32.mrf.mxu0
        %1163 = vmatprep.mubr.f32.mxu0 0.0
        %1164 = vmatmul.mubr.f32.gmra.mxu0 %v1061
        %v1165 = vpop.f32.mrf.mxu0
        %v1166 = vadd.f32 0.0, %v1165
        %v1167 = vpop.f32.mrf.mxu0
        %1168 = vdwg.mxu0
        %v1169 = vmul.f32 %v1131, %v240
        %v1170 = vmul.f32 %v1136, %v241
        %v1171 = vmul.f32 %v1141, %v242
        %v1172 = vmul.f32 %v1146, %v243
        %v1173 = vmul.f32 %v1151, %v244
        %v1174 = vmul.f32 %v1156, %v245
        %v1175 = vmul.f32 %v1161, %v246
        %v1176 = vmul.f32 %v1166, %v247
        %v1177 = vadd.f32 %v1169, %v248
        %v1178 = vadd.f32 %v1170, %v249
        %v1179 = vadd.f32 %v1171, %v250
        %v1180 = vadd.f32 %v1172, %v251
        %v1181 = vadd.f32 %v1173, %v252
        %v1182 = vadd.f32 %v1174, %v253
        %v1183 = vadd.f32 %v1175, %v254
        %v1184 = vadd.f32 %v1176, %v255
        %1185 = vmatprep.subr.mxu0 0.0
        %1186 = vmatpush1.msra.mxu0 0.0
        %1187 = vmatprep.subr.mxu0 0.0
        %1188 = vmatpush1.msra.mxu0 0.0
        %1189 = vmatprep.subr.mxu0 0.0
        %1190 = vmatpush1.msra.mxu0 0.0
        %1191 = vmatprep.subr.mxu0 0.0
        %1192 = vmatpush1.msra.mxu0 0.0
        %1193 = vmatprep.subr.mxu0 0.0
        %1194 = vmatpush1.msra.mxu0 0.0
        %1195 = vmatprep.subr.mxu0 0.0
        %1196 = vmatpush1.msra.mxu0 0.0
        %1197 = vmatprep.subr.mxu0 0.0
        %1198 = vmatpush1.msra.mxu0 0.0
        %1199 = vmatprep.subr.mxu0 0.0
        %1200 = vmatpush1.msra.mxu0 0.0
        %1201 = vmatprep.subr.mxu0 0.0
        %1202 = vmatpush1.msra.mxu0 %v1184
        %1203 = vmatprep.subr.mxu0 0.0
        %1204 = vmatpush1.msra.mxu0 %v1183
        %1205 = vmatprep.subr.mxu0 0.0
        %1206 = vmatpush1.msra.mxu0 %v1182
        %1207 = vmatprep.subr.mxu0 0.0
        %1208 = vmatpush1.msra.mxu0 %v1181
        %1209 = vmatprep.subr.mxu0 0.0
        %1210 = vmatpush1.msra.mxu0 %v1180
        %1211 = vmatprep.subr.mxu0 0.0
        %1212 = vmatpush1.msra.mxu0 %v1179
        %1213 = vmatprep.subr.mxu0 0.0
        %1214 = vmatpush1.msra.mxu0 %v1178
        %1215 = vmatprep.subr.mxu0 0.0
        %1216 = vmatpush1.msra.mxu0 %v1177
        %1217 = vmatprep.subr.mxu0 0.0
        %1218 = vmatpush2.msra.mxu0 0.0
        %1219 = vmatprep.subr.mxu0 0.0
        %1220 = vmatpush2.msra.mxu0 0.0
        %1221 = vmatprep.subr.mxu0 0.0
        %1222 = vmatpush2.msra.mxu0 0.0
        %1223 = vmatprep.subr.mxu0 0.0
        %1224 = vmatpush2.msra.mxu0 0.0
        %1225 = vmatprep.subr.mxu0 0.0
        %1226 = vmatpush2.msra.mxu0 0.0
        %1227 = vmatprep.subr.mxu0 0.0
        %1228 = vmatpush2.msra.mxu0 0.0
        %1229 = vmatprep.subr.mxu0 0.0
        %1230 = vmatpush2.msra.mxu0 0.0
        %1231 = vmatprep.subr.mxu0 0.0
        %1232 = vmatpush2.msra.mxu0 0.0
        %1233 = vmatprep.subr.mxu0 0.0
        %1234 = vmatpush2.msra.mxu0 0.0
        %1235 = vmatprep.subr.mxu0 0.0
        %1236 = vmatpush2.msra.mxu0 0.0
        %1237 = vmatprep.subr.mxu0 0.0
        %1238 = vmatpush2.msra.mxu0 0.0
        %1239 = vmatprep.subr.mxu0 0.0
        %1240 = vmatpush2.msra.mxu0 0.0
        %1241 = vmatprep.subr.mxu0 0.0
        %1242 = vmatpush2.msra.mxu0 0.0
        %1243 = vmatprep.subr.mxu0 0.0
        %1244 = vmatpush2.msra.mxu0 0.0
        %1245 = vmatprep.subr.mxu0 0.0
        %1246 = vmatpush2.msra.mxu0 0.0
        %1247 = vmatprep.subr.mxu0 0.0
        %1248 = vmatpush2.msra.mxu0 0.0
        %1249 = vmatprep.mubr.f32.mxu0 0.0
        %1250 = vmatmul.mubr.f32.gmra.mxu0 %v258
        %v1251 = vpop.f32.mrf.mxu0
        %v1252 = vadd.f32 0.0, %v1251
        %v1253 = vpop.f32.mrf.mxu0
        %1254 = vmatprep.mubr.f32.mxu0 0.0
        %1255 = vmatmul.mubr.f32.gmra.mxu0 %v261
        %v1256 = vpop.f32.mrf.mxu0
        %v1257 = vadd.f32 0.0, %v1256
        %v1258 = vpop.f32.mrf.mxu0
        %1259 = vmatprep.mubr.f32.mxu0 0.0
        %1260 = vmatmul.mubr.f32.gmra.mxu0 %v264
        %v1261 = vpop.f32.mrf.mxu0
        %v1262 = vadd.f32 0.0, %v1261
        %v1263 = vpop.f32.mrf.mxu0
        %1264 = vmatprep.mubr.f32.mxu0 0.0
        %1265 = vmatmul.mubr.f32.gmra.mxu0 %v267
        %v1266 = vpop.f32.mrf.mxu0
        %v1267 = vadd.f32 0.0, %v1266
        %v1268 = vpop.f32.mrf.mxu0
        %1269 = vmatprep.mubr.f32.mxu0 0.0
        %1270 = vmatmul.mubr.f32.gmra.mxu0 %v270
        %v1271 = vpop.f32.mrf.mxu0
        %v1272 = vadd.f32 0.0, %v1271
        %v1273 = vpop.f32.mrf.mxu0
        %1274 = vmatprep.mubr.f32.mxu0 0.0
        %1275 = vmatmul.mubr.f32.gmra.mxu0 %v273
        %v1276 = vpop.f32.mrf.mxu0
        %v1277 = vadd.f32 0.0, %v1276
        %v1278 = vpop.f32.mrf.mxu0
        %1279 = vmatprep.mubr.f32.mxu0 0.0
        %1280 = vmatmul.mubr.f32.gmra.mxu0 %v276
        %v1281 = vpop.f32.mrf.mxu0
        %v1282 = vadd.f32 0.0, %v1281
        %v1283 = vpop.f32.mrf.mxu0
        %1284 = vmatprep.mubr.f32.mxu0 0.0
        %1285 = vmatmul.mubr.f32.gmra.mxu0 %v279
        %v1286 = vpop.f32.mrf.mxu0
        %v1287 = vadd.f32 0.0, %v1286
        %v1288 = vpop.f32.mrf.mxu0
        %1289 = vdwg.mxu0
        %1290 = vmatprep.subr.mxu0 0.0
        %1291 = vmatpush1.msra.mxu0 %v239
        %1292 = vmatprep.subr.mxu0 0.0
        %1293 = vmatpush1.msra.mxu0 %v238
        %1294 = vmatprep.subr.mxu0 0.0
        %1295 = vmatpush1.msra.mxu0 %v237
        %1296 = vmatprep.subr.mxu0 0.0
        %1297 = vmatpush1.msra.mxu0 %v236
        %1298 = vmatprep.subr.mxu0 0.0
        %1299 = vmatpush1.msra.mxu0 %v235
        %1300 = vmatprep.subr.mxu0 0.0
        %1301 = vmatpush1.msra.mxu0 %v234
        %1302 = vmatprep.subr.mxu0 0.0
        %1303 = vmatpush1.msra.mxu0 %v233
        %1304 = vmatprep.subr.mxu0 0.0
        %1305 = vmatpush1.msra.mxu0 %v232
        %1306 = vmatprep.subr.mxu0 0.0
        %1307 = vmatpush1.msra.mxu0 %v231
        %1308 = vmatprep.subr.mxu0 0.0
        %1309 = vmatpush1.msra.mxu0 %v230
        %1310 = vmatprep.subr.mxu0 0.0
        %1311 = vmatpush1.msra.mxu0 %v229
        %1312 = vmatprep.subr.mxu0 0.0
        %1313 = vmatpush1.msra.mxu0 %v228
        %1314 = vmatprep.subr.mxu0 0.0
        %1315 = vmatpush1.msra.mxu0 %v227
        %1316 = vmatprep.subr.mxu0 0.0
        %1317 = vmatpush1.msra.mxu0 %v226
        %1318 = vmatprep.subr.mxu0 0.0
        %1319 = vmatpush1.msra.mxu0 %v225
        %1320 = vmatprep.subr.mxu0 0.0
        %1321 = vmatpush1.msra.mxu0 %v224
        %1322 = vmatprep.subr.mxu0 0.0
        %1323 = vmatpush2.msra.mxu0 0.0
        %1324 = vmatprep.subr.mxu0 0.0
        %1325 = vmatpush2.msra.mxu0 0.0
        %1326 = vmatprep.subr.mxu0 0.0
        %1327 = vmatpush2.msra.mxu0 0.0
        %1328 = vmatprep.subr.mxu0 0.0
        %1329 = vmatpush2.msra.mxu0 0.0
        %1330 = vmatprep.subr.mxu0 0.0
        %1331 = vmatpush2.msra.mxu0 0.0
        %1332 = vmatprep.subr.mxu0 0.0
        %1333 = vmatpush2.msra.mxu0 0.0
        %1334 = vmatprep.subr.mxu0 0.0
        %1335 = vmatpush2.msra.mxu0 0.0
        %1336 = vmatprep.subr.mxu0 0.0
        %1337 = vmatpush2.msra.mxu0 0.0
        %1338 = vmatprep.subr.mxu0 0.0
        %1339 = vmatpush2.msra.mxu0 0.0
        %1340 = vmatprep.subr.mxu0 0.0
        %1341 = vmatpush2.msra.mxu0 0.0
        %1342 = vmatprep.subr.mxu0 0.0
        %1343 = vmatpush2.msra.mxu0 0.0
        %1344 = vmatprep.subr.mxu0 0.0
        %1345 = vmatpush2.msra.mxu0 0.0
        %1346 = vmatprep.subr.mxu0 0.0
        %1347 = vmatpush2.msra.mxu0 0.0
        %1348 = vmatprep.subr.mxu0 0.0
        %1349 = vmatpush2.msra.mxu0 0.0
        %1350 = vmatprep.subr.mxu0 0.0
        %1351 = vmatpush2.msra.mxu0 0.0
        %1352 = vmatprep.subr.mxu0 0.0
        %1353 = vmatpush2.msra.mxu0 0.0
        %1354 = vmatprep.mubr.f32.mxu0 0.0
        %1355 = vmatmul.mubr.f32.gmra.mxu0 %v1252
        %v1356 = vpop.f32.mrf.mxu0
        %v1357 = vadd.f32 0.0, %v1356
        %v1358 = vpop.f32.mrf.mxu0
        %1359 = vmatprep.mubr.f32.mxu0 0.0
        %1360 = vmatmul.mubr.f32.gmra.mxu0 %v1257
        %v1361 = vpop.f32.mrf.mxu0
        %v1362 = vadd.f32 0.0, %v1361
        %v1363 = vpop.f32.mrf.mxu0
        %1364 = vmatprep.mubr.f32.mxu0 0.0
        %1365 = vmatmul.mubr.f32.gmra.mxu0 %v1262
        %v1366 = vpop.f32.mrf.mxu0
        %v1367 = vadd.f32 0.0, %v1366
        %v1368 = vpop.f32.mrf.mxu0
        %1369 = vmatprep.mubr.f32.mxu0 0.0
        %1370 = vmatmul.mubr.f32.gmra.mxu0 %v1267
        %v1371 = vpop.f32.mrf.mxu0
        %v1372 = vadd.f32 0.0, %v1371
        %v1373 = vpop.f32.mrf.mxu0
        %1374 = vmatprep.mubr.f32.mxu0 0.0
        %1375 = vmatmul.mubr.f32.gmra.mxu0 %v1272
        %v1376 = vpop.f32.mrf.mxu0
        %v1377 = vadd.f32 0.0, %v1376
        %v1378 = vpop.f32.mrf.mxu0
        %1379 = vmatprep.mubr.f32.mxu0 0.0
        %1380 = vmatmul.mubr.f32.gmra.mxu0 %v1277
        %v1381 = vpop.f32.mrf.mxu0
        %v1382 = vadd.f32 0.0, %v1381
        %v1383 = vpop.f32.mrf.mxu0
        %1384 = vmatprep.mubr.f32.mxu0 0.0
        %1385 = vmatmul.mubr.f32.gmra.mxu0 %v1282
        %v1386 = vpop.f32.mrf.mxu0
        %v1387 = vadd.f32 0.0, %v1386
        %v1388 = vpop.f32.mrf.mxu0
        %1389 = vmatprep.mubr.f32.mxu0 0.0
        %1390 = vmatmul.mubr.f32.gmra.mxu0 %v1287
        %v1391 = vpop.f32.mrf.mxu0
        %v1392 = vadd.f32 0.0, %v1391
        %v1393 = vpop.f32.mrf.mxu0
        %1394 = vdwg.mxu0
        %v1395 = vmul.f32 %v1357, %v240
        %v1396 = vmul.f32 %v1362, %v241
        %v1397 = vmul.f32 %v1367, %v242
        %v1398 = vmul.f32 %v1372, %v243
        %v1399 = vmul.f32 %v1377, %v244
        %v1400 = vmul.f32 %v1382, %v245
        %v1401 = vmul.f32 %v1387, %v246
        %v1402 = vmul.f32 %v1392, %v247
        %v1403 = vadd.f32 %v1395, %v248
        %v1404 = vadd.f32 %v1396, %v249
        %v1405 = vadd.f32 %v1397, %v250
        %v1406 = vadd.f32 %v1398, %v251
        %v1407 = vadd.f32 %v1399, %v252
        %v1408 = vadd.f32 %v1400, %v253
        %v1409 = vadd.f32 %v1401, %v254
        %v1410 = vadd.f32 %v1402, %v255
        %1411 = vmatprep.subr.mxu0 0.0
        %1412 = vmatpush1.msra.mxu0 0.0
        %1413 = vmatprep.subr.mxu0 0.0
        %1414 = vmatpush1.msra.mxu0 0.0
        %1415 = vmatprep.subr.mxu0 0.0
        %1416 = vmatpush1.msra.mxu0 0.0
        %1417 = vmatprep.subr.mxu0 0.0
        %1418 = vmatpush1.msra.mxu0 0.0
        %1419 = vmatprep.subr.mxu0 0.0
        %1420 = vmatpush1.msra.mxu0 0.0
        %1421 = vmatprep.subr.mxu0 0.0
        %1422 = vmatpush1.msra.mxu0 0.0
        %1423 = vmatprep.subr.mxu0 0.0
        %1424 = vmatpush1.msra.mxu0 0.0
        %1425 = vmatprep.subr.mxu0 0.0
        %1426 = vmatpush1.msra.mxu0 0.0
        %1427 = vmatprep.subr.mxu0 0.0
        %1428 = vmatpush1.msra.mxu0 %v1410
        %1429 = vmatprep.subr.mxu0 0.0
        %1430 = vmatpush1.msra.mxu0 %v1409
        %1431 = vmatprep.subr.mxu0 0.0
        %1432 = vmatpush1.msra.mxu0 %v1408
        %1433 = vmatprep.subr.mxu0 0.0
        %1434 = vmatpush1.msra.mxu0 %v1407
        %1435 = vmatprep.subr.mxu0 0.0
        %1436 = vmatpush1.msra.mxu0 %v1406
        %1437 = vmatprep.subr.mxu0 0.0
        %1438 = vmatpush1.msra.mxu0 %v1405
        %1439 = vmatprep.subr.mxu0 0.0
        %1440 = vmatpush1.msra.mxu0 %v1404
        %1441 = vmatprep.subr.mxu0 0.0
        %1442 = vmatpush1.msra.mxu0 %v1403
        %1443 = vmatprep.subr.mxu0 0.0
        %1444 = vmatpush2.msra.mxu0 0.0
        %1445 = vmatprep.subr.mxu0 0.0
        %1446 = vmatpush2.msra.mxu0 0.0
        %1447 = vmatprep.subr.mxu0 0.0
        %1448 = vmatpush2.msra.mxu0 0.0
        %1449 = vmatprep.subr.mxu0 0.0
        %1450 = vmatpush2.msra.mxu0 0.0
        %1451 = vmatprep.subr.mxu0 0.0
        %1452 = vmatpush2.msra.mxu0 0.0
        %1453 = vmatprep.subr.mxu0 0.0
        %1454 = vmatpush2.msra.mxu0 0.0
        %1455 = vmatprep.subr.mxu0 0.0
        %1456 = vmatpush2.msra.mxu0 0.0
        %1457 = vmatprep.subr.mxu0 0.0
        %1458 = vmatpush2.msra.mxu0 0.0
        %1459 = vmatprep.subr.mxu0 0.0
        %1460 = vmatpush2.msra.mxu0 0.0
        %1461 = vmatprep.subr.mxu0 0.0
        %1462 = vmatpush2.msra.mxu0 0.0
        %1463 = vmatprep.subr.mxu0 0.0
        %1464 = vmatpush2.msra.mxu0 0.0
        %1465 = vmatprep.subr.mxu0 0.0
        %1466 = vmatpush2.msra.mxu0 0.0
        %1467 = vmatprep.subr.mxu0 0.0
        %1468 = vmatpush2.msra.mxu0 0.0
        %1469 = vmatprep.subr.mxu0 0.0
        %1470 = vmatpush2.msra.mxu0 0.0
        %1471 = vmatprep.subr.mxu0 0.0
        %1472 = vmatpush2.msra.mxu0 0.0
        %1473 = vmatprep.subr.mxu0 0.0
        %1474 = vmatpush2.msra.mxu0 0.0
        %1475 = vmatprep.mubr.f32.mxu0 0.0
        %1476 = vmatmul.mubr.f32.gmra.mxu0 %v258
        %v1477 = vpop.f32.mrf.mxu0
        %v1478 = vadd.f32 0.0, %v1477
        %v1479 = vpop.f32.mrf.mxu0
        %1480 = vmatprep.mubr.f32.mxu0 0.0
        %1481 = vmatmul.mubr.f32.gmra.mxu0 %v261
        %v1482 = vpop.f32.mrf.mxu0
        %v1483 = vadd.f32 0.0, %v1482
        %v1484 = vpop.f32.mrf.mxu0
        %1485 = vmatprep.mubr.f32.mxu0 0.0
        %1486 = vmatmul.mubr.f32.gmra.mxu0 %v264
        %v1487 = vpop.f32.mrf.mxu0
        %v1488 = vadd.f32 0.0, %v1487
        %v1489 = vpop.f32.mrf.mxu0
        %1490 = vmatprep.mubr.f32.mxu0 0.0
        %1491 = vmatmul.mubr.f32.gmra.mxu0 %v267
        %v1492 = vpop.f32.mrf.mxu0
        %v1493 = vadd.f32 0.0, %v1492
        %v1494 = vpop.f32.mrf.mxu0
        %1495 = vmatprep.mubr.f32.mxu0 0.0
        %1496 = vmatmul.mubr.f32.gmra.mxu0 %v270
        %v1497 = vpop.f32.mrf.mxu0
        %v1498 = vadd.f32 0.0, %v1497
        %v1499 = vpop.f32.mrf.mxu0
        %1500 = vmatprep.mubr.f32.mxu0 0.0
        %1501 = vmatmul.mubr.f32.gmra.mxu0 %v273
        %v1502 = vpop.f32.mrf.mxu0
        %v1503 = vadd.f32 0.0, %v1502
        %v1504 = vpop.f32.mrf.mxu0
        %1505 = vmatprep.mubr.f32.mxu0 0.0
        %1506 = vmatmul.mubr.f32.gmra.mxu0 %v276
        %v1507 = vpop.f32.mrf.mxu0
        %v1508 = vadd.f32 0.0, %v1507
        %v1509 = vpop.f32.mrf.mxu0
        %1510 = vmatprep.mubr.f32.mxu0 0.0
        %1511 = vmatmul.mubr.f32.gmra.mxu0 %v279
        %v1512 = vpop.f32.mrf.mxu0
        %v1513 = vadd.f32 0.0, %v1512
        %v1514 = vpop.f32.mrf.mxu0
        %1515 = vdwg.mxu0
        %1516 = vmatprep.subr.mxu0 0.0
        %1517 = vmatpush1.msra.mxu0 %v239
        %1518 = vmatprep.subr.mxu0 0.0
        %1519 = vmatpush1.msra.mxu0 %v238
        %1520 = vmatprep.subr.mxu0 0.0
        %1521 = vmatpush1.msra.mxu0 %v237
        %1522 = vmatprep.subr.mxu0 0.0
        %1523 = vmatpush1.msra.mxu0 %v236
        %1524 = vmatprep.subr.mxu0 0.0
        %1525 = vmatpush1.msra.mxu0 %v235
        %1526 = vmatprep.subr.mxu0 0.0
        %1527 = vmatpush1.msra.mxu0 %v234
        %1528 = vmatprep.subr.mxu0 0.0
        %1529 = vmatpush1.msra.mxu0 %v233
        %1530 = vmatprep.subr.mxu0 0.0
        %1531 = vmatpush1.msra.mxu0 %v232
        %1532 = vmatprep.subr.mxu0 0.0
        %1533 = vmatpush1.msra.mxu0 %v231
        %1534 = vmatprep.subr.mxu0 0.0
        %1535 = vmatpush1.msra.mxu0 %v230
        %1536 = vmatprep.subr.mxu0 0.0
        %1537 = vmatpush1.msra.mxu0 %v229
        %1538 = vmatprep.subr.mxu0 0.0
        %1539 = vmatpush1.msra.mxu0 %v228
        %1540 = vmatprep.subr.mxu0 0.0
        %1541 = vmatpush1.msra.mxu0 %v227
        %1542 = vmatprep.subr.mxu0 0.0
        %1543 = vmatpush1.msra.mxu0 %v226
        %1544 = vmatprep.subr.mxu0 0.0
        %1545 = vmatpush1.msra.mxu0 %v225
        %1546 = vmatprep.subr.mxu0 0.0
        %1547 = vmatpush1.msra.mxu0 %v224
        %1548 = vmatprep.subr.mxu0 0.0
        %1549 = vmatpush2.msra.mxu0 0.0
        %1550 = vmatprep.subr.mxu0 0.0
        %1551 = vmatpush2.msra.mxu0 0.0
        %1552 = vmatprep.subr.mxu0 0.0
        %1553 = vmatpush2.msra.mxu0 0.0
        %1554 = vmatprep.subr.mxu0 0.0
        %1555 = vmatpush2.msra.mxu0 0.0
        %1556 = vmatprep.subr.mxu0 0.0
        %1557 = vmatpush2.msra.mxu0 0.0
        %1558 = vmatprep.subr.mxu0 0.0
        %1559 = vmatpush2.msra.mxu0 0.0
        %1560 = vmatprep.subr.mxu0 0.0
        %1561 = vmatpush2.msra.mxu0 0.0
        %1562 = vmatprep.subr.mxu0 0.0
        %1563 = vmatpush2.msra.mxu0 0.0
        %1564 = vmatprep.subr.mxu0 0.0
        %1565 = vmatpush2.msra.mxu0 0.0
        %1566 = vmatprep.subr.mxu0 0.0
        %1567 = vmatpush2.msra.mxu0 0.0
        %1568 = vmatprep.subr.mxu0 0.0
        %1569 = vmatpush2.msra.mxu0 0.0
        %1570 = vmatprep.subr.mxu0 0.0
        %1571 = vmatpush2.msra.mxu0 0.0
        %1572 = vmatprep.subr.mxu0 0.0
        %1573 = vmatpush2.msra.mxu0 0.0
        %1574 = vmatprep.subr.mxu0 0.0
        %1575 = vmatpush2.msra.mxu0 0.0
        %1576 = vmatprep.subr.mxu0 0.0
        %1577 = vmatpush2.msra.mxu0 0.0
        %1578 = vmatprep.subr.mxu0 0.0
        %1579 = vmatpush2.msra.mxu0 0.0
        %1580 = vmatprep.mubr.f32.mxu0 0.0
        %1581 = vmatmul.mubr.f32.gmra.mxu0 %v1478
        %v1582 = vpop.f32.mrf.mxu0
        %v1583 = vadd.f32 0.0, %v1582
        %v1584 = vpop.f32.mrf.mxu0
        %1585 = vmatprep.mubr.f32.mxu0 0.0
        %1586 = vmatmul.mubr.f32.gmra.mxu0 %v1483
        %v1587 = vpop.f32.mrf.mxu0
        %v1588 = vadd.f32 0.0, %v1587
        %v1589 = vpop.f32.mrf.mxu0
        %1590 = vmatprep.mubr.f32.mxu0 0.0
        %1591 = vmatmul.mubr.f32.gmra.mxu0 %v1488
        %v1592 = vpop.f32.mrf.mxu0
        %v1593 = vadd.f32 0.0, %v1592
        %v1594 = vpop.f32.mrf.mxu0
        %1595 = vmatprep.mubr.f32.mxu0 0.0
        %1596 = vmatmul.mubr.f32.gmra.mxu0 %v1493
        %v1597 = vpop.f32.mrf.mxu0
        %v1598 = vadd.f32 0.0, %v1597
        %v1599 = vpop.f32.mrf.mxu0
        %1600 = vmatprep.mubr.f32.mxu0 0.0
        %1601 = vmatmul.mubr.f32.gmra.mxu0 %v1498
        %v1602 = vpop.f32.mrf.mxu0
        %v1603 = vadd.f32 0.0, %v1602
        %v1604 = vpop.f32.mrf.mxu0
        %1605 = vmatprep.mubr.f32.mxu0 0.0
        %1606 = vmatmul.mubr.f32.gmra.mxu0 %v1503
        %v1607 = vpop.f32.mrf.mxu0
        %v1608 = vadd.f32 0.0, %v1607
        %v1609 = vpop.f32.mrf.mxu0
        %1610 = vmatprep.mubr.f32.mxu0 0.0
        %1611 = vmatmul.mubr.f32.gmra.mxu0 %v1508
        %v1612 = vpop.f32.mrf.mxu0
        %v1613 = vadd.f32 0.0, %v1612
        %v1614 = vpop.f32.mrf.mxu0
        %1615 = vmatprep.mubr.f32.mxu0 0.0
        %1616 = vmatmul.mubr.f32.gmra.mxu0 %v1513
        %v1617 = vpop.f32.mrf.mxu0
        %v1618 = vadd.f32 0.0, %v1617
        %v1619 = vpop.f32.mrf.mxu0
        %1620 = vdwg.mxu0
        %v1621 = vmul.f32 %v1583, %v240
        %v1622 = vmul.f32 %v1588, %v241
        %v1623 = vmul.f32 %v1593, %v242
        %v1624 = vmul.f32 %v1598, %v243
        %v1625 = vmul.f32 %v1603, %v244
        %v1626 = vmul.f32 %v1608, %v245
        %v1627 = vmul.f32 %v1613, %v246
        %v1628 = vmul.f32 %v1618, %v247
        %v1629 = vadd.f32 %v1621, %v248
        %v1630 = vadd.f32 %v1622, %v249
        %v1631 = vadd.f32 %v1623, %v250
        %v1632 = vadd.f32 %v1624, %v251
        %v1633 = vadd.f32 %v1625, %v252
        %v1634 = vadd.f32 %v1626, %v253
        %v1635 = vadd.f32 %v1627, %v254
        %v1636 = vadd.f32 %v1628, %v255
        %1637 = vmatprep.subr.mxu0 0.0
        %1638 = vmatpush1.msra.mxu0 0.0
        %1639 = vmatprep.subr.mxu0 0.0
        %1640 = vmatpush1.msra.mxu0 0.0
        %1641 = vmatprep.subr.mxu0 0.0
        %1642 = vmatpush1.msra.mxu0 0.0
        %1643 = vmatprep.subr.mxu0 0.0
        %1644 = vmatpush1.msra.mxu0 0.0
        %1645 = vmatprep.subr.mxu0 0.0
        %1646 = vmatpush1.msra.mxu0 0.0
        %1647 = vmatprep.subr.mxu0 0.0
        %1648 = vmatpush1.msra.mxu0 0.0
        %1649 = vmatprep.subr.mxu0 0.0
        %1650 = vmatpush1.msra.mxu0 0.0
        %1651 = vmatprep.subr.mxu0 0.0
        %1652 = vmatpush1.msra.mxu0 0.0
        %1653 = vmatprep.subr.mxu0 0.0
        %1654 = vmatpush1.msra.mxu0 %v1636
        %1655 = vmatprep.subr.mxu0 0.0
        %1656 = vmatpush1.msra.mxu0 %v1635
        %1657 = vmatprep.subr.mxu0 0.0
        %1658 = vmatpush1.msra.mxu0 %v1634
        %1659 = vmatprep.subr.mxu0 0.0
        %1660 = vmatpush1.msra.mxu0 %v1633
        %1661 = vmatprep.subr.mxu0 0.0
        %1662 = vmatpush1.msra.mxu0 %v1632
        %1663 = vmatprep.subr.mxu0 0.0
        %1664 = vmatpush1.msra.mxu0 %v1631
        %1665 = vmatprep.subr.mxu0 0.0
        %1666 = vmatpush1.msra.mxu0 %v1630
        %1667 = vmatprep.subr.mxu0 0.0
        %1668 = vmatpush1.msra.mxu0 %v1629
        %1669 = vmatprep.subr.mxu0 0.0
        %1670 = vmatpush2.msra.mxu0 0.0
        %1671 = vmatprep.subr.mxu0 0.0
        %1672 = vmatpush2.msra.mxu0 0.0
        %1673 = vmatprep.subr.mxu0 0.0
        %1674 = vmatpush2.msra.mxu0 0.0
        %1675 = vmatprep.subr.mxu0 0.0
        %1676 = vmatpush2.msra.mxu0 0.0
        %1677 = vmatprep.subr.mxu0 0.0
        %1678 = vmatpush2.msra.mxu0 0.0
        %1679 = vmatprep.subr.mxu0 0.0
        %1680 = vmatpush2.msra.mxu0 0.0
        %1681 = vmatprep.subr.mxu0 0.0
        %1682 = vmatpush2.msra.mxu0 0.0
        %1683 = vmatprep.subr.mxu0 0.0
        %1684 = vmatpush2.msra.mxu0 0.0
        %1685 = vmatprep.subr.mxu0 0.0
        %1686 = vmatpush2.msra.mxu0 0.0
        %1687 = vmatprep.subr.mxu0 0.0
        %1688 = vmatpush2.msra.mxu0 0.0
        %1689 = vmatprep.subr.mxu0 0.0
        %1690 = vmatpush2.msra.mxu0 0.0
        %1691 = vmatprep.subr.mxu0 0.0
        %1692 = vmatpush2.msra.mxu0 0.0
        %1693 = vmatprep.subr.mxu0 0.0
        %1694 = vmatpush2.msra.mxu0 0.0
        %1695 = vmatprep.subr.mxu0 0.0
        %1696 = vmatpush2.msra.mxu0 0.0
        %1697 = vmatprep.subr.mxu0 0.0
        %1698 = vmatpush2.msra.mxu0 0.0
        %1699 = vmatprep.subr.mxu0 0.0
        %1700 = vmatpush2.msra.mxu0 0.0
        %1701 = vmatprep.mubr.f32.mxu0 0.0
        %1702 = vmatmul.mubr.f32.gmra.mxu0 %v258
        %v1703 = vpop.f32.mrf.mxu0
        %v1704 = vadd.f32 0.0, %v1703
        %v1705 = vpop.f32.mrf.mxu0
        %1706 = vmatprep.mubr.f32.mxu0 0.0
        %1707 = vmatmul.mubr.f32.gmra.mxu0 %v261
        %v1708 = vpop.f32.mrf.mxu0
        %v1709 = vadd.f32 0.0, %v1708
        %v1710 = vpop.f32.mrf.mxu0
        %1711 = vmatprep.mubr.f32.mxu0 0.0
        %1712 = vmatmul.mubr.f32.gmra.mxu0 %v264
        %v1713 = vpop.f32.mrf.mxu0
        %v1714 = vadd.f32 0.0, %v1713
        %v1715 = vpop.f32.mrf.mxu0
        %1716 = vmatprep.mubr.f32.mxu0 0.0
        %1717 = vmatmul.mubr.f32.gmra.mxu0 %v267
        %v1718 = vpop.f32.mrf.mxu0
        %v1719 = vadd.f32 0.0, %v1718
        %v1720 = vpop.f32.mrf.mxu0
        %1721 = vmatprep.mubr.f32.mxu0 0.0
        %1722 = vmatmul.mubr.f32.gmra.mxu0 %v270
        %v1723 = vpop.f32.mrf.mxu0
        %v1724 = vadd.f32 0.0, %v1723
        %v1725 = vpop.f32.mrf.mxu0
        %1726 = vmatprep.mubr.f32.mxu0 0.0
        %1727 = vmatmul.mubr.f32.gmra.mxu0 %v273
        %v1728 = vpop.f32.mrf.mxu0
        %v1729 = vadd.f32 0.0, %v1728
        %v1730 = vpop.f32.mrf.mxu0
        %1731 = vmatprep.mubr.f32.mxu0 0.0
        %1732 = vmatmul.mubr.f32.gmra.mxu0 %v276
        %v1733 = vpop.f32.mrf.mxu0
        %v1734 = vadd.f32 0.0, %v1733
        %v1735 = vpop.f32.mrf.mxu0
        %1736 = vmatprep.mubr.f32.mxu0 0.0
        %1737 = vmatmul.mubr.f32.gmra.mxu0 %v279
        %v1738 = vpop.f32.mrf.mxu0
        %v1739 = vadd.f32 0.0, %v1738
        %v1740 = vpop.f32.mrf.mxu0
        %1741 = vdwg.mxu0
        %1742 = vmatprep.subr.mxu0 0.0
        %1743 = vmatpush1.msra.mxu0 %v239
        %1744 = vmatprep.subr.mxu0 0.0
        %1745 = vmatpush1.msra.mxu0 %v238
        %1746 = vmatprep.subr.mxu0 0.0
        %1747 = vmatpush1.msra.mxu0 %v237
        %1748 = vmatprep.subr.mxu0 0.0
        %1749 = vmatpush1.msra.mxu0 %v236
        %1750 = vmatprep.subr.mxu0 0.0
        %1751 = vmatpush1.msra.mxu0 %v235
        %1752 = vmatprep.subr.mxu0 0.0
        %1753 = vmatpush1.msra.mxu0 %v234
        %1754 = vmatprep.subr.mxu0 0.0
        %1755 = vmatpush1.msra.mxu0 %v233
        %1756 = vmatprep.subr.mxu0 0.0
        %1757 = vmatpush1.msra.mxu0 %v232
        %1758 = vmatprep.subr.mxu0 0.0
        %1759 = vmatpush1.msra.mxu0 %v231
        %1760 = vmatprep.subr.mxu0 0.0
        %1761 = vmatpush1.msra.mxu0 %v230
        %1762 = vmatprep.subr.mxu0 0.0
        %1763 = vmatpush1.msra.mxu0 %v229
        %1764 = vmatprep.subr.mxu0 0.0
        %1765 = vmatpush1.msra.mxu0 %v228
        %1766 = vmatprep.subr.mxu0 0.0
        %1767 = vmatpush1.msra.mxu0 %v227
        %1768 = vmatprep.subr.mxu0 0.0
        %1769 = vmatpush1.msra.mxu0 %v226
        %1770 = vmatprep.subr.mxu0 0.0
        %1771 = vmatpush1.msra.mxu0 %v225
        %1772 = vmatprep.subr.mxu0 0.0
        %1773 = vmatpush1.msra.mxu0 %v224
        %1774 = vmatprep.subr.mxu0 0.0
        %1775 = vmatpush2.msra.mxu0 0.0
        %1776 = vmatprep.subr.mxu0 0.0
        %1777 = vmatpush2.msra.mxu0 0.0
        %1778 = vmatprep.subr.mxu0 0.0
        %1779 = vmatpush2.msra.mxu0 0.0
        %1780 = vmatprep.subr.mxu0 0.0
        %1781 = vmatpush2.msra.mxu0 0.0
        %1782 = vmatprep.subr.mxu0 0.0
        %1783 = vmatpush2.msra.mxu0 0.0
        %1784 = vmatprep.subr.mxu0 0.0
        %1785 = vmatpush2.msra.mxu0 0.0
        %1786 = vmatprep.subr.mxu0 0.0
        %1787 = vmatpush2.msra.mxu0 0.0
        %1788 = vmatprep.subr.mxu0 0.0
        %1789 = vmatpush2.msra.mxu0 0.0
        %1790 = vmatprep.subr.mxu0 0.0
        %1791 = vmatpush2.msra.mxu0 0.0
        %1792 = vmatprep.subr.mxu0 0.0
        %1793 = vmatpush2.msra.mxu0 0.0
        %1794 = vmatprep.subr.mxu0 0.0
        %1795 = vmatpush2.msra.mxu0 0.0
        %1796 = vmatprep.subr.mxu0 0.0
        %1797 = vmatpush2.msra.mxu0 0.0
        %1798 = vmatprep.subr.mxu0 0.0
        %1799 = vmatpush2.msra.mxu0 0.0
        %1800 = vmatprep.subr.mxu0 0.0
        %1801 = vmatpush2.msra.mxu0 0.0
        %1802 = vmatprep.subr.mxu0 0.0
        %1803 = vmatpush2.msra.mxu0 0.0
        %1804 = vmatprep.subr.mxu0 0.0
        %1805 = vmatpush2.msra.mxu0 0.0
        %1806 = vmatprep.mubr.f32.mxu0 0.0
        %1807 = vmatmul.mubr.f32.gmra.mxu0 %v1704
        %v1808 = vpop.f32.mrf.mxu0
        %v1809 = vadd.f32 0.0, %v1808
        %v1810 = vpop.f32.mrf.mxu0
        %1811 = vmatprep.mubr.f32.mxu0 0.0
        %1812 = vmatmul.mubr.f32.gmra.mxu0 %v1709
        %v1813 = vpop.f32.mrf.mxu0
        %v1814 = vadd.f32 0.0, %v1813
        %v1815 = vpop.f32.mrf.mxu0
        %1816 = vmatprep.mubr.f32.mxu0 0.0
        %1817 = vmatmul.mubr.f32.gmra.mxu0 %v1714
        %v1818 = vpop.f32.mrf.mxu0
        %v1819 = vadd.f32 0.0, %v1818
        %v1820 = vpop.f32.mrf.mxu0
        %1821 = vmatprep.mubr.f32.mxu0 0.0
        %1822 = vmatmul.mubr.f32.gmra.mxu0 %v1719
        %v1823 = vpop.f32.mrf.mxu0
        %v1824 = vadd.f32 0.0, %v1823
        %v1825 = vpop.f32.mrf.mxu0
        %1826 = vmatprep.mubr.f32.mxu0 0.0
        %1827 = vmatmul.mubr.f32.gmra.mxu0 %v1724
        %v1828 = vpop.f32.mrf.mxu0
        %v1829 = vadd.f32 0.0, %v1828
        %v1830 = vpop.f32.mrf.mxu0
        %1831 = vmatprep.mubr.f32.mxu0 0.0
        %1832 = vmatmul.mubr.f32.gmra.mxu0 %v1729
        %v1833 = vpop.f32.mrf.mxu0
        %v1834 = vadd.f32 0.0, %v1833
        %v1835 = vpop.f32.mrf.mxu0
        %1836 = vmatprep.mubr.f32.mxu0 0.0
        %1837 = vmatmul.mubr.f32.gmra.mxu0 %v1734
        %v1838 = vpop.f32.mrf.mxu0
        %v1839 = vadd.f32 0.0, %v1838
        %v1840 = vpop.f32.mrf.mxu0
        %1841 = vmatprep.mubr.f32.mxu0 0.0
        %1842 = vmatmul.mubr.f32.gmra.mxu0 %v1739
        %v1843 = vpop.f32.mrf.mxu0
        %v1844 = vadd.f32 0.0, %v1843
        %v1845 = vpop.f32.mrf.mxu0
        %1846 = vdwg.mxu0
        %v1847 = vmul.f32 %v1809, %v240
        %v1848 = vmul.f32 %v1814, %v241
        %v1849 = vmul.f32 %v1819, %v242
        %v1850 = vmul.f32 %v1824, %v243
        %v1851 = vmul.f32 %v1829, %v244
        %v1852 = vmul.f32 %v1834, %v245
        %v1853 = vmul.f32 %v1839, %v246
        %v1854 = vmul.f32 %v1844, %v247
        %1855 = vst [vmem:[%s215] sm:$0xff] %v1847
        %1856 = vst [vmem:[%s215 + $0x8] sm:$0xff] %v1848
        %1857 = vst [vmem:[%s215 + $0x10] sm:$0xff] %v1849
        %1858 = vst [vmem:[%s215 + $0x18] sm:$0xff] %v1850
        %1859 = vst [vmem:[%s215 + $0x20] sm:$0xff] %v1851
        %1860 = vst [vmem:[%s215 + $0x28] sm:$0xff] %v1852
        %1861 = vst [vmem:[%s215 + $0x30] sm:$0xff] %v1853
        %1862 = vst [vmem:[%s215 + $0x38] sm:$0xff] %v1854
        %s1863 = sand.u32 %s95, 1
        %s1864 = scalar_lea.sflag [#allocation4], %s1863
        %s1865 = sand.u32 %s95, 1
        %s1866 = smul.addr %s1865, 64
        %s1867 = scalar_lea.vmem [#allocation8], %s1866
        // Predicated region
        $region45: #{tpu_custom_call.1} parent=31 // pred_check
          %p1868 = pneg %p105
        $region46: #{tpu_custom_call.1} parent=31 // pred_check_branch
          %1870 = sbr.rel (%p1868) target = $region48
        $region47: #{tpu_custom_call.1} parent=31 // pred_region
          %s1872 = ssub.s32 1024, 1024
          %1873 = vsyncadd %s1864, %s1872
          %s1874 = smul.addr %s19, 8
          %s1875 = smul.addr %s1874, 128
          %s1876 = scalar_lea.hbm %s3, %s1875
          %s1877 = sshll.u32 %s1867, 4
          %s1878 = int_to_ptr.vmem [resolvable:$true] %s1877
          %1883 = dma.vmem_to_hbm [thread:$0]  %s1878, 1024, %s1876, %s1864, 128, 128, 8
        $region48: #{tpu_custom_call.1} parent=31 // pred_fallthru
          _
      $region32: #{tpu_custom_call.1} parent=5 // pred_fallthru
        _
      %p1884 = scmp.le.s32.totalorder 2, %s14
      // Predicated region
      $region49: #{tpu_custom_call.1} parent=5 // pred_check
        %p1885 = pneg %p1884
      $region50: #{tpu_custom_call.1} parent=5 // pred_check_branch
        %1887 = sbr.rel (%p1885) target = $region52
      $region51: #{tpu_custom_call.1} parent=5 // pred_region
        %s1888 = ssub.s32 %s14, 2
        // Predicated region
        $region53: #{tpu_custom_call.1} parent=51 // pred_check
          %p1889 = pneg %p111
        $region54: #{tpu_custom_call.1} parent=51 // pred_check_branch
          %1891 = sbr.rel (%p1889) target = $region56
        $region55: #{tpu_custom_call.1} parent=51 // pred_region
          %s1892 = sand.u32 %s96, 1
          %s1893 = scalar_lea.sflag [#allocation4], %s1892
          %s1894 = sand.u32 %s96, 1
          %s1895 = smul.addr %s1894, 64
          %s1896 = scalar_lea.vmem [#allocation8], %s1895
          %1897 = dma.done %s1893, 1024
        $region56: #{tpu_custom_call.1} parent=51 // pred_fallthru
          _
      $region52: #{tpu_custom_call.1} parent=5 // pred_fallthru
        _
    $region6: #{tpu_custom_call.1} parent=1 // loop_footer
      %s18 = sadd.s32 1, %s14
    $region7: #{tpu_custom_call.1} parent=1 // loop_footer_branch
      %13 = sbr.rel target = $region3
    $region8: #{tpu_custom_call.1} parent=1 // loop_exit
      _
    %1898 = vsyncpa [#allocation3], 1
    %s1899 = scalar_lea.sflag [#allocation3], 1
    %1900 = vsyncpa %s1899, 1
    %1901 = vsyncpa [#allocation6], 1
    %1902 = vsyncpa [#allocation4], 1
    %s1903 = scalar_lea.sflag [#allocation4], 1
    %1904 = vsyncpa %s1903, 1

// kernel: tpu_custom_call.1
$region0: #{tpu_custom_call.1}
  #allocation0 [shape = 'u32[]', space=smem, size = 0x4, offset = 0x4, fixed_abs, tag = 'smem constant byte address 0x4 - core index']
  #allocation1 [shape = 'u32[144,128]{1,0:T(1,128)}', space=vmem, size = 0x12000, scoped, tag = 'internal scratch']
  %s0 = inlined_call_operand.hbm [shape: f32[64,64], index: 0, kind: input, shape index: {}]
  %s1 = inlined_call_operand.hbm [shape: f32[128,128], index: 1, kind: input, shape index: {}]
  %s2 = inlined_call_operand.hbm [shape: f32[2,64,128], index: 2, kind: input, shape index: {}]
  %s3 = inlined_call_operand.hbm [shape: f32[2,64,128], index: 3, kind: output, shape index: {}]
  %s4 = sld [smem:[#allocation0]]
  $region57: #{tpu_custom_call.1} parent=0
    _
  %s6 = ssub.s32 1, %s4
  %s7 = scalar_select 0, %s6, %s4
  $region1: #{tpu_custom_call.1} parent=0
    #allocation2 [shape = 'u8[32768]{0}', space=vmem, size = 0x8000, scoped, tag = 'input window, operand 0, single buffered']
    #allocation3 [shape = 's32[2]{0}', space=sflag, size = 0x8, scoped, tag = 'scoped memory for tpu_custom_call.1']
    #allocation4 [shape = 's32[2]{0}', space=sflag, size = 0x8, scoped, tag = 'scoped memory for tpu_custom_call.1']
    #allocation5 [shape = 'u8[65536]{0}', space=vmem, size = 0x10000, scoped, tag = 'input window, operand 1, single buffered']
    #allocation6 [shape = 's32[1]{0}', space=sflag, size = 0x4, scoped, tag = 'scoped memory for tpu_custom_call.1']
    #allocation7 [shape = 'u8[65536]{0}', space=vmem, size = 0x10000, scoped, tag = 'input window, operand 2']
    #allocation8 [shape = 'u8[65536]{0}', space=vmem, size = 0x10000, scoped, tag = 'output window, operand 0']
    %8 = vsyncpa [#allocation3], 0
    %9 = vsyncpa [#allocation6], 0
    %10 = vsyncpa [#allocation4], 0
    %s11 = scalar_lea.sflag [#allocation4], 1
    %12 = vsyncpa %s11, 0
    loop: start=0, step=1, limit=4
    $region2: #{tpu_custom_call.1} parent=1 // loop_pre_header
      _
    $region3: #{tpu_custom_call.1} parent=1 // loop_header
      %s14 = sphi 0, %s18
      %p15 = scmp.ge.s32.totalorder %s14, 4
      %s22 = sphi 0, %s22
      %s24 = sphi 0, %s22
      %s25 = sphi 0, %s24
      %s39 = sphi 0, %s25
      %s43 = sphi 0, %s43
      %s45 = sphi 0, %s43
      %s46 = sphi 0, %s45
      %s60 = sphi 0, %s46
      %s66 = sphi 0, %s68
      %s69 = sphi 0, %s66
      %s70 = sphi 0, %s69
      %s86 = sphi 0, %s70
      %s92 = sphi 0, %s94
      %s95 = sphi 0, %s92
      %s96 = sphi 0, %s95
      %s112 = sphi 0, %s96
    $region4: #{tpu_custom_call.1} parent=1 // loop_header_branch
      %17 = sbr.rel (%p15) target = $region8
    $region5: #{tpu_custom_call.1} parent=1 // loop_body
      %s19 = ssub.s32 %s14, 1
      %s20 = ssub.s32 %s14, 2
      %s21 = sadd.s32 %s14, 1
      %s23 = sadd.s32 %s22, 1
      %p26 = scmp.eq.s32.totalorder %s14, 1
      %p27 = scmp.ne.s32.totalorder %s22, %s24
      %p28 = scmp.eq.s32.totalorder %s14, 0
      %p29 = por %p27, %p28
      %p30 = scmp.ne.s32.totalorder %s22, %s24
      %p31 = scmp.eq.s32.totalorder %s19, 1
      %p32 = por %p30, %p31
      %p33 = scmp.ne.s32.totalorder %s24, %s25
      %p34 = scmp.eq.s32.totalorder %s19, 0
      %p35 = por %p33, %p34
      %p36 = scmp.ne.s32.totalorder %s24, %s25
      %p37 = scmp.eq.s32.totalorder %s20, 1
      %p38 = por %p36, %p37
      %p40 = scmp.ne.s32.totalorder %s25, %s39
      %p41 = scmp.eq.s32.totalorder %s20, 0
      %p42 = por %p40, %p41
      %s44 = sadd.s32 %s43, 1
      %p47 = scmp.eq.s32.totalorder %s14, 1
      %p48 = scmp.ne.s32.totalorder %s43, %s45
      %p49 = scmp.eq.s32.totalorder %s14, 0
      %p50 = por %p48, %p49
      %p51 = scmp.ne.s32.totalorder %s43, %s45
      %p52 = scmp.eq.s32.totalorder %s19, 1
      %p53 = por %p51, %p52
      %p54 = scmp.ne.s32.totalorder %s45, %s46
      %p55 = scmp.eq.s32.totalorder %s19, 0
      %p56 = por %p54, %p55
      %p57 = scmp.ne.s32.totalorder %s45, %s46
      %p58 = scmp.eq.s32.totalorder %s20, 1
      %p59 = por %p57, %p58
      %p61 = scmp.ne.s32.totalorder %s46, %s60
      %p62 = scmp.eq.s32.totalorder %s20, 0
      %p63 = por %p61, %p62
      %s64 = ssub.s32 %s14, %s21
      %p65 = scmp.eq.s32.totalorder %s64, 0
      %s67 = sadd.s32 %s66, 1
      %s68 = scalar_select %p65, %s66, %s67
      %p71 = pneg %p65
      %p72 = scmp.eq.s32.totalorder %s14, 1
      %p73 = por %p71, %p72
      %p74 = scmp.ne.s32.totalorder %s66, %s69
      %p75 = scmp.eq.s32.totalorder %s14, 0
      %p76 = por %p74, %p75
      %p77 = scmp.ne.s32.totalorder %s66, %s69
      %p78 = scmp.eq.s32.totalorder %s19, 1
      %p79 = por %p77, %p78
      %p80 = scmp.ne.s32.totalorder %s69, %s70
      %p81 = scmp.eq.s32.totalorder %s19, 0
      %p82 = por %p80, %p81
      %p83 = scmp.ne.s32.totalorder %s69, %s70
      %p84 = scmp.eq.s32.totalorder %s20, 1
      %p85 = por %p83, %p84
      %p87 = scmp.ne.s32.totalorder %s70, %s86
      %p88 = scmp.eq.s32.totalorder %s20, 0
      %p89 = por %p87, %p88
      %s90 = ssub.s32 %s14, %s21
      %p91 = scmp.eq.s32.totalorder %s90, 0
      %s93 = sadd.s32 %s92, 1
      %s94 = scalar_select %p91, %s92, %s93
      %p97 = pneg %p91
      %p98 = scmp.eq.s32.totalorder %s14, 1
      %p99 = por %p97, %p98
      %p100 = scmp.ne.s32.totalorder %s92, %s95
      %p101 = scmp.eq.s32.totalorder %s14, 0
      %p102 = por %p100, %p101
      %p103 = scmp.ne.s32.totalorder %s92, %s95
      %p104 = scmp.eq.s32.totalorder %s19, 1
      %p105 = por %p103, %p104
      %p106 = scmp.ne.s32.totalorder %s95, %s96
      %p107 = scmp.eq.s32.totalorder %s19, 0
      %p108 = por %p106, %p107
      %p109 = scmp.ne.s32.totalorder %s95, %s96
      %p110 = scmp.eq.s32.totalorder %s20, 1
      %p111 = por %p109, %p110
      %p113 = scmp.ne.s32.totalorder %s96, %s112
      %p114 = scmp.eq.s32.totalorder %s20, 0
      %p115 = por %p113, %p114
      %p116 = scmp.le.s32.totalorder 1, %s14
      %p117 = scmp.lt.s32.totalorder %s14, 3
      %p118 = pnand %p116, %p117
      %p119 = pneg %p118
      // Predicated region
      $region9: #{tpu_custom_call.1} parent=5 // pred_check
        _
      $region10: #{tpu_custom_call.1} parent=5 // pred_check_branch
        %121 = sbr.rel (%p118) target = $region12
      $region11: #{tpu_custom_call.1} parent=5 // pred_region
        %s122 = ssub.s32 %s14, 1
        // Predicated region
        $region13: #{tpu_custom_call.1} parent=11 // pred_check
          %p123 = pneg %p35
        $region14: #{tpu_custom_call.1} parent=11 // pred_check_branch
          %125 = sbr.rel (%p123) target = $region16
        $region15: #{tpu_custom_call.1} parent=11 // pred_region
          %s127 = ssub.s32 1024, 1024
          %128 = vsyncadd [#allocation3], %s127
          %s129 = sshll.u32 [#allocation2], 4
          %s130 = int_to_ptr.vmem [resolvable:$true] %s129
          %135 = dma.hbm_to_vmem [thread:$0]  %s0, 1024, %s130, [#allocation3], 128, 128, 8
        $region16: #{tpu_custom_call.1} parent=11 // pred_fallthru
          _
        // Predicated region
        $region17: #{tpu_custom_call.1} parent=11 // pred_check
          %p136 = pneg %p56
        $region18: #{tpu_custom_call.1} parent=11 // pred_check_branch
          %138 = sbr.rel (%p136) target = $region20
        $region19: #{tpu_custom_call.1} parent=11 // pred_region
          %s140 = ssub.s32 2048, 2048
          %141 = vsyncadd [#allocation6], %s140
          %s142 = sshll.u32 [#allocation5], 4
          %s143 = int_to_ptr.vmem [resolvable:$true] %s142
          %148 = dma.hbm_to_vmem [thread:$0]  %s1, 2048, %s143, [#allocation6], 128, 128, 8
        $region20: #{tpu_custom_call.1} parent=11 // pred_fallthru
          _
      $region12: #{tpu_custom_call.1} parent=5 // pred_fallthru
        _
      %p149 = scmp.lt.s32.totalorder %s14, 2
      // Predicated region
      $region21: #{tpu_custom_call.1} parent=5 // pred_check
        %p150 = pneg %p149
      $region22: #{tpu_custom_call.1} parent=5 // pred_check_branch
        %152 = sbr.rel (%p150) target = $region24
      $region23: #{tpu_custom_call.1} parent=5 // pred_region
        // Predicated region
        $region25: #{tpu_custom_call.1} parent=23 // pred_check
          %p153 = pneg %p76
        $region26: #{tpu_custom_call.1} parent=23 // pred_check_branch
          %155 = sbr.rel (%p153) target = $region28
        $region27: #{tpu_custom_call.1} parent=23 // pred_region
          %s156 = sand.u32 %s14, 1
          %s157 = scalar_lea.sflag [#allocation3], %s156
          %s158 = sand.u32 %s66, 1
          %s159 = smul.addr %s158, 64
          %s160 = scalar_lea.vmem [#allocation7], %s159
          %s162 = ssub.s32 1024, 1024
          %163 = vsyncadd %s157, %s162
          %s164 = smul.addr %s14, 8
          %s165 = smul.addr %s164, 128
          %s166 = scalar_lea.hbm %s2, %s165
          %s167 = sshll.u32 %s160, 4
          %s168 = int_to_ptr.vmem [resolvable:$true] %s167
          %173 = dma.hbm_to_vmem [thread:$0]  %s166, 1024, %s168, %s157, 128, 128, 8
        $region28: #{tpu_custom_call.1} parent=23 // pred_fallthru
          _
      $region24: #{tpu_custom_call.1} parent=5 // pred_fallthru
        _
      %p174 = scmp.le.s32.totalorder 1, %s14
      %p175 = scmp.lt.s32.totalorder %s14, 3
      %p176 = pnand %p174, %p175
      %p177 = pneg %p176
      // Predicated region
      $region29: #{tpu_custom_call.1} parent=5 // pred_check
        _
      $region30: #{tpu_custom_call.1} parent=5 // pred_check_branch
        %179 = sbr.rel (%p176) target = $region32
      $region31: #{tpu_custom_call.1} parent=5 // pred_region
        %s180 = ssub.s32 %s14, 1
        // Predicated region
        $region33: #{tpu_custom_call.1} parent=31 // pred_check
          %p181 = pneg %p35
        $region34: #{tpu_custom_call.1} parent=31 // pred_check_branch
          %183 = sbr.rel (%p181) target = $region36
        $region35: #{tpu_custom_call.1} parent=31 // pred_region
          %184 = dma.done [#allocation3], 1024
        $region36: #{tpu_custom_call.1} parent=31 // pred_fallthru
          _
        // Predicated region
        $region37: #{tpu_custom_call.1} parent=31 // pred_check
          %p185 = pneg %p56
        $region38: #{tpu_custom_call.1} parent=31 // pred_check_branch
          %187 = sbr.rel (%p185) target = $region40
        $region39: #{tpu_custom_call.1} parent=31 // pred_region
          %188 = dma.done [#allocation6], 2048
        $region40: #{tpu_custom_call.1} parent=31 // pred_fallthru
          _
        %s189 = sand.u32 %s19, 1
        %s190 = scalar_lea.sflag [#allocation3], %s189
        %s191 = sand.u32 %s69, 1
        %s192 = smul.addr %s191, 64
        %s193 = scalar_lea.vmem [#allocation7], %s192
        // Predicated region
        $region41: #{tpu_custom_call.1} parent=31 // pred_check
          %p194 = pneg %p82
        $region42: #{tpu_custom_call.1} parent=31 // pred_check_branch
          %196 = sbr.rel (%p194) target = $region44
        $region43: #{tpu_custom_call.1} parent=31 // pred_region
          %197 = dma.done %s190, 1024
        $region44: #{tpu_custom_call.1} parent=31 // pred_fallthru
          _
        %p198 = pneg %p35
        %p199 = pneg %p32
        %p200 = pneg %p56
        %p201 = pneg %p53
        %s202 = sand.u32 %s19, 1
        %s203 = scalar_lea.sflag [#allocation3], %s202
        %s204 = sand.u32 %s69, 1
        %s205 = smul.addr %s204, 64
        %s206 = scalar_lea.vmem [#allocation7], %s205
        %p207 = pneg %p82
        %p208 = pneg %p79
        %p209 = pneg %p108
        %p210 = pneg %p105
        %s211 = sand.u32 %s95, 1
        %s212 = scalar_lea.sflag [#allocation4], %s211
        %s213 = sand.u32 %s95, 1
        %s214 = smul.addr %s213, 64
        %s215 = scalar_lea.vmem [#allocation8], %s214
        %v216 = vld [vmem:[#allocation2] sm:$0xff]
        %v217 = vld [vmem:[#allocation2 + $0x8] sm:$0xff]
        %v218 = vld [vmem:[#allocation2 + $0x10] sm:$0xff]
        %v219 = vld [vmem:[#allocation2 + $0x18] sm:$0xff]
        %v220 = vld [vmem:[#allocation2 + $0x20] sm:$0xff]
        %v221 = vld [vmem:[#allocation2 + $0x28] sm:$0xff]
        %v222 = vld [vmem:[#allocation2 + $0x30] sm:$0xff]
        %v223 = vld [vmem:[#allocation2 + $0x38] sm:$0xff]
        %v224 = vld [vmem:[#allocation5] sm:$0xff]
        %v225 = vld [vmem:[#allocation5 + $0x8] sm:$0xff]
        %v226 = vld [vmem:[#allocation5 + $0x10] sm:$0xff]
        %v227 = vld [vmem:[#allocation5 + $0x18] sm:$0xff]
        %v228 = vld [vmem:[#allocation5 + $0x20] sm:$0xff]
        %v229 = vld [vmem:[#allocation5 + $0x28] sm:$0xff]
        %v230 = vld [vmem:[#allocation5 + $0x30] sm:$0xff]
        %v231 = vld [vmem:[#allocation5 + $0x38] sm:$0xff]
        %v232 = vld [vmem:[#allocation5 + $0x40] sm:$0xff]
        %v233 = vld [vmem:[#allocation5 + $0x48] sm:$0xff]
        %v234 = vld [vmem:[#allocation5 + $0x50] sm:$0xff]
        %v235 = vld [vmem:[#allocation5 + $0x58] sm:$0xff]
        %v236 = vld [vmem:[#allocation5 + $0x60] sm:$0xff]
        %v237 = vld [vmem:[#allocation5 + $0x68] sm:$0xff]
        %v238 = vld [vmem:[#allocation5 + $0x70] sm:$0xff]
        %v239 = vld [vmem:[#allocation5 + $0x78] sm:$0xff]
        %v240 = vld [vmem:[%s193] sm:$0xff]
        %v241 = vld [vmem:[%s193 + $0x8] sm:$0xff]
        %v242 = vld [vmem:[%s193 + $0x10] sm:$0xff]
        %v243 = vld [vmem:[%s193 + $0x18] sm:$0xff]
        %v244 = vld [vmem:[%s193 + $0x20] sm:$0xff]
        %v245 = vld [vmem:[%s193 + $0x28] sm:$0xff]
        %v246 = vld [vmem:[%s193 + $0x30] sm:$0xff]
        %v247 = vld [vmem:[%s193 + $0x38] sm:$0xff]
        %v248 = vsub.f32 1.0, %v240
        %v249 = vsub.f32 1.0, %v241
        %v250 = vsub.f32 1.0, %v242
        %v251 = vsub.f32 1.0, %v243
        %v252 = vsub.f32 1.0, %v244
        %v253 = vsub.f32 1.0, %v245
        %v254 = vsub.f32 1.0, %v246
        %v255 = vsub.f32 1.0, %v247
        %vm256 = vcmask 523264
        %v258 = vsel %vm256, %v216, 0
        %v261 = vsel %vm256, %v217, 0
        %v264 = vsel %vm256, %v218, 0
        %v267 = vsel %vm256, %v219, 0
        %v270 = vsel %vm256, %v220, 0
        %v273 = vsel %vm256, %v221, 0
        %v276 = vsel %vm256, %v222, 0
        %v279 = vsel %vm256, %v223, 0
        %281 = vmatprep.subr.mxu0 0.0
        %282 = vmatpush1.msra.mxu0 0.0
        %283 = vmatprep.subr.mxu0 0.0
        %284 = vmatpush1.msra.mxu0 0.0
        %285 = vmatprep.subr.mxu0 0.0
        %286 = vmatpush1.msra.mxu0 0.0
        %287 = vmatprep.subr.mxu0 0.0
        %288 = vmatpush1.msra.mxu0 0.0
        %289 = vmatprep.subr.mxu0 0.0
        %290 = vmatpush1.msra.mxu0 0.0
        %291 = vmatprep.subr.mxu0 0.0
        %292 = vmatpush1.msra.mxu0 0.0
        %293 = vmatprep.subr.mxu0 0.0
        %294 = vmatpush1.msra.mxu0 0.0
        %295 = vmatprep.subr.mxu0 0.0
        %296 = vmatpush1.msra.mxu0 0.0
        %297 = vmatprep.subr.mxu0 0.0
        %298 = vmatpush1.msra.mxu0 %v255
        %299 = vmatprep.subr.mxu0 0.0
        %300 = vmatpush1.msra.mxu0 %v254
        %301 = vmatprep.subr.mxu0 0.0
        %302 = vmatpush1.msra.mxu0 %v253
        %303 = vmatprep.subr.mxu0 0.0
        %304 = vmatpush1.msra.mxu0 %v252
        %305 = vmatprep.subr.mxu0 0.0
        %306 = vmatpush1.msra.mxu0 %v251
        %307 = vmatprep.subr.mxu0 0.0
        %308 = vmatpush1.msra.mxu0 %v250
        %309 = vmatprep.subr.mxu0 0.0
        %310 = vmatpush1.msra.mxu0 %v249
        %311 = vmatprep.subr.mxu0 0.0
        %312 = vmatpush1.msra.mxu0 %v248
        %313 = vmatprep.subr.mxu0 0.0
        %314 = vmatpush2.msra.mxu0 0.0
        %315 = vmatprep.subr.mxu0 0.0
        %316 = vmatpush2.msra.mxu0 0.0
        %317 = vmatprep.subr.mxu0 0.0
        %318 = vmatpush2.msra.mxu0 0.0
        %319 = vmatprep.subr.mxu0 0.0
        %320 = vmatpush2.msra.mxu0 0.0
        %321 = vmatprep.subr.mxu0 0.0
        %322 = vmatpush2.msra.mxu0 0.0
        %323 = vmatprep.subr.mxu0 0.0
        %324 = vmatpush2.msra.mxu0 0.0
        %325 = vmatprep.subr.mxu0 0.0
        %326 = vmatpush2.msra.mxu0 0.0
        %327 = vmatprep.subr.mxu0 0.0
        %328 = vmatpush2.msra.mxu0 0.0
        %329 = vmatprep.subr.mxu0 0.0
        %330 = vmatpush2.msra.mxu0 0.0
        %331 = vmatprep.subr.mxu0 0.0
        %332 = vmatpush2.msra.mxu0 0.0
        %333 = vmatprep.subr.mxu0 0.0
        %334 = vmatpush2.msra.mxu0 0.0
        %335 = vmatprep.subr.mxu0 0.0
        %336 = vmatpush2.msra.mxu0 0.0
        %337 = vmatprep.subr.mxu0 0.0
        %338 = vmatpush2.msra.mxu0 0.0
        %339 = vmatprep.subr.mxu0 0.0
        %340 = vmatpush2.msra.mxu0 0.0
        %341 = vmatprep.subr.mxu0 0.0
        %342 = vmatpush2.msra.mxu0 0.0
        %343 = vmatprep.subr.mxu0 0.0
        %344 = vmatpush2.msra.mxu0 0.0
        %345 = vmatprep.mubr.f32.mxu0 0.0
        %346 = vmatmul.mubr.f32.gmra.mxu0 %v258
        %v347 = vpop.f32.mrf.mxu0
        %v348 = vadd.f32 0.0, %v347
        %v349 = vpop.f32.mrf.mxu0
        %350 = vmatprep.mubr.f32.mxu0 0.0
        %351 = vmatmul.mubr.f32.gmra.mxu0 %v261
        %v352 = vpop.f32.mrf.mxu0
        %v353 = vadd.f32 0.0, %v352
        %v354 = vpop.f32.mrf.mxu0
        %355 = vmatprep.mubr.f32.mxu0 0.0
        %356 = vmatmul.mubr.f32.gmra.mxu0 %v264
        %v357 = vpop.f32.mrf.mxu0
        %v358 = vadd.f32 0.0, %v357
        %v359 = vpop.f32.mrf.mxu0
        %360 = vmatprep.mubr.f32.mxu0 0.0
        %361 = vmatmul.mubr.f32.gmra.mxu0 %v267
        %v362 = vpop.f32.mrf.mxu0
        %v363 = vadd.f32 0.0, %v362
        %v364 = vpop.f32.mrf.mxu0
        %365 = vmatprep.mubr.f32.mxu0 0.0
        %366 = vmatmul.mubr.f32.gmra.mxu0 %v270
        %v367 = vpop.f32.mrf.mxu0
        %v368 = vadd.f32 0.0, %v367
        %v369 = vpop.f32.mrf.mxu0
        %370 = vmatprep.mubr.f32.mxu0 0.0
        %371 = vmatmul.mubr.f32.gmra.mxu0 %v273
        %v372 = vpop.f32.mrf.mxu0
        %v373 = vadd.f32 0.0, %v372
        %v374 = vpop.f32.mrf.mxu0
        %375 = vmatprep.mubr.f32.mxu0 0.0
        %376 = vmatmul.mubr.f32.gmra.mxu0 %v276
        %v377 = vpop.f32.mrf.mxu0
        %v378 = vadd.f32 0.0, %v377
        %v379 = vpop.f32.mrf.mxu0
        %380 = vmatprep.mubr.f32.mxu0 0.0
        %381 = vmatmul.mubr.f32.gmra.mxu0 %v279
        %v382 = vpop.f32.mrf.mxu0
        %v383 = vadd.f32 0.0, %v382
        %v384 = vpop.f32.mrf.mxu0
        %385 = vdwg.mxu0
        %386 = vmatprep.subr.mxu0 0.0
        %387 = vmatpush1.msra.mxu0 %v239
        %388 = vmatprep.subr.mxu0 0.0
        %389 = vmatpush1.msra.mxu0 %v238
        %390 = vmatprep.subr.mxu0 0.0
        %391 = vmatpush1.msra.mxu0 %v237
        %392 = vmatprep.subr.mxu0 0.0
        %393 = vmatpush1.msra.mxu0 %v236
        %394 = vmatprep.subr.mxu0 0.0
        %395 = vmatpush1.msra.mxu0 %v235
        %396 = vmatprep.subr.mxu0 0.0
        %397 = vmatpush1.msra.mxu0 %v234
        %398 = vmatprep.subr.mxu0 0.0
        %399 = vmatpush1.msra.mxu0 %v233
        %400 = vmatprep.subr.mxu0 0.0
        %401 = vmatpush1.msra.mxu0 %v232
        %402 = vmatprep.subr.mxu0 0.0
        %403 = vmatpush1.msra.mxu0 %v231
        %404 = vmatprep.subr.mxu0 0.0
        %405 = vmatpush1.msra.mxu0 %v230
        %406 = vmatprep.subr.mxu0 0.0
        %407 = vmatpush1.msra.mxu0 %v229
        %408 = vmatprep.subr.mxu0 0.0
        %409 = vmatpush1.msra.mxu0 %v228
        %410 = vmatprep.subr.mxu0 0.0
        %411 = vmatpush1.msra.mxu0 %v227
        %412 = vmatprep.subr.mxu0 0.0
        %413 = vmatpush1.msra.mxu0 %v226
        %414 = vmatprep.subr.mxu0 0.0
        %415 = vmatpush1.msra.mxu0 %v225
        %416 = vmatprep.subr.mxu0 0.0
        %417 = vmatpush1.msra.mxu0 %v224
        %418 = vmatprep.subr.mxu0 0.0
        %419 = vmatpush2.msra.mxu0 0.0
        %420 = vmatprep.subr.mxu0 0.0
        %421 = vmatpush2.msra.mxu0 0.0
        %422 = vmatprep.subr.mxu0 0.0
        %423 = vmatpush2.msra.mxu0 0.0
        %424 = vmatprep.subr.mxu0 0.0
        %425 = vmatpush2.msra.mxu0 0.0
        %426 = vmatprep.subr.mxu0 0.0
        %427 = vmatpush2.msra.mxu0 0.0
        %428 = vmatprep.subr.mxu0 0.0
        %429 = vmatpush2.msra.mxu0 0.0
        %430 = vmatprep.subr.mxu0 0.0
        %431 = vmatpush2.msra.mxu0 0.0
        %432 = vmatprep.subr.mxu0 0.0
        %433 = vmatpush2.msra.mxu0 0.0
        %434 = vmatprep.subr.mxu0 0.0
        %435 = vmatpush2.msra.mxu0 0.0
        %436 = vmatprep.subr.mxu0 0.0
        %437 = vmatpush2.msra.mxu0 0.0
        %438 = vmatprep.subr.mxu0 0.0
        %439 = vmatpush2.msra.mxu0 0.0
        %440 = vmatprep.subr.mxu0 0.0
        %441 = vmatpush2.msra.mxu0 0.0
        %442 = vmatprep.subr.mxu0 0.0
        %443 = vmatpush2.msra.mxu0 0.0
        %444 = vmatprep.subr.mxu0 0.0
        %445 = vmatpush2.msra.mxu0 0.0
        %446 = vmatprep.subr.mxu0 0.0
        %447 = vmatpush2.msra.mxu0 0.0
        %448 = vmatprep.subr.mxu0 0.0
        %449 = vmatpush2.msra.mxu0 0.0
        %450 = vmatprep.mubr.f32.mxu0 0.0
        %451 = vmatmul.mubr.f32.gmra.mxu0 %v348
        %v452 = vpop.f32.mrf.mxu0
        %v453 = vadd.f32 0.0, %v452
        %v454 = vpop.f32.mrf.mxu0
        %455 = vmatprep.mubr.f32.mxu0 0.0
        %456 = vmatmul.mubr.f32.gmra.mxu0 %v353
        %v457 = vpop.f32.mrf.mxu0
        %v458 = vadd.f32 0.0, %v457
        %v459 = vpop.f32.mrf.mxu0
        %460 = vmatprep.mubr.f32.mxu0 0.0
        %461 = vmatmul.mubr.f32.gmra.mxu0 %v358
        %v462 = vpop.f32.mrf.mxu0
        %v463 = vadd.f32 0.0, %v462
        %v464 = vpop.f32.mrf.mxu0
        %465 = vmatprep.mubr.f32.mxu0 0.0
        %466 = vmatmul.mubr.f32.gmra.mxu0 %v363
        %v467 = vpop.f32.mrf.mxu0
        %v468 = vadd.f32 0.0, %v467
        %v469 = vpop.f32.mrf.mxu0
        %470 = vmatprep.mubr.f32.mxu0 0.0
        %471 = vmatmul.mubr.f32.gmra.mxu0 %v368
        %v472 = vpop.f32.mrf.mxu0
        %v473 = vadd.f32 0.0, %v472
        %v474 = vpop.f32.mrf.mxu0
        %475 = vmatprep.mubr.f32.mxu0 0.0
        %476 = vmatmul.mubr.f32.gmra.mxu0 %v373
        %v477 = vpop.f32.mrf.mxu0
        %v478 = vadd.f32 0.0, %v477
        %v479 = vpop.f32.mrf.mxu0
        %480 = vmatprep.mubr.f32.mxu0 0.0
        %481 = vmatmul.mubr.f32.gmra.mxu0 %v378
        %v482 = vpop.f32.mrf.mxu0
        %v483 = vadd.f32 0.0, %v482
        %v484 = vpop.f32.mrf.mxu0
        %485 = vmatprep.mubr.f32.mxu0 0.0
        %486 = vmatmul.mubr.f32.gmra.mxu0 %v383
        %v487 = vpop.f32.mrf.mxu0
        %v488 = vadd.f32 0.0, %v487
        %v489 = vpop.f32.mrf.mxu0
        %490 = vdwg.mxu0
        %v491 = vmul.f32 %v453, %v240
        %v492 = vmul.f32 %v458, %v241
        %v493 = vmul.f32 %v463, %v242
        %v494 = vmul.f32 %v468, %v243
        %v495 = vmul.f32 %v473, %v244
        %v496 = vmul.f32 %v478, %v245
        %v497 = vmul.f32 %v483, %v246
        %v498 = vmul.f32 %v488, %v247
        %v499 = vadd.f32 %v491, %v248
        %v500 = vadd.f32 %v492, %v249
        %v501 = vadd.f32 %v493, %v250
        %v502 = vadd.f32 %v494, %v251
        %v503 = vadd.f32 %v495, %v252
        %v504 = vadd.f32 %v496, %v253
        %v505 = vadd.f32 %v497, %v254
        %v506 = vadd.f32 %v498, %v255
        %507 = vmatprep.subr.mxu0 0.0
        %508 = vmatpush1.msra.mxu0 0.0
        %509 = vmatprep.subr.mxu0 0.0
        %510 = vmatpush1.msra.mxu0 0.0
        %511 = vmatprep.subr.mxu0 0.0
        %512 = vmatpush1.msra.mxu0 0.0
        %513 = vmatprep.subr.mxu0 0.0
        %514 = vmatpush1.msra.mxu0 0.0
        %515 = vmatprep.subr.mxu0 0.0
        %516 = vmatpush1.msra.mxu0 0.0
        %517 = vmatprep.subr.mxu0 0.0
        %518 = vmatpush1.msra.mxu0 0.0
        %519 = vmatprep.subr.mxu0 0.0
        %520 = vmatpush1.msra.mxu0 0.0
        %521 = vmatprep.subr.mxu0 0.0
        %522 = vmatpush1.msra.mxu0 0.0
        %523 = vmatprep.subr.mxu0 0.0
        %524 = vmatpush1.msra.mxu0 %v506
        %525 = vmatprep.subr.mxu0 0.0
        %526 = vmatpush1.msra.mxu0 %v505
        %527 = vmatprep.subr.mxu0 0.0
        %528 = vmatpush1.msra.mxu0 %v504
        %529 = vmatprep.subr.mxu0 0.0
        %530 = vmatpush1.msra.mxu0 %v503
        %531 = vmatprep.subr.mxu0 0.0
        %532 = vmatpush1.msra.mxu0 %v502
        %533 = vmatprep.subr.mxu0 0.0
        %534 = vmatpush1.msra.mxu0 %v501
        %535 = vmatprep.subr.mxu0 0.0
        %536 = vmatpush1.msra.mxu0 %v500
        %537 = vmatprep.subr.mxu0 0.0
        %538 = vmatpush1.msra.mxu0 %v499
        %539 = vmatprep.subr.mxu0 0.0
        %540 = vmatpush2.msra.mxu0 0.0
        %541 = vmatprep.subr.mxu0 0.0
        %542 = vmatpush2.msra.mxu0 0.0
        %543 = vmatprep.subr.mxu0 0.0
        %544 = vmatpush2.msra.mxu0 0.0
        %545 = vmatprep.subr.mxu0 0.0
        %546 = vmatpush2.msra.mxu0 0.0
        %547 = vmatprep.subr.mxu0 0.0
        %548 = vmatpush2.msra.mxu0 0.0
        %549 = vmatprep.subr.mxu0 0.0
        %550 = vmatpush2.msra.mxu0 0.0
        %551 = vmatprep.subr.mxu0 0.0
        %552 = vmatpush2.msra.mxu0 0.0
        %553 = vmatprep.subr.mxu0 0.0
        %554 = vmatpush2.msra.mxu0 0.0
        %555 = vmatprep.subr.mxu0 0.0
        %556 = vmatpush2.msra.mxu0 0.0
        %557 = vmatprep.subr.mxu0 0.0
        %558 = vmatpush2.msra.mxu0 0.0
        %559 = vmatprep.subr.mxu0 0.0
        %560 = vmatpush2.msra.mxu0 0.0
        %561 = vmatprep.subr.mxu0 0.0
        %562 = vmatpush2.msra.mxu0 0.0
        %563 = vmatprep.subr.mxu0 0.0
        %564 = vmatpush2.msra.mxu0 0.0
        %565 = vmatprep.subr.mxu0 0.0
        %566 = vmatpush2.msra.mxu0 0.0
        %567 = vmatprep.subr.mxu0 0.0
        %568 = vmatpush2.msra.mxu0 0.0
        %569 = vmatprep.subr.mxu0 0.0
        %570 = vmatpush2.msra.mxu0 0.0
        %571 = vmatprep.mubr.f32.mxu0 0.0
        %572 = vmatmul.mubr.f32.gmra.mxu0 %v258
        %v573 = vpop.f32.mrf.mxu0
        %v574 = vadd.f32 0.0, %v573
        %v575 = vpop.f32.mrf.mxu0
        %576 = vmatprep.mubr.f32.mxu0 0.0
        %577 = vmatmul.mubr.f32.gmra.mxu0 %v261
        %v578 = vpop.f32.mrf.mxu0
        %v579 = vadd.f32 0.0, %v578
        %v580 = vpop.f32.mrf.mxu0
        %581 = vmatprep.mubr.f32.mxu0 0.0
        %582 = vmatmul.mubr.f32.gmra.mxu0 %v264
        %v583 = vpop.f32.mrf.mxu0
        %v584 = vadd.f32 0.0, %v583
        %v585 = vpop.f32.mrf.mxu0
        %586 = vmatprep.mubr.f32.mxu0 0.0
        %587 = vmatmul.mubr.f32.gmra.mxu0 %v267
        %v588 = vpop.f32.mrf.mxu0
        %v589 = vadd.f32 0.0, %v588
        %v590 = vpop.f32.mrf.mxu0
        %591 = vmatprep.mubr.f32.mxu0 0.0
        %592 = vmatmul.mubr.f32.gmra.mxu0 %v270
        %v593 = vpop.f32.mrf.mxu0
        %v594 = vadd.f32 0.0, %v593
        %v595 = vpop.f32.mrf.mxu0
        %596 = vmatprep.mubr.f32.mxu0 0.0
        %597 = vmatmul.mubr.f32.gmra.mxu0 %v273
        %v598 = vpop.f32.mrf.mxu0
        %v599 = vadd.f32 0.0, %v598
        %v600 = vpop.f32.mrf.mxu0
        %601 = vmatprep.mubr.f32.mxu0 0.0
        %602 = vmatmul.mubr.f32.gmra.mxu0 %v276
        %v603 = vpop.f32.mrf.mxu0
        %v604 = vadd.f32 0.0, %v603
        %v605 = vpop.f32.mrf.mxu0
        %606 = vmatprep.mubr.f32.mxu0 0.0
        %607 = vmatmul.mubr.f32.gmra.mxu0 %v279
        %v608 = vpop.f32.mrf.mxu0
        %v609 = vadd.f32 0.0, %v608
        %v610 = vpop.f32.mrf.mxu0
        %611 = vdwg.mxu0
        %612 = vmatprep.subr.mxu0 0.0
        %613 = vmatpush1.msra.mxu0 %v239
        %614 = vmatprep.subr.mxu0 0.0
        %615 = vmatpush1.msra.mxu0 %v238
        %616 = vmatprep.subr.mxu0 0.0
        %617 = vmatpush1.msra.mxu0 %v237
        %618 = vmatprep.subr.mxu0 0.0
        %619 = vmatpush1.msra.mxu0 %v236
        %620 = vmatprep.subr.mxu0 0.0
        %621 = vmatpush1.msra.mxu0 %v235
        %622 = vmatprep.subr.mxu0 0.0
        %623 = vmatpush1.msra.mxu0 %v234
        %624 = vmatprep.subr.mxu0 0.0
        %625 = vmatpush1.msra.mxu0 %v233
        %626 = vmatprep.subr.mxu0 0.0
        %627 = vmatpush1.msra.mxu0 %v232
        %628 = vmatprep.subr.mxu0 0.0
        %629 = vmatpush1.msra.mxu0 %v231
        %630 = vmatprep.subr.mxu0 0.0
        %631 = vmatpush1.msra.mxu0 %v230
        %632 = vmatprep.subr.mxu0 0.0
        %633 = vmatpush1.msra.mxu0 %v229
        %634 = vmatprep.subr.mxu0 0.0
        %635 = vmatpush1.msra.mxu0 %v228
        %636 = vmatprep.subr.mxu0 0.0
        %637 = vmatpush1.msra.mxu0 %v227
        %638 = vmatprep.subr.mxu0 0.0
        %639 = vmatpush1.msra.mxu0 %v226
        %640 = vmatprep.subr.mxu0 0.0
        %641 = vmatpush1.msra.mxu0 %v225
        %642 = vmatprep.subr.mxu0 0.0
        %643 = vmatpush1.msra.mxu0 %v224
        %644 = vmatprep.subr.mxu0 0.0
        %645 = vmatpush2.msra.mxu0 0.0
        %646 = vmatprep.subr.mxu0 0.0
        %647 = vmatpush2.msra.mxu0 0.0
        %648 = vmatprep.subr.mxu0 0.0
        %649 = vmatpush2.msra.mxu0 0.0
        %650 = vmatprep.subr.mxu0 0.0
        %651 = vmatpush2.msra.mxu0 0.0
        %652 = vmatprep.subr.mxu0 0.0
        %653 = vmatpush2.msra.mxu0 0.0
        %654 = vmatprep.subr.mxu0 0.0
        %655 = vmatpush2.msra.mxu0 0.0
        %656 = vmatprep.subr.mxu0 0.0
        %657 = vmatpush2.msra.mxu0 0.0
        %658 = vmatprep.subr.mxu0 0.0
        %659 = vmatpush2.msra.mxu0 0.0
        %660 = vmatprep.subr.mxu0 0.0
        %661 = vmatpush2.msra.mxu0 0.0
        %662 = vmatprep.subr.mxu0 0.0
        %663 = vmatpush2.msra.mxu0 0.0
        %664 = vmatprep.subr.mxu0 0.0
        %665 = vmatpush2.msra.mxu0 0.0
        %666 = vmatprep.subr.mxu0 0.0
        %667 = vmatpush2.msra.mxu0 0.0
        %668 = vmatprep.subr.mxu0 0.0
        %669 = vmatpush2.msra.mxu0 0.0
        %670 = vmatprep.subr.mxu0 0.0
        %671 = vmatpush2.msra.mxu0 0.0
        %672 = vmatprep.subr.mxu0 0.0
        %673 = vmatpush2.msra.mxu0 0.0
        %674 = vmatprep.subr.mxu0 0.0
        %675 = vmatpush2.msra.mxu0 0.0
        %676 = vmatprep.mubr.f32.mxu0 0.0
        %677 = vmatmul.mubr.f32.gmra.mxu0 %v574
        %v678 = vpop.f32.mrf.mxu0
        %v679 = vadd.f32 0.0, %v678
        %v680 = vpop.f32.mrf.mxu0
        %681 = vmatprep.mubr.f32.mxu0 0.0
        %682 = vmatmul.mubr.f32.gmra.mxu0 %v579
        %v683 = vpop.f32.mrf.mxu0
        %v684 = vadd.f32 0.0, %v683
        %v685 = vpop.f32.mrf.mxu0
        %686 = vmatprep.mubr.f32.mxu0 0.0
        %687 = vmatmul.mubr.f32.gmra.mxu0 %v584
        %v688 = vpop.f32.mrf.mxu0
        %v689 = vadd.f32 0.0, %v688
        %v690 = vpop.f32.mrf.mxu0
        %691 = vmatprep.mubr.f32.mxu0 0.0
        %692 = vmatmul.mubr.f32.gmra.mxu0 %v589
        %v693 = vpop.f32.mrf.mxu0
        %v694 = vadd.f32 0.0, %v693
        %v695 = vpop.f32.mrf.mxu0
        %696 = vmatprep.mubr.f32.mxu0 0.0
        %697 = vmatmul.mubr.f32.gmra.mxu0 %v594
        %v698 = vpop.f32.mrf.mxu0
        %v699 = vadd.f32 0.0, %v698
        %v700 = vpop.f32.mrf.mxu0
        %701 = vmatprep.mubr.f32.mxu0 0.0
        %702 = vmatmul.mubr.f32.gmra.mxu0 %v599
        %v703 = vpop.f32.mrf.mxu0
        %v704 = vadd.f32 0.0, %v703
        %v705 = vpop.f32.mrf.mxu0
        %706 = vmatprep.mubr.f32.mxu0 0.0
        %707 = vmatmul.mubr.f32.gmra.mxu0 %v604
        %v708 = vpop.f32.mrf.mxu0
        %v709 = vadd.f32 0.0, %v708
        %v710 = vpop.f32.mrf.mxu0
        %711 = vmatprep.mubr.f32.mxu0 0.0
        %712 = vmatmul.mubr.f32.gmra.mxu0 %v609
        %v713 = vpop.f32.mrf.mxu0
        %v714 = vadd.f32 0.0, %v713
        %v715 = vpop.f32.mrf.mxu0
        %716 = vdwg.mxu0
        %v717 = vmul.f32 %v679, %v240
        %v718 = vmul.f32 %v684, %v241
        %v719 = vmul.f32 %v689, %v242
        %v720 = vmul.f32 %v694, %v243
        %v721 = vmul.f32 %v699, %v244
        %v722 = vmul.f32 %v704, %v245
        %v723 = vmul.f32 %v709, %v246
        %v724 = vmul.f32 %v714, %v247
        %v725 = vadd.f32 %v717, %v248
        %v726 = vadd.f32 %v718, %v249
        %v727 = vadd.f32 %v719, %v250
        %v728 = vadd.f32 %v720, %v251
        %v729 = vadd.f32 %v721, %v252
        %v730 = vadd.f32 %v722, %v253
        %v731 = vadd.f32 %v723, %v254
        %v732 = vadd.f32 %v724, %v255
        %733 = vmatprep.subr.mxu0 0.0
        %734 = vmatpush1.msra.mxu0 0.0
        %735 = vmatprep.subr.mxu0 0.0
        %736 = vmatpush1.msra.mxu0 0.0
        %737 = vmatprep.subr.mxu0 0.0
        %738 = vmatpush1.msra.mxu0 0.0
        %739 = vmatprep.subr.mxu0 0.0
        %740 = vmatpush1.msra.mxu0 0.0
        %741 = vmatprep.subr.mxu0 0.0
        %742 = vmatpush1.msra.mxu0 0.0
        %743 = vmatprep.subr.mxu0 0.0
        %744 = vmatpush1.msra.mxu0 0.0
        %745 = vmatprep.subr.mxu0 0.0
        %746 = vmatpush1.msra.mxu0 0.0
        %747 = vmatprep.subr.mxu0 0.0
        %748 = vmatpush1.msra.mxu0 0.0
        %749 = vmatprep.subr.mxu0 0.0
        %750 = vmatpush1.msra.mxu0 %v732
        %751 = vmatprep.subr.mxu0 0.0
        %752 = vmatpush1.msra.mxu0 %v731
        %753 = vmatprep.subr.mxu0 0.0
        %754 = vmatpush1.msra.mxu0 %v730
        %755 = vmatprep.subr.mxu0 0.0
        %756 = vmatpush1.msra.mxu0 %v729
        %757 = vmatprep.subr.mxu0 0.0
        %758 = vmatpush1.msra.mxu0 %v728
        %759 = vmatprep.subr.mxu0 0.0
        %760 = vmatpush1.msra.mxu0 %v727
        %761 = vmatprep.subr.mxu0 0.0
        %762 = vmatpush1.msra.mxu0 %v726
        %763 = vmatprep.subr.mxu0 0.0
        %764 = vmatpush1.msra.mxu0 %v725
        %765 = vmatprep.subr.mxu0 0.0
        %766 = vmatpush2.msra.mxu0 0.0
        %767 = vmatprep.subr.mxu0 0.0
        %768 = vmatpush2.msra.mxu0 0.0
        %769 = vmatprep.subr.mxu0 0.0
        %770 = vmatpush2.msra.mxu0 0.0
        %771 = vmatprep.subr.mxu0 0.0
        %772 = vmatpush2.msra.mxu0 0.0
        %773 = vmatprep.subr.mxu0 0.0
        %774 = vmatpush2.msra.mxu0 0.0
        %775 = vmatprep.subr.mxu0 0.0
        %776 = vmatpush2.msra.mxu0 0.0
        %777 = vmatprep.subr.mxu0 0.0
        %778 = vmatpush2.msra.mxu0 0.0
        %779 = vmatprep.subr.mxu0 0.0
        %780 = vmatpush2.msra.mxu0 0.0
        %781 = vmatprep.subr.mxu0 0.0
        %782 = vmatpush2.msra.mxu0 0.0
        %783 = vmatprep.subr.mxu0 0.0
        %784 = vmatpush2.msra.mxu0 0.0
        %785 = vmatprep.subr.mxu0 0.0
        %786 = vmatpush2.msra.mxu0 0.0
        %787 = vmatprep.subr.mxu0 0.0
        %788 = vmatpush2.msra.mxu0 0.0
        %789 = vmatprep.subr.mxu0 0.0
        %790 = vmatpush2.msra.mxu0 0.0
        %791 = vmatprep.subr.mxu0 0.0
        %792 = vmatpush2.msra.mxu0 0.0
        %793 = vmatprep.subr.mxu0 0.0
        %794 = vmatpush2.msra.mxu0 0.0
        %795 = vmatprep.subr.mxu0 0.0
        %796 = vmatpush2.msra.mxu0 0.0
        %797 = vmatprep.mubr.f32.mxu0 0.0
        %798 = vmatmul.mubr.f32.gmra.mxu0 %v258
        %v799 = vpop.f32.mrf.mxu0
        %v800 = vadd.f32 0.0, %v799
        %v801 = vpop.f32.mrf.mxu0
        %802 = vmatprep.mubr.f32.mxu0 0.0
        %803 = vmatmul.mubr.f32.gmra.mxu0 %v261
        %v804 = vpop.f32.mrf.mxu0
        %v805 = vadd.f32 0.0, %v804
        %v806 = vpop.f32.mrf.mxu0
        %807 = vmatprep.mubr.f32.mxu0 0.0
        %808 = vmatmul.mubr.f32.gmra.mxu0 %v264
        %v809 = vpop.f32.mrf.mxu0
        %v810 = vadd.f32 0.0, %v809
        %v811 = vpop.f32.mrf.mxu0
        %812 = vmatprep.mubr.f32.mxu0 0.0
        %813 = vmatmul.mubr.f32.gmra.mxu0 %v267
        %v814 = vpop.f32.mrf.mxu0
        %v815 = vadd.f32 0.0, %v814
        %v816 = vpop.f32.mrf.mxu0
        %817 = vmatprep.mubr.f32.mxu0 0.0
        %818 = vmatmul.mubr.f32.gmra.mxu0 %v270
        %v819 = vpop.f32.mrf.mxu0
        %v820 = vadd.f32 0.0, %v819
        %v821 = vpop.f32.mrf.mxu0
        %822 = vmatprep.mubr.f32.mxu0 0.0
        %823 = vmatmul.mubr.f32.gmra.mxu0 %v273
        %v824 = vpop.f32.mrf.mxu0
        %v825 = vadd.f32 0.0, %v824
        %v826 = vpop.f32.mrf.mxu0
        %827 = vmatprep.mubr.f32.mxu0 0.0
        %828 = vmatmul.mubr.f32.gmra.mxu0 %v276
        %v829 = vpop.f32.mrf.mxu0
        %v830 = vadd.f32 0.0, %v829
        %v831 = vpop.f32.mrf.mxu0
        %832 = vmatprep.mubr.f32.mxu0 0.0
        %833 = vmatmul.mubr.f32.gmra.mxu0 %v279
        %v834 = vpop.f32.mrf.mxu0
        %v835 = vadd.f32 0.0, %v834
        %v836 = vpop.f32.mrf.mxu0
        %837 = vdwg.mxu0
        %838 = vmatprep.subr.mxu0 0.0
        %839 = vmatpush1.msra.mxu0 %v239
        %840 = vmatprep.subr.mxu0 0.0
        %841 = vmatpush1.msra.mxu0 %v238
        %842 = vmatprep.subr.mxu0 0.0
        %843 = vmatpush1.msra.mxu0 %v237
        %844 = vmatprep.subr.mxu0 0.0
        %845 = vmatpush1.msra.mxu0 %v236
        %846 = vmatprep.subr.mxu0 0.0
        %847 = vmatpush1.msra.mxu0 %v235
        %848 = vmatprep.subr.mxu0 0.0
        %849 = vmatpush1.msra.mxu0 %v234
        %850 = vmatprep.subr.mxu0 0.0
        %851 = vmatpush1.msra.mxu0 %v233
        %852 = vmatprep.subr.mxu0 0.0
        %853 = vmatpush1.msra.mxu0 %v232
        %854 = vmatprep.subr.mxu0 0.0
        %855 = vmatpush1.msra.mxu0 %v231
        %856 = vmatprep.subr.mxu0 0.0
        %857 = vmatpush1.msra.mxu0 %v230
        %858 = vmatprep.subr.mxu0 0.0
        %859 = vmatpush1.msra.mxu0 %v229
        %860 = vmatprep.subr.mxu0 0.0
        %861 = vmatpush1.msra.mxu0 %v228
        %862 = vmatprep.subr.mxu0 0.0
        %863 = vmatpush1.msra.mxu0 %v227
        %864 = vmatprep.subr.mxu0 0.0
        %865 = vmatpush1.msra.mxu0 %v226
        %866 = vmatprep.subr.mxu0 0.0
        %867 = vmatpush1.msra.mxu0 %v225
        %868 = vmatprep.subr.mxu0 0.0
        %869 = vmatpush1.msra.mxu0 %v224
        %870 = vmatprep.subr.mxu0 0.0
        %871 = vmatpush2.msra.mxu0 0.0
        %872 = vmatprep.subr.mxu0 0.0
        %873 = vmatpush2.msra.mxu0 0.0
        %874 = vmatprep.subr.mxu0 0.0
        %875 = vmatpush2.msra.mxu0 0.0
        %876 = vmatprep.subr.mxu0 0.0
        %877 = vmatpush2.msra.mxu0 0.0
        %878 = vmatprep.subr.mxu0 0.0
        %879 = vmatpush2.msra.mxu0 0.0
        %880 = vmatprep.subr.mxu0 0.0
        %881 = vmatpush2.msra.mxu0 0.0
        %882 = vmatprep.subr.mxu0 0.0
        %883 = vmatpush2.msra.mxu0 0.0
        %884 = vmatprep.subr.mxu0 0.0
        %885 = vmatpush2.msra.mxu0 0.0
        %886 = vmatprep.subr.mxu0 0.0
        %887 = vmatpush2.msra.mxu0 0.0
        %888 = vmatprep.subr.mxu0 0.0
        %889 = vmatpush2.msra.mxu0 0.0
        %890 = vmatprep.subr.mxu0 0.0
        %891 = vmatpush2.msra.mxu0 0.0
        %892 = vmatprep.subr.mxu0 0.0
        %893 = vmatpush2.msra.mxu0 0.0
        %894 = vmatprep.subr.mxu0 0.0
        %895 = vmatpush2.msra.mxu0 0.0
        %896 = vmatprep.subr.mxu0 0.0
        %897 = vmatpush2.msra.mxu0 0.0
        %898 = vmatprep.subr.mxu0 0.0
        %899 = vmatpush2.msra.mxu0 0.0
        %900 = vmatprep.subr.mxu0 0.0
        %901 = vmatpush2.msra.mxu0 0.0
        %902 = vmatprep.mubr.f32.mxu0 0.0
        %903 = vmatmul.mubr.f32.gmra.mxu0 %v800
        %v904 = vpop.f32.mrf.mxu0
        %v905 = vadd.f32 0.0, %v904
        %v906 = vpop.f32.mrf.mxu0
        %907 = vmatprep.mubr.f32.mxu0 0.0
        %908 = vmatmul.mubr.f32.gmra.mxu0 %v805
        %v909 = vpop.f32.mrf.mxu0
        %v910 = vadd.f32 0.0, %v909
        %v911 = vpop.f32.mrf.mxu0
        %912 = vmatprep.mubr.f32.mxu0 0.0
        %913 = vmatmul.mubr.f32.gmra.mxu0 %v810
        %v914 = vpop.f32.mrf.mxu0
        %v915 = vadd.f32 0.0, %v914
        %v916 = vpop.f32.mrf.mxu0
        %917 = vmatprep.mubr.f32.mxu0 0.0
        %918 = vmatmul.mubr.f32.gmra.mxu0 %v815
        %v919 = vpop.f32.mrf.mxu0
        %v920 = vadd.f32 0.0, %v919
        %v921 = vpop.f32.mrf.mxu0
        %922 = vmatprep.mubr.f32.mxu0 0.0
        %923 = vmatmul.mubr.f32.gmra.mxu0 %v820
        %v924 = vpop.f32.mrf.mxu0
        %v925 = vadd.f32 0.0, %v924
        %v926 = vpop.f32.mrf.mxu0
        %927 = vmatprep.mubr.f32.mxu0 0.0
        %928 = vmatmul.mubr.f32.gmra.mxu0 %v825
        %v929 = vpop.f32.mrf.mxu0
        %v930 = vadd.f32 0.0, %v929
        %v931 = vpop.f32.mrf.mxu0
        %932 = vmatprep.mubr.f32.mxu0 0.0
        %933 = vmatmul.mubr.f32.gmra.mxu0 %v830
        %v934 = vpop.f32.mrf.mxu0
        %v935 = vadd.f32 0.0, %v934
        %v936 = vpop.f32.mrf.mxu0
        %937 = vmatprep.mubr.f32.mxu0 0.0
        %938 = vmatmul.mubr.f32.gmra.mxu0 %v835
        %v939 = vpop.f32.mrf.mxu0
        %v940 = vadd.f32 0.0, %v939
        %v941 = vpop.f32.mrf.mxu0
        %942 = vdwg.mxu0
        %v943 = vmul.f32 %v905, %v240
        %v944 = vmul.f32 %v910, %v241
        %v945 = vmul.f32 %v915, %v242
        %v946 = vmul.f32 %v920, %v243
        %v947 = vmul.f32 %v925, %v244
        %v948 = vmul.f32 %v930, %v245
        %v949 = vmul.f32 %v935, %v246
        %v950 = vmul.f32 %v940, %v247
        %v951 = vadd.f32 %v943, %v248
        %v952 = vadd.f32 %v944, %v249
        %v953 = vadd.f32 %v945, %v250
        %v954 = vadd.f32 %v946, %v251
        %v955 = vadd.f32 %v947, %v252
        %v956 = vadd.f32 %v948, %v253
        %v957 = vadd.f32 %v949, %v254
        %v958 = vadd.f32 %v950, %v255
        %959 = vmatprep.subr.mxu0 0.0
        %960 = vmatpush1.msra.mxu0 0.0
        %961 = vmatprep.subr.mxu0 0.0
        %962 = vmatpush1.msra.mxu0 0.0
        %963 = vmatprep.subr.mxu0 0.0
        %964 = vmatpush1.msra.mxu0 0.0
        %965 = vmatprep.subr.mxu0 0.0
        %966 = vmatpush1.msra.mxu0 0.0
        %967 = vmatprep.subr.mxu0 0.0
        %968 = vmatpush1.msra.mxu0 0.0
        %969 = vmatprep.subr.mxu0 0.0
        %970 = vmatpush1.msra.mxu0 0.0
        %971 = vmatprep.subr.mxu0 0.0
        %972 = vmatpush1.msra.mxu0 0.0
        %973 = vmatprep.subr.mxu0 0.0
        %974 = vmatpush1.msra.mxu0 0.0
        %975 = vmatprep.subr.mxu0 0.0
        %976 = vmatpush1.msra.mxu0 %v958
        %977 = vmatprep.subr.mxu0 0.0
        %978 = vmatpush1.msra.mxu0 %v957
        %979 = vmatprep.subr.mxu0 0.0
        %980 = vmatpush1.msra.mxu0 %v956
        %981 = vmatprep.subr.mxu0 0.0
        %982 = vmatpush1.msra.mxu0 %v955
        %983 = vmatprep.subr.mxu0 0.0
        %984 = vmatpush1.msra.mxu0 %v954
        %985 = vmatprep.subr.mxu0 0.0
        %986 = vmatpush1.msra.mxu0 %v953
        %987 = vmatprep.subr.mxu0 0.0
        %988 = vmatpush1.msra.mxu0 %v952
        %989 = vmatprep.subr.mxu0 0.0
        %990 = vmatpush1.msra.mxu0 %v951
        %991 = vmatprep.subr.mxu0 0.0
        %992 = vmatpush2.msra.mxu0 0.0
        %993 = vmatprep.subr.mxu0 0.0
        %994 = vmatpush2.msra.mxu0 0.0
        %995 = vmatprep.subr.mxu0 0.0
        %996 = vmatpush2.msra.mxu0 0.0
        %997 = vmatprep.subr.mxu0 0.0
        %998 = vmatpush2.msra.mxu0 0.0
        %999 = vmatprep.subr.mxu0 0.0
        %1000 = vmatpush2.msra.mxu0 0.0
        %1001 = vmatprep.subr.mxu0 0.0
        %1002 = vmatpush2.msra.mxu0 0.0
        %1003 = vmatprep.subr.mxu0 0.0
        %1004 = vmatpush2.msra.mxu0 0.0
        %1005 = vmatprep.subr.mxu0 0.0
        %1006 = vmatpush2.msra.mxu0 0.0
        %1007 = vmatprep.subr.mxu0 0.0
        %1008 = vmatpush2.msra.mxu0 0.0
        %1009 = vmatprep.subr.mxu0 0.0
        %1010 = vmatpush2.msra.mxu0 0.0
        %1011 = vmatprep.subr.mxu0 0.0
        %1012 = vmatpush2.msra.mxu0 0.0
        %1013 = vmatprep.subr.mxu0 0.0
        %1014 = vmatpush2.msra.mxu0 0.0
        %1015 = vmatprep.subr.mxu0 0.0
        %1016 = vmatpush2.msra.mxu0 0.0
        %1017 = vmatprep.subr.mxu0 0.0
        %1018 = vmatpush2.msra.mxu0 0.0
        %1019 = vmatprep.subr.mxu0 0.0
        %1020 = vmatpush2.msra.mxu0 0.0
        %1021 = vmatprep.subr.mxu0 0.0
        %1022 = vmatpush2.msra.mxu0 0.0
        %1023 = vmatprep.mubr.f32.mxu0 0.0
        %1024 = vmatmul.mubr.f32.gmra.mxu0 %v258
        %v1025 = vpop.f32.mrf.mxu0
        %v1026 = vadd.f32 0.0, %v1025
        %v1027 = vpop.f32.mrf.mxu0
        %1028 = vmatprep.mubr.f32.mxu0 0.0
        %1029 = vmatmul.mubr.f32.gmra.mxu0 %v261
        %v1030 = vpop.f32.mrf.mxu0
        %v1031 = vadd.f32 0.0, %v1030
        %v1032 = vpop.f32.mrf.mxu0
        %1033 = vmatprep.mubr.f32.mxu0 0.0
        %1034 = vmatmul.mubr.f32.gmra.mxu0 %v264
        %v1035 = vpop.f32.mrf.mxu0
        %v1036 = vadd.f32 0.0, %v1035
        %v1037 = vpop.f32.mrf.mxu0
        %1038 = vmatprep.mubr.f32.mxu0 0.0
        %1039 = vmatmul.mubr.f32.gmra.mxu0 %v267
        %v1040 = vpop.f32.mrf.mxu0
        %v1041 = vadd.f32 0.0, %v1040
        %v1042 = vpop.f32.mrf.mxu0
        %1043 = vmatprep.mubr.f32.mxu0 0.0
        %1044 = vmatmul.mubr.f32.gmra.mxu0 %v270
        %v1045 = vpop.f32.mrf.mxu0
        %v1046 = vadd.f32 0.0, %v1045
        %v1047 = vpop.f32.mrf.mxu0
        %1048 = vmatprep.mubr.f32.mxu0 0.0
        %1049 = vmatmul.mubr.f32.gmra.mxu0 %v273
        %v1050 = vpop.f32.mrf.mxu0
        %v1051 = vadd.f32 0.0, %v1050
        %v1052 = vpop.f32.mrf.mxu0
        %1053 = vmatprep.mubr.f32.mxu0 0.0
        %1054 = vmatmul.mubr.f32.gmra.mxu0 %v276
        %v1055 = vpop.f32.mrf.mxu0
        %v1056 = vadd.f32 0.0, %v1055
        %v1057 = vpop.f32.mrf.mxu0
        %1058 = vmatprep.mubr.f32.mxu0 0.0
        %1059 = vmatmul.mubr.f32.gmra.mxu0 %v279
        %v1060 = vpop.f32.mrf.mxu0
        %v1061 = vadd.f32 0.0, %v1060
        %v1062 = vpop.f32.mrf.mxu0
        %1063 = vdwg.mxu0
        %1064 = vmatprep.subr.mxu0 0.0
        %1065 = vmatpush1.msra.mxu0 %v239
        %1066 = vmatprep.subr.mxu0 0.0
        %1067 = vmatpush1.msra.mxu0 %v238
        %1068 = vmatprep.subr.mxu0 0.0
        %1069 = vmatpush1.msra.mxu0 %v237
        %1070 = vmatprep.subr.mxu0 0.0
        %1071 = vmatpush1.msra.mxu0 %v236
        %1072 = vmatprep.subr.mxu0 0.0
        %1073 = vmatpush1.msra.mxu0 %v235
        %1074 = vmatprep.subr.mxu0 0.0
        %1075 = vmatpush1.msra.mxu0 %v234
        %1076 = vmatprep.subr.mxu0 0.0
        %1077 = vmatpush1.msra.mxu0 %v233
        %1078 = vmatprep.subr.mxu0 0.0
        %1079 = vmatpush1.msra.mxu0 %v232
        %1080 = vmatprep.subr.mxu0 0.0
        %1081 = vmatpush1.msra.mxu0 %v231
        %1082 = vmatprep.subr.mxu0 0.0
        %1083 = vmatpush1.msra.mxu0 %v230
        %1084 = vmatprep.subr.mxu0 0.0
        %1085 = vmatpush1.msra.mxu0 %v229
        %1086 = vmatprep.subr.mxu0 0.0
        %1087 = vmatpush1.msra.mxu0 %v228
        %1088 = vmatprep.subr.mxu0 0.0
        %1089 = vmatpush1.msra.mxu0 %v227
        %1090 = vmatprep.subr.mxu0 0.0
        %1091 = vmatpush1.msra.mxu0 %v226
        %1092 = vmatprep.subr.mxu0 0.0
        %1093 = vmatpush1.msra.mxu0 %v225
        %1094 = vmatprep.subr.mxu0 0.0
        %1095 = vmatpush1.msra.mxu0 %v224
        %1096 = vmatprep.subr.mxu0 0.0
        %1097 = vmatpush2.msra.mxu0 0.0
        %1098 = vmatprep.subr.mxu0 0.0
        %1099 = vmatpush2.msra.mxu0 0.0
        %1100 = vmatprep.subr.mxu0 0.0
        %1101 = vmatpush2.msra.mxu0 0.0
        %1102 = vmatprep.subr.mxu0 0.0
        %1103 = vmatpush2.msra.mxu0 0.0
        %1104 = vmatprep.subr.mxu0 0.0
        %1105 = vmatpush2.msra.mxu0 0.0
        %1106 = vmatprep.subr.mxu0 0.0
        %1107 = vmatpush2.msra.mxu0 0.0
        %1108 = vmatprep.subr.mxu0 0.0
        %1109 = vmatpush2.msra.mxu0 0.0
        %1110 = vmatprep.subr.mxu0 0.0
        %1111 = vmatpush2.msra.mxu0 0.0
        %1112 = vmatprep.subr.mxu0 0.0
        %1113 = vmatpush2.msra.mxu0 0.0
        %1114 = vmatprep.subr.mxu0 0.0
        %1115 = vmatpush2.msra.mxu0 0.0
        %1116 = vmatprep.subr.mxu0 0.0
        %1117 = vmatpush2.msra.mxu0 0.0
        %1118 = vmatprep.subr.mxu0 0.0
        %1119 = vmatpush2.msra.mxu0 0.0
        %1120 = vmatprep.subr.mxu0 0.0
        %1121 = vmatpush2.msra.mxu0 0.0
        %1122 = vmatprep.subr.mxu0 0.0
        %1123 = vmatpush2.msra.mxu0 0.0
        %1124 = vmatprep.subr.mxu0 0.0
        %1125 = vmatpush2.msra.mxu0 0.0
        %1126 = vmatprep.subr.mxu0 0.0
        %1127 = vmatpush2.msra.mxu0 0.0
        %1128 = vmatprep.mubr.f32.mxu0 0.0
        %1129 = vmatmul.mubr.f32.gmra.mxu0 %v1026
        %v1130 = vpop.f32.mrf.mxu0
        %v1131 = vadd.f32 0.0, %v1130
        %v1132 = vpop.f32.mrf.mxu0
        %1133 = vmatprep.mubr.f32.mxu0 0.0
        %1134 = vmatmul.mubr.f32.gmra.mxu0 %v1031
        %v1135 = vpop.f32.mrf.mxu0
        %v1136 = vadd.f32 0.0, %v1135
        %v1137 = vpop.f32.mrf.mxu0
        %1138 = vmatprep.mubr.f32.mxu0 0.0
        %1139 = vmatmul.mubr.f32.gmra.mxu0 %v1036
        %v1140 = vpop.f32.mrf.mxu0
        %v1141 = vadd.f32 0.0, %v1140
        %v1142 = vpop.f32.mrf.mxu0
        %1143 = vmatprep.mubr.f32.mxu0 0.0
        %1144 = vmatmul.mubr.f32.gmra.mxu0 %v1041
        %v1145 = vpop.f32.mrf.mxu0
        %v1146 = vadd.f32 0.0, %v1145
        %v1147 = vpop.f32.mrf.mxu0
        %1148 = vmatprep.mubr.f32.mxu0 0.0
        %1149 = vmatmul.mubr.f32.gmra.mxu0 %v1046
        %v1150 = vpop.f32.mrf.mxu0
        %v1151 = vadd.f32 0.0, %v1150
        %v1152 = vpop.f32.mrf.mxu0
        %1153 = vmatprep.mubr.f32.mxu0 0.0
        %1154 = vmatmul.mubr.f32.gmra.mxu0 %v1051
        %v1155 = vpop.f32.mrf.mxu0
        %v1156 = vadd.f32 0.0, %v1155
        %v1157 = vpop.f32.mrf.mxu0
        %1158 = vmatprep.mubr.f32.mxu0 0.0
        %1159 = vmatmul.mubr.f32.gmra.mxu0 %v1056
        %v1160 = vpop.f32.mrf.mxu0
        %v1161 = vadd.f32 0.0, %v1160
        %v1162 = vpop.f32.mrf.mxu0
        %1163 = vmatprep.mubr.f32.mxu0 0.0
        %1164 = vmatmul.mubr.f32.gmra.mxu0 %v1061
        %v1165 = vpop.f32.mrf.mxu0
        %v1166 = vadd.f32 0.0, %v1165
        %v1167 = vpop.f32.mrf.mxu0
        %1168 = vdwg.mxu0
        %v1169 = vmul.f32 %v1131, %v240
        %v1170 = vmul.f32 %v1136, %v241
        %v1171 = vmul.f32 %v1141, %v242
        %v1172 = vmul.f32 %v1146, %v243
        %v1173 = vmul.f32 %v1151, %v244
        %v1174 = vmul.f32 %v1156, %v245
        %v1175 = vmul.f32 %v1161, %v246
        %v1176 = vmul.f32 %v1166, %v247
        %v1177 = vadd.f32 %v1169, %v248
        %v1178 = vadd.f32 %v1170, %v249
        %v1179 = vadd.f32 %v1171, %v250
        %v1180 = vadd.f32 %v1172, %v251
        %v1181 = vadd.f32 %v1173, %v252
        %v1182 = vadd.f32 %v1174, %v253
        %v1183 = vadd.f32 %v1175, %v254
        %v1184 = vadd.f32 %v1176, %v255
        %1185 = vmatprep.subr.mxu0 0.0
        %1186 = vmatpush1.msra.mxu0 0.0
        %1187 = vmatprep.subr.mxu0 0.0
        %1188 = vmatpush1.msra.mxu0 0.0
        %1189 = vmatprep.subr.mxu0 0.0
        %1190 = vmatpush1.msra.mxu0 0.0
        %1191 = vmatprep.subr.mxu0 0.0
        %1192 = vmatpush1.msra.mxu0 0.0
        %1193 = vmatprep.subr.mxu0 0.0
        %1194 = vmatpush1.msra.mxu0 0.0
        %1195 = vmatprep.subr.mxu0 0.0
        %1196 = vmatpush1.msra.mxu0 0.0
        %1197 = vmatprep.subr.mxu0 0.0
        %1198 = vmatpush1.msra.mxu0 0.0
        %1199 = vmatprep.subr.mxu0 0.0
        %1200 = vmatpush1.msra.mxu0 0.0
        %1201 = vmatprep.subr.mxu0 0.0
        %1202 = vmatpush1.msra.mxu0 %v1184
        %1203 = vmatprep.subr.mxu0 0.0
        %1204 = vmatpush1.msra.mxu0 %v1183
        %1205 = vmatprep.subr.mxu0 0.0
        %1206 = vmatpush1.msra.mxu0 %v1182
        %1207 = vmatprep.subr.mxu0 0.0
        %1208 = vmatpush1.msra.mxu0 %v1181
        %1209 = vmatprep.subr.mxu0 0.0
        %1210 = vmatpush1.msra.mxu0 %v1180
        %1211 = vmatprep.subr.mxu0 0.0
        %1212 = vmatpush1.msra.mxu0 %v1179
        %1213 = vmatprep.subr.mxu0 0.0
        %1214 = vmatpush1.msra.mxu0 %v1178
        %1215 = vmatprep.subr.mxu0 0.0
        %1216 = vmatpush1.msra.mxu0 %v1177
        %1217 = vmatprep.subr.mxu0 0.0
        %1218 = vmatpush2.msra.mxu0 0.0
        %1219 = vmatprep.subr.mxu0 0.0
        %1220 = vmatpush2.msra.mxu0 0.0
        %1221 = vmatprep.subr.mxu0 0.0
        %1222 = vmatpush2.msra.mxu0 0.0
        %1223 = vmatprep.subr.mxu0 0.0
        %1224 = vmatpush2.msra.mxu0 0.0
        %1225 = vmatprep.subr.mxu0 0.0
        %1226 = vmatpush2.msra.mxu0 0.0
        %1227 = vmatprep.subr.mxu0 0.0
        %1228 = vmatpush2.msra.mxu0 0.0
        %1229 = vmatprep.subr.mxu0 0.0
        %1230 = vmatpush2.msra.mxu0 0.0
        %1231 = vmatprep.subr.mxu0 0.0
        %1232 = vmatpush2.msra.mxu0 0.0
        %1233 = vmatprep.subr.mxu0 0.0
        %1234 = vmatpush2.msra.mxu0 0.0
        %1235 = vmatprep.subr.mxu0 0.0
        %1236 = vmatpush2.msra.mxu0 0.0
        %1237 = vmatprep.subr.mxu0 0.0
        %1238 = vmatpush2.msra.mxu0 0.0
        %1239 = vmatprep.subr.mxu0 0.0
        %1240 = vmatpush2.msra.mxu0 0.0
        %1241 = vmatprep.subr.mxu0 0.0
        %1242 = vmatpush2.msra.mxu0 0.0
        %1243 = vmatprep.subr.mxu0 0.0
        %1244 = vmatpush2.msra.mxu0 0.0
        %1245 = vmatprep.subr.mxu0 0.0
        %1246 = vmatpush2.msra.mxu0 0.0
        %1247 = vmatprep.subr.mxu0 0.0
        %1248 = vmatpush2.msra.mxu0 0.0
        %1249 = vmatprep.mubr.f32.mxu0 0.0
        %1250 = vmatmul.mubr.f32.gmra.mxu0 %v258
        %v1251 = vpop.f32.mrf.mxu0
        %v1252 = vadd.f32 0.0, %v1251
        %v1253 = vpop.f32.mrf.mxu0
        %1254 = vmatprep.mubr.f32.mxu0 0.0
        %1255 = vmatmul.mubr.f32.gmra.mxu0 %v261
        %v1256 = vpop.f32.mrf.mxu0
        %v1257 = vadd.f32 0.0, %v1256
        %v1258 = vpop.f32.mrf.mxu0
        %1259 = vmatprep.mubr.f32.mxu0 0.0
        %1260 = vmatmul.mubr.f32.gmra.mxu0 %v264
        %v1261 = vpop.f32.mrf.mxu0
        %v1262 = vadd.f32 0.0, %v1261
        %v1263 = vpop.f32.mrf.mxu0
        %1264 = vmatprep.mubr.f32.mxu0 0.0
        %1265 = vmatmul.mubr.f32.gmra.mxu0 %v267
        %v1266 = vpop.f32.mrf.mxu0
        %v1267 = vadd.f32 0.0, %v1266
        %v1268 = vpop.f32.mrf.mxu0
        %1269 = vmatprep.mubr.f32.mxu0 0.0
        %1270 = vmatmul.mubr.f32.gmra.mxu0 %v270
        %v1271 = vpop.f32.mrf.mxu0
        %v1272 = vadd.f32 0.0, %v1271
        %v1273 = vpop.f32.mrf.mxu0
        %1274 = vmatprep.mubr.f32.mxu0 0.0
        %1275 = vmatmul.mubr.f32.gmra.mxu0 %v273
        %v1276 = vpop.f32.mrf.mxu0
        %v1277 = vadd.f32 0.0, %v1276
        %v1278 = vpop.f32.mrf.mxu0
        %1279 = vmatprep.mubr.f32.mxu0 0.0
        %1280 = vmatmul.mubr.f32.gmra.mxu0 %v276
        %v1281 = vpop.f32.mrf.mxu0
        %v1282 = vadd.f32 0.0, %v1281
        %v1283 = vpop.f32.mrf.mxu0
        %1284 = vmatprep.mubr.f32.mxu0 0.0
        %1285 = vmatmul.mubr.f32.gmra.mxu0 %v279
        %v1286 = vpop.f32.mrf.mxu0
        %v1287 = vadd.f32 0.0, %v1286
        %v1288 = vpop.f32.mrf.mxu0
        %1289 = vdwg.mxu0
        %1290 = vmatprep.subr.mxu0 0.0
        %1291 = vmatpush1.msra.mxu0 %v239
        %1292 = vmatprep.subr.mxu0 0.0
        %1293 = vmatpush1.msra.mxu0 %v238
        %1294 = vmatprep.subr.mxu0 0.0
        %1295 = vmatpush1.msra.mxu0 %v237
        %1296 = vmatprep.subr.mxu0 0.0
        %1297 = vmatpush1.msra.mxu0 %v236
        %1298 = vmatprep.subr.mxu0 0.0
        %1299 = vmatpush1.msra.mxu0 %v235
        %1300 = vmatprep.subr.mxu0 0.0
        %1301 = vmatpush1.msra.mxu0 %v234
        %1302 = vmatprep.subr.mxu0 0.0
        %1303 = vmatpush1.msra.mxu0 %v233
        %1304 = vmatprep.subr.mxu0 0.0
        %1305 = vmatpush1.msra.mxu0 %v232
        %1306 = vmatprep.subr.mxu0 0.0
        %1307 = vmatpush1.msra.mxu0 %v231
        %1308 = vmatprep.subr.mxu0 0.0
        %1309 = vmatpush1.msra.mxu0 %v230
        %1310 = vmatprep.subr.mxu0 0.0
        %1311 = vmatpush1.msra.mxu0 %v229
        %1312 = vmatprep.subr.mxu0 0.0
        %1313 = vmatpush1.msra.mxu0 %v228
        %1314 = vmatprep.subr.mxu0 0.0
        %1315 = vmatpush1.msra.mxu0 %v227
        %1316 = vmatprep.subr.mxu0 0.0
        %1317 = vmatpush1.msra.mxu0 %v226
        %1318 = vmatprep.subr.mxu0 0.0
        %1319 = vmatpush1.msra.mxu0 %v225
        %1320 = vmatprep.subr.mxu0 0.0
        %1321 = vmatpush1.msra.mxu0 %v224
        %1322 = vmatprep.subr.mxu0 0.0
        %1323 = vmatpush2.msra.mxu0 0.0
        %1324 = vmatprep.subr.mxu0 0.0
        %1325 = vmatpush2.msra.mxu0 0.0
        %1326 = vmatprep.subr.mxu0 0.0
        %1327 = vmatpush2.msra.mxu0 0.0
        %1328 = vmatprep.subr.mxu0 0.0
        %1329 = vmatpush2.msra.mxu0 0.0
        %1330 = vmatprep.subr.mxu0 0.0
        %1331 = vmatpush2.msra.mxu0 0.0
        %1332 = vmatprep.subr.mxu0 0.0
        %1333 = vmatpush2.msra.mxu0 0.0
        %1334 = vmatprep.subr.mxu0 0.0
        %1335 = vmatpush2.msra.mxu0 0.0
        %1336 = vmatprep.subr.mxu0 0.0
        %1337 = vmatpush2.msra.mxu0 0.0
        %1338 = vmatprep.subr.mxu0 0.0
        %1339 = vmatpush2.msra.mxu0 0.0
        %1340 = vmatprep.subr.mxu0 0.0
        %1341 = vmatpush2.msra.mxu0 0.0
        %1342 = vmatprep.subr.mxu0 0.0
        %1343 = vmatpush2.msra.mxu0 0.0
        %1344 = vmatprep.subr.mxu0 0.0
        %1345 = vmatpush2.msra.mxu0 0.0
        %1346 = vmatprep.subr.mxu0 0.0
        %1347 = vmatpush2.msra.mxu0 0.0
        %1348 = vmatprep.subr.mxu0 0.0
        %1349 = vmatpush2.msra.mxu0 0.0
        %1350 = vmatprep.subr.mxu0 0.0
        %1351 = vmatpush2.msra.mxu0 0.0
        %1352 = vmatprep.subr.mxu0 0.0
        %1353 = vmatpush2.msra.mxu0 0.0
        %1354 = vmatprep.mubr.f32.mxu0 0.0
        %1355 = vmatmul.mubr.f32.gmra.mxu0 %v1252
        %v1356 = vpop.f32.mrf.mxu0
        %v1357 = vadd.f32 0.0, %v1356
        %v1358 = vpop.f32.mrf.mxu0
        %1359 = vmatprep.mubr.f32.mxu0 0.0
        %1360 = vmatmul.mubr.f32.gmra.mxu0 %v1257
        %v1361 = vpop.f32.mrf.mxu0
        %v1362 = vadd.f32 0.0, %v1361
        %v1363 = vpop.f32.mrf.mxu0
        %1364 = vmatprep.mubr.f32.mxu0 0.0
        %1365 = vmatmul.mubr.f32.gmra.mxu0 %v1262
        %v1366 = vpop.f32.mrf.mxu0
        %v1367 = vadd.f32 0.0, %v1366
        %v1368 = vpop.f32.mrf.mxu0
        %1369 = vmatprep.mubr.f32.mxu0 0.0
        %1370 = vmatmul.mubr.f32.gmra.mxu0 %v1267
        %v1371 = vpop.f32.mrf.mxu0
        %v1372 = vadd.f32 0.0, %v1371
        %v1373 = vpop.f32.mrf.mxu0
        %1374 = vmatprep.mubr.f32.mxu0 0.0
        %1375 = vmatmul.mubr.f32.gmra.mxu0 %v1272
        %v1376 = vpop.f32.mrf.mxu0
        %v1377 = vadd.f32 0.0, %v1376
        %v1378 = vpop.f32.mrf.mxu0
        %1379 = vmatprep.mubr.f32.mxu0 0.0
        %1380 = vmatmul.mubr.f32.gmra.mxu0 %v1277
        %v1381 = vpop.f32.mrf.mxu0
        %v1382 = vadd.f32 0.0, %v1381
        %v1383 = vpop.f32.mrf.mxu0
        %1384 = vmatprep.mubr.f32.mxu0 0.0
        %1385 = vmatmul.mubr.f32.gmra.mxu0 %v1282
        %v1386 = vpop.f32.mrf.mxu0
        %v1387 = vadd.f32 0.0, %v1386
        %v1388 = vpop.f32.mrf.mxu0
        %1389 = vmatprep.mubr.f32.mxu0 0.0
        %1390 = vmatmul.mubr.f32.gmra.mxu0 %v1287
        %v1391 = vpop.f32.mrf.mxu0
        %v1392 = vadd.f32 0.0, %v1391
        %v1393 = vpop.f32.mrf.mxu0
        %1394 = vdwg.mxu0
        %v1395 = vmul.f32 %v1357, %v240
        %v1396 = vmul.f32 %v1362, %v241
        %v1397 = vmul.f32 %v1367, %v242
        %v1398 = vmul.f32 %v1372, %v243
        %v1399 = vmul.f32 %v1377, %v244
        %v1400 = vmul.f32 %v1382, %v245
        %v1401 = vmul.f32 %v1387, %v246
        %v1402 = vmul.f32 %v1392, %v247
        %v1403 = vadd.f32 %v1395, %v248
        %v1404 = vadd.f32 %v1396, %v249
        %v1405 = vadd.f32 %v1397, %v250
        %v1406 = vadd.f32 %v1398, %v251
        %v1407 = vadd.f32 %v1399, %v252
        %v1408 = vadd.f32 %v1400, %v253
        %v1409 = vadd.f32 %v1401, %v254
        %v1410 = vadd.f32 %v1402, %v255
        %1411 = vmatprep.subr.mxu0 0.0
        %1412 = vmatpush1.msra.mxu0 0.0
        %1413 = vmatprep.subr.mxu0 0.0
        %1414 = vmatpush1.msra.mxu0 0.0
        %1415 = vmatprep.subr.mxu0 0.0
        %1416 = vmatpush1.msra.mxu0 0.0
        %1417 = vmatprep.subr.mxu0 0.0
        %1418 = vmatpush1.msra.mxu0 0.0
        %1419 = vmatprep.subr.mxu0 0.0
        %1420 = vmatpush1.msra.mxu0 0.0
        %1421 = vmatprep.subr.mxu0 0.0
        %1422 = vmatpush1.msra.mxu0 0.0
        %1423 = vmatprep.subr.mxu0 0.0
        %1424 = vmatpush1.msra.mxu0 0.0
        %1425 = vmatprep.subr.mxu0 0.0
        %1426 = vmatpush1.msra.mxu0 0.0
        %1427 = vmatprep.subr.mxu0 0.0
        %1428 = vmatpush1.msra.mxu0 %v1410
        %1429 = vmatprep.subr.mxu0 0.0
        %1430 = vmatpush1.msra.mxu0 %v1409
        %1431 = vmatprep.subr.mxu0 0.0
        %1432 = vmatpush1.msra.mxu0 %v1408
        %1433 = vmatprep.subr.mxu0 0.0
        %1434 = vmatpush1.msra.mxu0 %v1407
        %1435 = vmatprep.subr.mxu0 0.0
        %1436 = vmatpush1.msra.mxu0 %v1406
        %1437 = vmatprep.subr.mxu0 0.0
        %1438 = vmatpush1.msra.mxu0 %v1405
        %1439 = vmatprep.subr.mxu0 0.0
        %1440 = vmatpush1.msra.mxu0 %v1404
        %1441 = vmatprep.subr.mxu0 0.0
        %1442 = vmatpush1.msra.mxu0 %v1403
        %1443 = vmatprep.subr.mxu0 0.0
        %1444 = vmatpush2.msra.mxu0 0.0
        %1445 = vmatprep.subr.mxu0 0.0
        %1446 = vmatpush2.msra.mxu0 0.0
        %1447 = vmatprep.subr.mxu0 0.0
        %1448 = vmatpush2.msra.mxu0 0.0
        %1449 = vmatprep.subr.mxu0 0.0
        %1450 = vmatpush2.msra.mxu0 0.0
        %1451 = vmatprep.subr.mxu0 0.0
        %1452 = vmatpush2.msra.mxu0 0.0
        %1453 = vmatprep.subr.mxu0 0.0
        %1454 = vmatpush2.msra.mxu0 0.0
        %1455 = vmatprep.subr.mxu0 0.0
        %1456 = vmatpush2.msra.mxu0 0.0
        %1457 = vmatprep.subr.mxu0 0.0
        %1458 = vmatpush2.msra.mxu0 0.0
        %1459 = vmatprep.subr.mxu0 0.0
        %1460 = vmatpush2.msra.mxu0 0.0
        %1461 = vmatprep.subr.mxu0 0.0
        %1462 = vmatpush2.msra.mxu0 0.0
        %1463 = vmatprep.subr.mxu0 0.0
        %1464 = vmatpush2.msra.mxu0 0.0
        %1465 = vmatprep.subr.mxu0 0.0
        %1466 = vmatpush2.msra.mxu0 0.0
        %1467 = vmatprep.subr.mxu0 0.0
        %1468 = vmatpush2.msra.mxu0 0.0
        %1469 = vmatprep.subr.mxu0 0.0
        %1470 = vmatpush2.msra.mxu0 0.0
        %1471 = vmatprep.subr.mxu0 0.0
        %1472 = vmatpush2.msra.mxu0 0.0
        %1473 = vmatprep.subr.mxu0 0.0
        %1474 = vmatpush2.msra.mxu0 0.0
        %1475 = vmatprep.mubr.f32.mxu0 0.0
        %1476 = vmatmul.mubr.f32.gmra.mxu0 %v258
        %v1477 = vpop.f32.mrf.mxu0
        %v1478 = vadd.f32 0.0, %v1477
        %v1479 = vpop.f32.mrf.mxu0
        %1480 = vmatprep.mubr.f32.mxu0 0.0
        %1481 = vmatmul.mubr.f32.gmra.mxu0 %v261
        %v1482 = vpop.f32.mrf.mxu0
        %v1483 = vadd.f32 0.0, %v1482
        %v1484 = vpop.f32.mrf.mxu0
        %1485 = vmatprep.mubr.f32.mxu0 0.0
        %1486 = vmatmul.mubr.f32.gmra.mxu0 %v264
        %v1487 = vpop.f32.mrf.mxu0
        %v1488 = vadd.f32 0.0, %v1487
        %v1489 = vpop.f32.mrf.mxu0
        %1490 = vmatprep.mubr.f32.mxu0 0.0
        %1491 = vmatmul.mubr.f32.gmra.mxu0 %v267
        %v1492 = vpop.f32.mrf.mxu0
        %v1493 = vadd.f32 0.0, %v1492
        %v1494 = vpop.f32.mrf.mxu0
        %1495 = vmatprep.mubr.f32.mxu0 0.0
        %1496 = vmatmul.mubr.f32.gmra.mxu0 %v270
        %v1497 = vpop.f32.mrf.mxu0
        %v1498 = vadd.f32 0.0, %v1497
        %v1499 = vpop.f32.mrf.mxu0
        %1500 = vmatprep.mubr.f32.mxu0 0.0
        %1501 = vmatmul.mubr.f32.gmra.mxu0 %v273
        %v1502 = vpop.f32.mrf.mxu0
        %v1503 = vadd.f32 0.0, %v1502
        %v1504 = vpop.f32.mrf.mxu0
        %1505 = vmatprep.mubr.f32.mxu0 0.0
        %1506 = vmatmul.mubr.f32.gmra.mxu0 %v276
        %v1507 = vpop.f32.mrf.mxu0
        %v1508 = vadd.f32 0.0, %v1507
        %v1509 = vpop.f32.mrf.mxu0
        %1510 = vmatprep.mubr.f32.mxu0 0.0
        %1511 = vmatmul.mubr.f32.gmra.mxu0 %v279
        %v1512 = vpop.f32.mrf.mxu0
        %v1513 = vadd.f32 0.0, %v1512
        %v1514 = vpop.f32.mrf.mxu0
        %1515 = vdwg.mxu0
        %1516 = vmatprep.subr.mxu0 0.0
        %1517 = vmatpush1.msra.mxu0 %v239
        %1518 = vmatprep.subr.mxu0 0.0
        %1519 = vmatpush1.msra.mxu0 %v238
        %1520 = vmatprep.subr.mxu0 0.0
        %1521 = vmatpush1.msra.mxu0 %v237
        %1522 = vmatprep.subr.mxu0 0.0
        %1523 = vmatpush1.msra.mxu0 %v236
        %1524 = vmatprep.subr.mxu0 0.0
        %1525 = vmatpush1.msra.mxu0 %v235
        %1526 = vmatprep.subr.mxu0 0.0
        %1527 = vmatpush1.msra.mxu0 %v234
        %1528 = vmatprep.subr.mxu0 0.0
        %1529 = vmatpush1.msra.mxu0 %v233
        %1530 = vmatprep.subr.mxu0 0.0
        %1531 = vmatpush1.msra.mxu0 %v232
        %1532 = vmatprep.subr.mxu0 0.0
        %1533 = vmatpush1.msra.mxu0 %v231
        %1534 = vmatprep.subr.mxu0 0.0
        %1535 = vmatpush1.msra.mxu0 %v230
        %1536 = vmatprep.subr.mxu0 0.0
        %1537 = vmatpush1.msra.mxu0 %v229
        %1538 = vmatprep.subr.mxu0 0.0
        %1539 = vmatpush1.msra.mxu0 %v228
        %1540 = vmatprep.subr.mxu0 0.0
        %1541 = vmatpush1.msra.mxu0 %v227
        %1542 = vmatprep.subr.mxu0 0.0
        %1543 = vmatpush1.msra.mxu0 %v226
        %1544 = vmatprep.subr.mxu0 0.0
        %1545 = vmatpush1.msra.mxu0 %v225
        %1546 = vmatprep.subr.mxu0 0.0
        %1547 = vmatpush1.msra.mxu0 %v224
        %1548 = vmatprep.subr.mxu0 0.0
        %1549 = vmatpush2.msra.mxu0 0.0
        %1550 = vmatprep.subr.mxu0 0.0
        %1551 = vmatpush2.msra.mxu0 0.0
        %1552 = vmatprep.subr.mxu0 0.0
        %1553 = vmatpush2.msra.mxu0 0.0
        %1554 = vmatprep.subr.mxu0 0.0
        %1555 = vmatpush2.msra.mxu0 0.0
        %1556 = vmatprep.subr.mxu0 0.0
        %1557 = vmatpush2.msra.mxu0 0.0
        %1558 = vmatprep.subr.mxu0 0.0
        %1559 = vmatpush2.msra.mxu0 0.0
        %1560 = vmatprep.subr.mxu0 0.0
        %1561 = vmatpush2.msra.mxu0 0.0
        %1562 = vmatprep.subr.mxu0 0.0
        %1563 = vmatpush2.msra.mxu0 0.0
        %1564 = vmatprep.subr.mxu0 0.0
        %1565 = vmatpush2.msra.mxu0 0.0
        %1566 = vmatprep.subr.mxu0 0.0
        %1567 = vmatpush2.msra.mxu0 0.0
        %1568 = vmatprep.subr.mxu0 0.0
        %1569 = vmatpush2.msra.mxu0 0.0
        %1570 = vmatprep.subr.mxu0 0.0
        %1571 = vmatpush2.msra.mxu0 0.0
        %1572 = vmatprep.subr.mxu0 0.0
        %1573 = vmatpush2.msra.mxu0 0.0
        %1574 = vmatprep.subr.mxu0 0.0
        %1575 = vmatpush2.msra.mxu0 0.0
        %1576 = vmatprep.subr.mxu0 0.0
        %1577 = vmatpush2.msra.mxu0 0.0
        %1578 = vmatprep.subr.mxu0 0.0
        %1579 = vmatpush2.msra.mxu0 0.0
        %1580 = vmatprep.mubr.f32.mxu0 0.0
        %1581 = vmatmul.mubr.f32.gmra.mxu0 %v1478
        %v1582 = vpop.f32.mrf.mxu0
        %v1583 = vadd.f32 0.0, %v1582
        %v1584 = vpop.f32.mrf.mxu0
        %1585 = vmatprep.mubr.f32.mxu0 0.0
        %1586 = vmatmul.mubr.f32.gmra.mxu0 %v1483
        %v1587 = vpop.f32.mrf.mxu0
        %v1588 = vadd.f32 0.0, %v1587
        %v1589 = vpop.f32.mrf.mxu0
        %1590 = vmatprep.mubr.f32.mxu0 0.0
        %1591 = vmatmul.mubr.f32.gmra.mxu0 %v1488
        %v1592 = vpop.f32.mrf.mxu0
        %v1593 = vadd.f32 0.0, %v1592
        %v1594 = vpop.f32.mrf.mxu0
        %1595 = vmatprep.mubr.f32.mxu0 0.0
        %1596 = vmatmul.mubr.f32.gmra.mxu0 %v1493
        %v1597 = vpop.f32.mrf.mxu0
        %v1598 = vadd.f32 0.0, %v1597
        %v1599 = vpop.f32.mrf.mxu0
        %1600 = vmatprep.mubr.f32.mxu0 0.0
        %1601 = vmatmul.mubr.f32.gmra.mxu0 %v1498
        %v1602 = vpop.f32.mrf.mxu0
        %v1603 = vadd.f32 0.0, %v1602
        %v1604 = vpop.f32.mrf.mxu0
        %1605 = vmatprep.mubr.f32.mxu0 0.0
        %1606 = vmatmul.mubr.f32.gmra.mxu0 %v1503
        %v1607 = vpop.f32.mrf.mxu0
        %v1608 = vadd.f32 0.0, %v1607
        %v1609 = vpop.f32.mrf.mxu0
        %1610 = vmatprep.mubr.f32.mxu0 0.0
        %1611 = vmatmul.mubr.f32.gmra.mxu0 %v1508
        %v1612 = vpop.f32.mrf.mxu0
        %v1613 = vadd.f32 0.0, %v1612
        %v1614 = vpop.f32.mrf.mxu0
        %1615 = vmatprep.mubr.f32.mxu0 0.0
        %1616 = vmatmul.mubr.f32.gmra.mxu0 %v1513
        %v1617 = vpop.f32.mrf.mxu0
        %v1618 = vadd.f32 0.0, %v1617
        %v1619 = vpop.f32.mrf.mxu0
        %1620 = vdwg.mxu0
        %v1621 = vmul.f32 %v1583, %v240
        %v1622 = vmul.f32 %v1588, %v241
        %v1623 = vmul.f32 %v1593, %v242
        %v1624 = vmul.f32 %v1598, %v243
        %v1625 = vmul.f32 %v1603, %v244
        %v1626 = vmul.f32 %v1608, %v245
        %v1627 = vmul.f32 %v1613, %v246
        %v1628 = vmul.f32 %v1618, %v247
        %v1629 = vadd.f32 %v1621, %v248
        %v1630 = vadd.f32 %v1622, %v249
        %v1631 = vadd.f32 %v1623, %v250
        %v1632 = vadd.f32 %v1624, %v251
        %v1633 = vadd.f32 %v1625, %v252
        %v1634 = vadd.f32 %v1626, %v253
        %v1635 = vadd.f32 %v1627, %v254
        %v1636 = vadd.f32 %v1628, %v255
        %1637 = vmatprep.subr.mxu0 0.0
        %1638 = vmatpush1.msra.mxu0 0.0
        %1639 = vmatprep.subr.mxu0 0.0
        %1640 = vmatpush1.msra.mxu0 0.0
        %1641 = vmatprep.subr.mxu0 0.0
        %1642 = vmatpush1.msra.mxu0 0.0
        %1643 = vmatprep.subr.mxu0 0.0
        %1644 = vmatpush1.msra.mxu0 0.0
        %1645 = vmatprep.subr.mxu0 0.0
        %1646 = vmatpush1.msra.mxu0 0.0
        %1647 = vmatprep.subr.mxu0 0.0
        %1648 = vmatpush1.msra.mxu0 0.0
        %1649 = vmatprep.subr.mxu0 0.0
        %1650 = vmatpush1.msra.mxu0 0.0
        %1651 = vmatprep.subr.mxu0 0.0
        %1652 = vmatpush1.msra.mxu0 0.0
        %1653 = vmatprep.subr.mxu0 0.0
        %1654 = vmatpush1.msra.mxu0 %v1636
        %1655 = vmatprep.subr.mxu0 0.0
        %1656 = vmatpush1.msra.mxu0 %v1635
        %1657 = vmatprep.subr.mxu0 0.0
        %1658 = vmatpush1.msra.mxu0 %v1634
        %1659 = vmatprep.subr.mxu0 0.0
        %1660 = vmatpush1.msra.mxu0 %v1633
        %1661 = vmatprep.subr.mxu0 0.0
        %1662 = vmatpush1.msra.mxu0 %v1632
        %1663 = vmatprep.subr.mxu0 0.0
        %1664 = vmatpush1.msra.mxu0 %v1631
        %1665 = vmatprep.subr.mxu0 0.0
        %1666 = vmatpush1.msra.mxu0 %v1630
        %1667 = vmatprep.subr.mxu0 0.0
        %1668 = vmatpush1.msra.mxu0 %v1629
        %1669 = vmatprep.subr.mxu0 0.0
        %1670 = vmatpush2.msra.mxu0 0.0
        %1671 = vmatprep.subr.mxu0 0.0
        %1672 = vmatpush2.msra.mxu0 0.0
        %1673 = vmatprep.subr.mxu0 0.0
        %1674 = vmatpush2.msra.mxu0 0.0
        %1675 = vmatprep.subr.mxu0 0.0
        %1676 = vmatpush2.msra.mxu0 0.0
        %1677 = vmatprep.subr.mxu0 0.0
        %1678 = vmatpush2.msra.mxu0 0.0
        %1679 = vmatprep.subr.mxu0 0.0
        %1680 = vmatpush2.msra.mxu0 0.0
        %1681 = vmatprep.subr.mxu0 0.0
        %1682 = vmatpush2.msra.mxu0 0.0
        %1683 = vmatprep.subr.mxu0 0.0
        %1684 = vmatpush2.msra.mxu0 0.0
        %1685 = vmatprep.subr.mxu0 0.0
        %1686 = vmatpush2.msra.mxu0 0.0
        %1687 = vmatprep.subr.mxu0 0.0
        %1688 = vmatpush2.msra.mxu0 0.0
        %1689 = vmatprep.subr.mxu0 0.0
        %1690 = vmatpush2.msra.mxu0 0.0
        %1691 = vmatprep.subr.mxu0 0.0
        %1692 = vmatpush2.msra.mxu0 0.0
        %1693 = vmatprep.subr.mxu0 0.0
        %1694 = vmatpush2.msra.mxu0 0.0
        %1695 = vmatprep.subr.mxu0 0.0
        %1696 = vmatpush2.msra.mxu0 0.0
        %1697 = vmatprep.subr.mxu0 0.0
        %1698 = vmatpush2.msra.mxu0 0.0
        %1699 = vmatprep.subr.mxu0 0.0
        %1700 = vmatpush2.msra.mxu0 0.0
        %1701 = vmatprep.mubr.f32.mxu0 0.0
        %1702 = vmatmul.mubr.f32.gmra.mxu0 %v258
        %v1703 = vpop.f32.mrf.mxu0
        %v1704 = vadd.f32 0.0, %v1703
        %v1705 = vpop.f32.mrf.mxu0
        %1706 = vmatprep.mubr.f32.mxu0 0.0
        %1707 = vmatmul.mubr.f32.gmra.mxu0 %v261
        %v1708 = vpop.f32.mrf.mxu0
        %v1709 = vadd.f32 0.0, %v1708
        %v1710 = vpop.f32.mrf.mxu0
        %1711 = vmatprep.mubr.f32.mxu0 0.0
        %1712 = vmatmul.mubr.f32.gmra.mxu0 %v264
        %v1713 = vpop.f32.mrf.mxu0
        %v1714 = vadd.f32 0.0, %v1713
        %v1715 = vpop.f32.mrf.mxu0
        %1716 = vmatprep.mubr.f32.mxu0 0.0
        %1717 = vmatmul.mubr.f32.gmra.mxu0 %v267
        %v1718 = vpop.f32.mrf.mxu0
        %v1719 = vadd.f32 0.0, %v1718
        %v1720 = vpop.f32.mrf.mxu0
        %1721 = vmatprep.mubr.f32.mxu0 0.0
        %1722 = vmatmul.mubr.f32.gmra.mxu0 %v270
        %v1723 = vpop.f32.mrf.mxu0
        %v1724 = vadd.f32 0.0, %v1723
        %v1725 = vpop.f32.mrf.mxu0
        %1726 = vmatprep.mubr.f32.mxu0 0.0
        %1727 = vmatmul.mubr.f32.gmra.mxu0 %v273
        %v1728 = vpop.f32.mrf.mxu0
        %v1729 = vadd.f32 0.0, %v1728
        %v1730 = vpop.f32.mrf.mxu0
        %1731 = vmatprep.mubr.f32.mxu0 0.0
        %1732 = vmatmul.mubr.f32.gmra.mxu0 %v276
        %v1733 = vpop.f32.mrf.mxu0
        %v1734 = vadd.f32 0.0, %v1733
        %v1735 = vpop.f32.mrf.mxu0
        %1736 = vmatprep.mubr.f32.mxu0 0.0
        %1737 = vmatmul.mubr.f32.gmra.mxu0 %v279
        %v1738 = vpop.f32.mrf.mxu0
        %v1739 = vadd.f32 0.0, %v1738
        %v1740 = vpop.f32.mrf.mxu0
        %1741 = vdwg.mxu0
        %1742 = vmatprep.subr.mxu0 0.0
        %1743 = vmatpush1.msra.mxu0 %v239
        %1744 = vmatprep.subr.mxu0 0.0
        %1745 = vmatpush1.msra.mxu0 %v238
        %1746 = vmatprep.subr.mxu0 0.0
        %1747 = vmatpush1.msra.mxu0 %v237
        %1748 = vmatprep.subr.mxu0 0.0
        %1749 = vmatpush1.msra.mxu0 %v236
        %1750 = vmatprep.subr.mxu0 0.0
        %1751 = vmatpush1.msra.mxu0 %v235
        %1752 = vmatprep.subr.mxu0 0.0
        %1753 = vmatpush1.msra.mxu0 %v234
        %1754 = vmatprep.subr.mxu0 0.0
        %1755 = vmatpush1.msra.mxu0 %v233
        %1756 = vmatprep.subr.mxu0 0.0
        %1757 = vmatpush1.msra.mxu0 %v232
        %1758 = vmatprep.subr.mxu0 0.0
        %1759 = vmatpush1.msra.mxu0 %v231
        %1760 = vmatprep.subr.mxu0 0.0
        %1761 = vmatpush1.msra.mxu0 %v230
        %1762 = vmatprep.subr.mxu0 0.0
        %1763 = vmatpush1.msra.mxu0 %v229
        %1764 = vmatprep.subr.mxu0 0.0
        %1765 = vmatpush1.msra.mxu0 %v228
        %1766 = vmatprep.subr.mxu0 0.0
        %1767 = vmatpush1.msra.mxu0 %v227
        %1768 = vmatprep.subr.mxu0 0.0
        %1769 = vmatpush1.msra.mxu0 %v226
        %1770 = vmatprep.subr.mxu0 0.0
        %1771 = vmatpush1.msra.mxu0 %v225
        %1772 = vmatprep.subr.mxu0 0.0
        %1773 = vmatpush1.msra.mxu0 %v224
        %1774 = vmatprep.subr.mxu0 0.0
        %1775 = vmatpush2.msra.mxu0 0.0
        %1776 = vmatprep.subr.mxu0 0.0
        %1777 = vmatpush2.msra.mxu0 0.0
        %1778 = vmatprep.subr.mxu0 0.0
        %1779 = vmatpush2.msra.mxu0 0.0
        %1780 = vmatprep.subr.mxu0 0.0
        %1781 = vmatpush2.msra.mxu0 0.0
        %1782 = vmatprep.subr.mxu0 0.0
        %1783 = vmatpush2.msra.mxu0 0.0
        %1784 = vmatprep.subr.mxu0 0.0
        %1785 = vmatpush2.msra.mxu0 0.0
        %1786 = vmatprep.subr.mxu0 0.0
        %1787 = vmatpush2.msra.mxu0 0.0
        %1788 = vmatprep.subr.mxu0 0.0
        %1789 = vmatpush2.msra.mxu0 0.0
        %1790 = vmatprep.subr.mxu0 0.0
        %1791 = vmatpush2.msra.mxu0 0.0
        %1792 = vmatprep.subr.mxu0 0.0
        %1793 = vmatpush2.msra.mxu0 0.0
        %1794 = vmatprep.subr.mxu0 0.0
        %1795 = vmatpush2.msra.mxu0 0.0
        %1796 = vmatprep.subr.mxu0 0.0
        %1797 = vmatpush2.msra.mxu0 0.0
        %1798 = vmatprep.subr.mxu0 0.0
        %1799 = vmatpush2.msra.mxu0 0.0
        %1800 = vmatprep.subr.mxu0 0.0
        %1801 = vmatpush2.msra.mxu0 0.0
        %1802 = vmatprep.subr.mxu0 0.0
        %1803 = vmatpush2.msra.mxu0 0.0
        %1804 = vmatprep.subr.mxu0 0.0
        %1805 = vmatpush2.msra.mxu0 0.0
        %1806 = vmatprep.mubr.f32.mxu0 0.0
        %1807 = vmatmul.mubr.f32.gmra.mxu0 %v1704
        %v1808 = vpop.f32.mrf.mxu0
        %v1809 = vadd.f32 0.0, %v1808
        %v1810 = vpop.f32.mrf.mxu0
        %1811 = vmatprep.mubr.f32.mxu0 0.0
        %1812 = vmatmul.mubr.f32.gmra.mxu0 %v1709
        %v1813 = vpop.f32.mrf.mxu0
        %v1814 = vadd.f32 0.0, %v1813
        %v1815 = vpop.f32.mrf.mxu0
        %1816 = vmatprep.mubr.f32.mxu0 0.0
        %1817 = vmatmul.mubr.f32.gmra.mxu0 %v1714
        %v1818 = vpop.f32.mrf.mxu0
        %v1819 = vadd.f32 0.0, %v1818
        %v1820 = vpop.f32.mrf.mxu0
        %1821 = vmatprep.mubr.f32.mxu0 0.0
        %1822 = vmatmul.mubr.f32.gmra.mxu0 %v1719
        %v1823 = vpop.f32.mrf.mxu0
        %v1824 = vadd.f32 0.0, %v1823
        %v1825 = vpop.f32.mrf.mxu0
        %1826 = vmatprep.mubr.f32.mxu0 0.0
        %1827 = vmatmul.mubr.f32.gmra.mxu0 %v1724
        %v1828 = vpop.f32.mrf.mxu0
        %v1829 = vadd.f32 0.0, %v1828
        %v1830 = vpop.f32.mrf.mxu0
        %1831 = vmatprep.mubr.f32.mxu0 0.0
        %1832 = vmatmul.mubr.f32.gmra.mxu0 %v1729
        %v1833 = vpop.f32.mrf.mxu0
        %v1834 = vadd.f32 0.0, %v1833
        %v1835 = vpop.f32.mrf.mxu0
        %1836 = vmatprep.mubr.f32.mxu0 0.0
        %1837 = vmatmul.mubr.f32.gmra.mxu0 %v1734
        %v1838 = vpop.f32.mrf.mxu0
        %v1839 = vadd.f32 0.0, %v1838
        %v1840 = vpop.f32.mrf.mxu0
        %1841 = vmatprep.mubr.f32.mxu0 0.0
        %1842 = vmatmul.mubr.f32.gmra.mxu0 %v1739
        %v1843 = vpop.f32.mrf.mxu0
        %v1844 = vadd.f32 0.0, %v1843
        %v1845 = vpop.f32.mrf.mxu0
        %1846 = vdwg.mxu0
        %v1847 = vmul.f32 %v1809, %v240
        %v1848 = vmul.f32 %v1814, %v241
        %v1849 = vmul.f32 %v1819, %v242
        %v1850 = vmul.f32 %v1824, %v243
        %v1851 = vmul.f32 %v1829, %v244
        %v1852 = vmul.f32 %v1834, %v245
        %v1853 = vmul.f32 %v1839, %v246
        %v1854 = vmul.f32 %v1844, %v247
        %1855 = vst [vmem:[%s215] sm:$0xff] %v1847
        %1856 = vst [vmem:[%s215 + $0x8] sm:$0xff] %v1848
        %1857 = vst [vmem:[%s215 + $0x10] sm:$0xff] %v1849
        %1858 = vst [vmem:[%s215 + $0x18] sm:$0xff] %v1850
        %1859 = vst [vmem:[%s215 + $0x20] sm:$0xff] %v1851
        %1860 = vst [vmem:[%s215 + $0x28] sm:$0xff] %v1852
        %1861 = vst [vmem:[%s215 + $0x30] sm:$0xff] %v1853
        %1862 = vst [vmem:[%s215 + $0x38] sm:$0xff] %v1854
        %s1863 = sand.u32 %s95, 1
        %s1864 = scalar_lea.sflag [#allocation4], %s1863
        %s1865 = sand.u32 %s95, 1
        %s1866 = smul.addr %s1865, 64
        %s1867 = scalar_lea.vmem [#allocation8], %s1866
        // Predicated region
        $region45: #{tpu_custom_call.1} parent=31 // pred_check
          %p1868 = pneg %p105
        $region46: #{tpu_custom_call.1} parent=31 // pred_check_branch
          %1870 = sbr.rel (%p1868) target = $region48
        $region47: #{tpu_custom_call.1} parent=31 // pred_region
          %s1872 = ssub.s32 1024, 1024
          %1873 = vsyncadd %s1864, %s1872
          %s1874 = smul.addr %s19, 8
          %s1875 = smul.addr %s1874, 128
          %s1876 = scalar_lea.hbm %s3, %s1875
          %s1877 = sshll.u32 %s1867, 4
          %s1878 = int_to_ptr.vmem [resolvable:$true] %s1877
          %1883 = dma.vmem_to_hbm [thread:$0]  %s1878, 1024, %s1876, %s1864, 128, 128, 8
        $region48: #{tpu_custom_call.1} parent=31 // pred_fallthru
          _
      $region32: #{tpu_custom_call.1} parent=5 // pred_fallthru
        _
      %p1884 = scmp.le.s32.totalorder 2, %s14
      // Predicated region
      $region49: #{tpu_custom_call.1} parent=5 // pred_check
        %p1885 = pneg %p1884
      $region50: #{tpu_custom_call.1} parent=5 // pred_check_branch
        %1887 = sbr.rel (%p1885) target = $region52
      $region51: #{tpu_custom_call.1} parent=5 // pred_region
        %s1888 = ssub.s32 %s14, 2
        // Predicated region
        $region53: #{tpu_custom_call.1} parent=51 // pred_check
          %p1889 = pneg %p111
        $region54: #{tpu_custom_call.1} parent=51 // pred_check_branch
          %1891 = sbr.rel (%p1889) target = $region56
        $region55: #{tpu_custom_call.1} parent=51 // pred_region
          %s1892 = sand.u32 %s96, 1
          %s1893 = scalar_lea.sflag [#allocation4], %s1892
          %s1894 = sand.u32 %s96, 1
          %s1895 = smul.addr %s1894, 64
          %s1896 = scalar_lea.vmem [#allocation8], %s1895
          %1897 = dma.done %s1893, 1024
        $region56: #{tpu_custom_call.1} parent=51 // pred_fallthru
          _
      $region52: #{tpu_custom_call.1} parent=5 // pred_fallthru
        _
    $region6: #{tpu_custom_call.1} parent=1 // loop_footer
      %s18 = sadd.s32 1, %s14
    $region7: #{tpu_custom_call.1} parent=1 // loop_footer_branch
      %13 = sbr.rel target = $region3
    $region8: #{tpu_custom_call.1} parent=1 // loop_exit
      _
    %1898 = vsyncpa [#allocation3], 1
    %s1899 = scalar_lea.sflag [#allocation3], 1
    %1900 = vsyncpa %s1899, 1
    %1901 = vsyncpa [#allocation6], 1
    %1902 = vsyncpa [#allocation4], 1
    %s1903 = scalar_lea.sflag [#allocation4], 1
    %1904 = vsyncpa %s1903, 1

</llo_original>
